<compile_context>
chip_gen: v5e
topology: v5e:2x2
jax: 0.10.0
libtpu: 0.0.40
codegen_flags: <defaults>
</compile_context>

<pallas_src>
import math

import jax
import jax.numpy as jnp
from jax.experimental import pallas as pl
from jax.experimental.pallas import tpu as pltpu

_NEG_BIG = -1e30          # finite "minus infinity" for causal masking
_LN_EPS = 1e-5


def _gelu_exact(x):
    # PyTorch nn.GELU() default = exact erf formulation.
    return 0.5 * x * (1.0 + jax.lax.erf(x * (1.0 / math.sqrt(2.0))))


def _layer_norm(x, gamma, beta, eps=_LN_EPS):
    mu = jnp.mean(x, axis=-1, keepdims=True)
    var = jnp.mean((x - mu) ** 2, axis=-1, keepdims=True)
    return (x - mu) * jax.lax.rsqrt(var + eps) * gamma + beta


# --------------------------------------------------------------------------
# Pass 1: LN1 + fused QKV projection (row-parallel).
# Outputs are written head-major (B, n_head, T, hd) so the attention kernel
# never slices heads along the lane axis and never re-transposes K/V.
# q is pre-scaled by 1/sqrt(hd) (folded into wqkv/bqkv by the wrapper).
# --------------------------------------------------------------------------
def ln_qkv_kernel(x_ref, ln1_g_ref, ln1_b_ref, wqkv_ref, bqkv_ref,
                  q_ref, k_ref, v_ref):
    x = x_ref[0]                                        # (tr, C) f32
    C = x.shape[-1]
    n_head, hd = q_ref.shape[1], q_ref.shape[3]

    xn = _layer_norm(x, ln1_g_ref[0], ln1_b_ref[0])     # f32 stats
    qkv = jnp.dot(xn.astype(wqkv_ref.dtype), wqkv_ref[...],
                  preferred_element_type=jnp.float32) + bqkv_ref[0]  # (tr, 3C)

    def heads(t):                                       # (tr, C) -> (n_head, tr, hd)
        return jnp.transpose(t.reshape(t.shape[0], n_head, hd), (1, 0, 2))

    q_ref[0] = heads(qkv[:, 0:C]).astype(q_ref.dtype)
    k_ref[0] = heads(qkv[:, C:2 * C]).astype(k_ref.dtype)
    v_ref[0] = heads(qkv[:, 2 * C:3 * C]).astype(v_ref.dtype)


# --------------------------------------------------------------------------
# Pass 2: flash-style causal attention over KV tiles, then (on the last KV
# step) output projection + residual + LN2 + MLP + residual.
# grid = (B, num_q_tiles, num_kv_tiles); kv is the (arbitrary) reduction axis.
# --------------------------------------------------------------------------
def attn_mlp_kernel(x_ref, q_ref, k_ref, v_ref,
                    wp_ref, bp_ref, ln2_g_ref, ln2_b_ref,
                    w1_ref, b1_ref, w2_ref, b2_ref,
                    o_ref,
                    m_scr, l_scr, acc_scr):
    qi = pl.program_id(1)
    ki = pl.program_id(2)
    n_head, tq, hd = q_ref.shape[1], q_ref.shape[2], q_ref.shape[3]
    tk = k_ref.shape[2]
    q_start = qi * tq
    k_start = ki * tk

    @pl.when(ki == 0)
    def _init():
        m_scr[...] = jnp.full_like(m_scr, _NEG_BIG)
        l_scr[...] = jnp.zeros_like(l_scr)
        acc_scr[...] = jnp.zeros_like(acc_scr)

    # Skip KV tiles that lie entirely above the causal diagonal.
    @pl.when(k_start < q_start + tq)
    def _accumulate():
        q = q_ref[0]                                    # (n_head, tq, hd), pre-scaled
        k = k_ref[0]
        v = v_ref[0]
        s = jnp.einsum("hqd,hkd->hqk", q, k,
                       preferred_element_type=jnp.float32)   # (n_head, tq, tk) f32

        row = q_start + jax.lax.broadcasted_iota(jnp.int32, s.shape, 1)
        col = k_start + jax.lax.broadcasted_iota(jnp.int32, s.shape, 2)
        s = jnp.where(row >= col, s, _NEG_BIG)          # finite mask, no inf-inf

        m_prev = m_scr[...]
        m_new = jnp.maximum(m_prev, jnp.max(s, axis=-1, keepdims=True))
        alpha = jnp.exp(m_prev - m_new)
        p = jnp.exp(s - m_new)
        l_scr[...] = alpha * l_scr[...] + jnp.sum(p, axis=-1, keepdims=True)
        acc_scr[...] = alpha * acc_scr[...] + jnp.einsum(
            "hqk,hkd->hqd", p.astype(v.dtype), v,
            preferred_element_type=jnp.float32)
        m_scr[...] = m_new

    @pl.when(ki == pl.num_programs(2) - 1)
    def _finalize():
        inv_l = pl.reciprocal(l_scr[...], approx=True)        # EUP, frees VALU
        y = acc_scr[...] * inv_l                               # (n_head, tq, hd) f32
        y = jnp.transpose(y, (1, 0, 2)).reshape(tq, n_head * hd)   # (tq, C)

        # attention output projection + first residual (resid_drop = identity)
        y = jnp.dot(y.astype(wp_ref.dtype), wp_ref[...],
                    preferred_element_type=jnp.float32) + bp_ref[0]
        x1 = x_ref[0] + y

        # LN2 + MLP (exact GELU) + second residual (mlp dropout = identity)
        x1n = _layer_norm(x1, ln2_g_ref[0], ln2_b_ref[0])
        h = jnp.dot(x1n.astype(w1_ref.dtype), w1_ref[...],
                    preferred_element_type=jnp.float32) + b1_ref[0]
        h = _gelu_exact(h)
        mlp = jnp.dot(h.astype(w2_ref.dtype), w2_ref[...],
                      preferred_element_type=jnp.float32) + b2_ref[0]
        o_ref[0] = (x1 + mlp).astype(o_ref.dtype)


def _pick_tile(T, max_tile=128):
    for t in (max_tile, 64, 32, 16, 8):
        if T % t == 0:
            return t
    return T   # fall back to the whole sequence (block == full dim is legal)


def gpt_block(x, params, n_head, *, seq_tile=None, matmul_dtype=jnp.bfloat16):
    """x: (B, T, C) float32. params: torch-layout (in, out) weights. -> (B, T, C)."""
    B, T, C = x.shape
    assert C % n_head == 0
    hd = C // n_head
    tile = seq_tile if seq_tile is not None else _pick_tile(T)
    assert T % tile == 0
    nt = T // tile
    mm = matmul_dtype

    # One-time weight prep: fuse QKV, fold 1/sqrt(hd) into the query weights
    # and bias, cast matmul weights to bf16 (f32 MXU accumulation in-kernel).
    scale = 1.0 / math.sqrt(hd)
    wqkv = jnp.concatenate(
        [params["wq"] * scale, params["wk"], params["wv"]], axis=1).astype(mm)
    bqkv = jnp.concatenate(
        [params["bq"] * scale, params["bk"], params["bv"]], axis=1)   # f32
    wp = params["wp"].astype(mm)
    w1 = params["w1"].astype(mm)
    w2 = params["w2"].astype(mm)

    vmem_cap = 64 * 1024 * 1024   # above the 32 MiB scoped default, <= v7x physical

    # ---------------- pass 1: LN1 + fused QKV projection ----------------
    def const2(shape):
        return pl.BlockSpec(shape, lambda b, i: (0, 0))

    head_out_spec = pl.BlockSpec((1, n_head, tile, hd), lambda b, i: (b, 0, i, 0))
    q, k, v = pl.pallas_call(
        ln_qkv_kernel,
        out_shape=(jax.ShapeDtypeStruct((B, n_head, T, hd), mm),) * 3,
        grid_spec=pltpu.PrefetchScalarGridSpec(
            num_scalar_prefetch=0,
            grid=(B, nt),
            in_specs=[
                pl.BlockSpec((1, tile, C), lambda b, i: (b, i, 0)),   # x rows
                const2((1, C)), const2((1, C)),                       # ln1 g, b
                const2((C, 3 * C)), const2((1, 3 * C)),               # wqkv, bqkv
            ],
            out_specs=(head_out_spec,) * 3,
        ),
        compiler_params=pltpu.CompilerParams(
            dimension_semantics=("parallel", "parallel"),
            vmem_limit_bytes=vmem_cap),
    )(x, params["ln1_g"], params["ln1_b"], wqkv, bqkv)

    # ------ pass 2: flash attention + proj + residual + LN2 + MLP ------
    # Weight/LN specs are grid-invariant (constant index_map) so they are
    # DMA'd once; on v7x they could additionally use pipeline_mode=
    # pl.Buffered(1) to halve their double-buffer footprint.
    def const3(shape):
        return pl.BlockSpec(shape, lambda b, qi, ki: (0, 0))

    q_spec = pl.BlockSpec((1, n_head, tile, hd), lambda b, qi, ki: (b, 0, qi, 0))
    kv_spec = pl.BlockSpec((1, n_head, tile, hd), lambda b, qi, ki: (b, 0, ki, 0))

    return pl.pallas_call(
        attn_mlp_kernel,
        out_shape=jax.ShapeDtypeStruct((B, T, C), x.dtype),
        grid_spec=pltpu.PrefetchScalarGridSpec(
            num_scalar_prefetch=0,
            grid=(B, nt, nt),                          # kv (reduction) axis last
            in_specs=[
                pl.BlockSpec((1, tile, C), lambda b, qi, ki: (b, qi, 0)),  # x rows
                q_spec, kv_spec, kv_spec,                                  # q, k, v
                const3((C, C)), const3((1, C)),                            # wp, bp
                const3((1, C)), const3((1, C)),                            # ln2 g, b
                const3((C, 4 * C)), const3((1, 4 * C)),                    # w1, b1
                const3((4 * C, C)), const3((1, C)),                        # w2, b2
            ],
            out_specs=pl.BlockSpec((1, tile, C), lambda b, qi, ki: (b, qi, 0)),
            scratch_shapes=[
                pltpu.VMEM((n_head, tile, 1), jnp.float32),   # running max
                pltpu.VMEM((n_head, tile, 1), jnp.float32),   # running denom
                pltpu.VMEM((n_head, tile, hd), jnp.float32),  # output accumulator
            ],
        ),
        compiler_params=pltpu.CompilerParams(
            dimension_semantics=("parallel", "parallel", "arbitrary"),
            vmem_limit_bytes=vmem_cap),
    )(x, q, k, v,
      wp, params["bp"], params["ln2_g"], params["ln2_b"],
      w1, params["b1"], w2, params["b2"])


def make_params(key, C):
    """Deterministic synthetic weights. Linear weights are (in, out), f32."""
    ks = jax.random.split(key, 12)
    std = 0.02
    return {
        "ln1_g": jnp.ones((1, C), jnp.float32),
        "ln1_b": jnp.zeros((1, C), jnp.float32),
        "ln2_g": jnp.ones((1, C), jnp.float32),
        "ln2_b": jnp.zeros((1, C), jnp.float32),
        "wq": std * jax.random.normal(ks[0], (C, C), jnp.float32),
        "bq": std * jax.random.normal(ks[1], (1, C), jnp.float32),
        "wk": std * jax.random.normal(ks[2], (C, C), jnp.float32),
        "bk": std * jax.random.normal(ks[3], (1, C), jnp.float32),
        "wv": std * jax.random.normal(ks[4], (C, C), jnp.float32),
        "bv": std * jax.random.normal(ks[5], (1, C), jnp.float32),
        "wp": std * jax.random.normal(ks[6], (C, C), jnp.float32),
        "bp": std * jax.random.normal(ks[7], (1, C), jnp.float32),
        "w1": std * jax.random.normal(ks[8], (C, 4 * C), jnp.float32),
        "b1": std * jax.random.normal(ks[9], (1, 4 * C), jnp.float32),
        "w2": std * jax.random.normal(ks[10], (4 * C, C), jnp.float32),
        "b2": std * jax.random.normal(ks[11], (1, C), jnp.float32),
    }


def block_ref(x, p, n_head):
    """Pure-JAX f32 reference (mirrors the PyTorch module) for correctness."""
    B, T, C = x.shape
    hd = C // n_head

    def ln(v, g, b):
        mu = v.mean(-1, keepdims=True)
        var = ((v - mu) ** 2).mean(-1, keepdims=True)
        return (v - mu) / jnp.sqrt(var + _LN_EPS) * g + b

    xn = ln(x, p["ln1_g"][0], p["ln1_b"][0])
    q = (xn @ p["wq"] + p["bq"][0]).reshape(B, T, n_head, hd).transpose(0, 2, 1, 3)
    k = (xn @ p["wk"] + p["bk"][0]).reshape(B, T, n_head, hd).transpose(0, 2, 1, 3)
    v = (xn @ p["wv"] + p["bv"][0]).reshape(B, T, n_head, hd).transpose(0, 2, 1, 3)
    att = jnp.einsum("bhqd,bhkd->bhqk", q, k) / math.sqrt(hd)
    mask = jnp.tril(jnp.ones((T, T), bool))
    att = jnp.where(mask, att, -jnp.inf)
    att = jax.nn.softmax(att, axis=-1)
    y = jnp.einsum("bhqk,bhkd->bhqd", att, v).transpose(0, 2, 1, 3).reshape(B, T, C)
    x = x + y @ p["wp"] + p["bp"][0]
    h = ln(x, p["ln2_g"][0], p["ln2_b"][0]) @ p["w1"] + p["b1"][0]
    h = jax.nn.gelu(h, approximate=False)
    return x + h @ p["w2"] + p["b2"][0]


if __name__ == "__main__":
    # TPU-friendly demo shapes: C multiple of 128, hd = 128 (lane-dense),
    # seq tile 64 so the flash KV loop / causal-skip path is exercised.
    B, T, C, n_head = 2, 128, 256, 2
    key = jax.random.PRNGKey(0)
    kx, kp = jax.random.split(key)
    x = jax.random.normal(kx, (B, T, C), jnp.float32)
    params = make_params(kp, C)

    out = gpt_block(x, params, n_head, seq_tile=64)
    out = jax.block_until_ready(out)

    ref = block_ref(x, params, n_head)
    assert out.shape == (B, T, C)
    # bf16 matmul operands (f32 accumulation) + approx softmax reciprocal
    # => relaxed tolerance vs the pure-f32 reference.
    assert jnp.allclose(out, ref, atol=2e-2, rtol=2e-2), "mismatch vs reference"
    print("KERNEL_OK")
</pallas_src>

<mosaic_0001>
module attributes {stable_mosaic.version = 11 : i64} {
  func.func @ln_qkv_kernel(%arg0: i32, %arg1: i32, %arg2: memref<1x64x256xf32, #tpu.memory_space<vmem>>, %arg3: memref<1x256xf32, #tpu.memory_space<vmem>>, %arg4: memref<1x256xf32, #tpu.memory_space<vmem>>, %arg5: memref<256x768xbf16, #tpu.memory_space<vmem>>, %arg6: memref<1x768xf32, #tpu.memory_space<vmem>>, %arg7: memref<1x2x64x128xbf16, #tpu.memory_space<vmem>>, %arg8: memref<1x2x64x128xbf16, #tpu.memory_space<vmem>>, %arg9: memref<1x2x64x128xbf16, #tpu.memory_space<vmem>>) attributes {dimension_semantics = [#tpu.dimension_semantics<parallel>, #tpu.dimension_semantics<parallel>], iteration_bounds = array<i64: 2, 2>, scalar_prefetch = 0 : i64, scratch_operands = 0 : i64, tpu.core_type = #tpu.core_type<tc>, window_params = [{transform_indices = @transform_0, window_bounds = array<i64: 1, 64, 256>}, {pipeline_mode = #tpu.pipeline_mode<synchronous>, transform_indices = @transform_1, window_bounds = array<i64: 1, 256>}, {pipeline_mode = #tpu.pipeline_mode<synchronous>, transform_indices = @transform_2, window_bounds = array<i64: 1, 256>}, {pipeline_mode = #tpu.pipeline_mode<synchronous>, transform_indices = @transform_3, window_bounds = array<i64: 256, 768>}, {pipeline_mode = #tpu.pipeline_mode<synchronous>, transform_indices = @transform_4, window_bounds = array<i64: 1, 768>}, {transform_indices = @transform_5, window_bounds = array<i64: 1, 2, 64, 128>}, {transform_indices = @transform_6, window_bounds = array<i64: 1, 2, 64, 128>}, {transform_indices = @transform_7, window_bounds = array<i64: 1, 2, 64, 128>}]} {
    %c0 = arith.constant 0 : index
    %c0_0 = arith.constant 0 : index
    %c0_1 = arith.constant 0 : index
    %0 = vector.load %arg2[%c0, %c0_0, %c0_1] : memref<1x64x256xf32, #tpu.memory_space<vmem>>, vector<1x64x256xf32>
    %1 = vector.shape_cast %0 : vector<1x64x256xf32> to vector<64x256xf32>
    %c0_2 = arith.constant 0 : index
    %c0_3 = arith.constant 0 : index
    %2 = vector.load %arg3[%c0_2, %c0_3] : memref<1x256xf32, #tpu.memory_space<vmem>>, vector<1x256xf32>
    %3 = vector.shape_cast %2 : vector<1x256xf32> to vector<256xf32>
    %c0_4 = arith.constant 0 : index
    %c0_5 = arith.constant 0 : index
    %4 = vector.load %arg4[%c0_4, %c0_5] : memref<1x256xf32, #tpu.memory_space<vmem>>, vector<1x256xf32>
    %5 = vector.shape_cast %4 : vector<1x256xf32> to vector<256xf32>
    %cst = arith.constant dense<0.000000e+00> : vector<64xf32>
    %6 = vector.multi_reduction <add>, %1, %cst [1] : vector<64x256xf32> to vector<64xf32>
    %7 = vector.shape_cast %6 : vector<64xf32> to vector<64x1xf32>
    %cst_6 = arith.constant 2.560000e+02 : f32
    %8 = vector.broadcast %cst_6 : f32 to vector<64x1xf32>
    %9 = arith.divf %7, %8 : vector<64x1xf32>
    %10 = vector.broadcast %9 : vector<64x1xf32> to vector<64x256xf32>
    %11 = arith.subf %1, %10 : vector<64x256xf32>
    %12 = arith.mulf %11, %11 : vector<64x256xf32>
    %cst_7 = arith.constant dense<0.000000e+00> : vector<64xf32>
    %13 = vector.multi_reduction <add>, %12, %cst_7 [1] : vector<64x256xf32> to vector<64xf32>
    %14 = vector.shape_cast %13 : vector<64xf32> to vector<64x1xf32>
    %cst_8 = arith.constant 2.560000e+02 : f32
    %15 = vector.broadcast %cst_8 : f32 to vector<64x1xf32>
    %16 = arith.divf %14, %15 : vector<64x1xf32>
    %17 = vector.broadcast %9 : vector<64x1xf32> to vector<64x256xf32>
    %18 = arith.subf %1, %17 : vector<64x256xf32>
    %cst_9 = arith.constant 9.99999974E-6 : f32
    %19 = vector.broadcast %cst_9 : f32 to vector<64x1xf32>
    %20 = arith.addf %16, %19 : vector<64x1xf32>
    %21 = math.rsqrt %20 : vector<64x1xf32>
    %22 = vector.broadcast %21 : vector<64x1xf32> to vector<64x256xf32>
    %23 = arith.mulf %18, %22 : vector<64x256xf32>
    %24 = vector.shape_cast %3 : vector<256xf32> to vector<1x256xf32>
    %25 = vector.broadcast %24 : vector<1x256xf32> to vector<64x256xf32>
    %26 = arith.mulf %23, %25 : vector<64x256xf32>
    %27 = vector.shape_cast %5 : vector<256xf32> to vector<1x256xf32>
    %28 = vector.broadcast %27 : vector<1x256xf32> to vector<64x256xf32>
    %29 = arith.addf %26, %28 : vector<64x256xf32>
    %30 = arith.truncf %29 : vector<64x256xf32> to vector<64x256xbf16>
    %c0_10 = arith.constant 0 : index
    %c0_11 = arith.constant 0 : index
    %31 = vector.load %arg5[%c0_10, %c0_11] : memref<256x768xbf16, #tpu.memory_space<vmem>>, vector<256x768xbf16>
    %cst_12 = arith.constant dense<0.000000e+00> : vector<64x768xf32>
    %32 = tpu.matmul %30, %31, %cst_12 {dimension_numbers = #tpu.dot_dimension_numbers<[1], [0], [0], [1], [0, 0, 1, 1], [], []>} : vector<64x256xbf16>, vector<256x768xbf16>, vector<64x768xf32> -> vector<64x768xf32>
    %c0_13 = arith.constant 0 : index
    %c0_14 = arith.constant 0 : index
    %33 = vector.load %arg6[%c0_13, %c0_14] : memref<1x768xf32, #tpu.memory_space<vmem>>, vector<1x768xf32>
    %34 = vector.shape_cast %33 : vector<1x768xf32> to vector<768xf32>
    %35 = vector.shape_cast %34 : vector<768xf32> to vector<1x768xf32>
    %36 = vector.broadcast %35 : vector<1x768xf32> to vector<64x768xf32>
    %37 = arith.addf %32, %36 : vector<64x768xf32>
    %38 = vector.extract_strided_slice %37 {offsets = [0, 0], sizes = [64, 256], strides = [1, 1]} : vector<64x768xf32> to vector<64x256xf32>
    %39 = vector.shape_cast %38 : vector<64x256xf32> to vector<64x2x128xf32>
    %40 = tpu.transpose %39, [1, 0, 2] : vector<64x2x128xf32> -> vector<2x64x128xf32>
    %41 = arith.truncf %40 : vector<2x64x128xf32> to vector<2x64x128xbf16>
    %c0_15 = arith.constant 0 : index
    %c0_16 = arith.constant 0 : index
    %c0_17 = arith.constant 0 : index
    %c0_18 = arith.constant 0 : index
    %42 = vector.load %arg7[%c0_15, %c0_16, %c0_17, %c0_18] : memref<1x2x64x128xbf16, #tpu.memory_space<vmem>>, vector<1x2x64x128xbf16>
    %43 = vector.shape_cast %42 : vector<1x2x64x128xbf16> to vector<2x64x128xbf16>
    %44 = vector.shape_cast %41 : vector<2x64x128xbf16> to vector<1x2x64x128xbf16>
    tpu.vector_store %arg7[%c0_15, %c0_16, %c0_17, %c0_18], %44 {strides = array<i32>} : memref<1x2x64x128xbf16, #tpu.memory_space<vmem>>, vector<1x2x64x128xbf16>,
    %45 = vector.extract_strided_slice %37 {offsets = [0, 256], sizes = [64, 256], strides = [1, 1]} : vector<64x768xf32> to vector<64x256xf32>
    %46 = vector.shape_cast %45 : vector<64x256xf32> to vector<64x2x128xf32>
    %47 = tpu.transpose %46, [1, 0, 2] : vector<64x2x128xf32> -> vector<2x64x128xf32>
    %48 = arith.truncf %47 : vector<2x64x128xf32> to vector<2x64x128xbf16>
    %c0_19 = arith.constant 0 : index
    %c0_20 = arith.constant 0 : index
    %c0_21 = arith.constant 0 : index
    %c0_22 = arith.constant 0 : index
    %49 = vector.load %arg8[%c0_19, %c0_20, %c0_21, %c0_22] : memref<1x2x64x128xbf16, #tpu.memory_space<vmem>>, vector<1x2x64x128xbf16>
    %50 = vector.shape_cast %49 : vector<1x2x64x128xbf16> to vector<2x64x128xbf16>
    %51 = vector.shape_cast %48 : vector<2x64x128xbf16> to vector<1x2x64x128xbf16>
    tpu.vector_store %arg8[%c0_19, %c0_20, %c0_21, %c0_22], %51 {strides = array<i32>} : memref<1x2x64x128xbf16, #tpu.memory_space<vmem>>, vector<1x2x64x128xbf16>,
    %52 = vector.extract_strided_slice %37 {offsets = [0, 512], sizes = [64, 256], strides = [1, 1]} : vector<64x768xf32> to vector<64x256xf32>
    %53 = vector.shape_cast %52 : vector<64x256xf32> to vector<64x2x128xf32>
    %54 = tpu.transpose %53, [1, 0, 2] : vector<64x2x128xf32> -> vector<2x64x128xf32>
    %55 = arith.truncf %54 : vector<2x64x128xf32> to vector<2x64x128xbf16>
    %c0_23 = arith.constant 0 : index
    %c0_24 = arith.constant 0 : index
    %c0_25 = arith.constant 0 : index
    %c0_26 = arith.constant 0 : index
    %56 = vector.load %arg9[%c0_23, %c0_24, %c0_25, %c0_26] : memref<1x2x64x128xbf16, #tpu.memory_space<vmem>>, vector<1x2x64x128xbf16>
    %57 = vector.shape_cast %56 : vector<1x2x64x128xbf16> to vector<2x64x128xbf16>
    %58 = vector.shape_cast %55 : vector<2x64x128xbf16> to vector<1x2x64x128xbf16>
    tpu.vector_store %arg9[%c0_23, %c0_24, %c0_25, %c0_26], %58 {strides = array<i32>} : memref<1x2x64x128xbf16, #tpu.memory_space<vmem>>, vector<1x2x64x128xbf16>,
    return
  }
  func.func @transform_0(%arg0: i32, %arg1: i32) -> (i32, i32, i32) {
    %c0_i32 = arith.constant 0 : i32
    %c0_i32_0 = arith.constant 0 : i32
    return %arg0, %arg1, %c0_i32 : i32, i32, i32
  }
  func.func @transform_1(%arg0: i32, %arg1: i32) -> (i32, i32) {
    %c0_i32 = arith.constant 0 : i32
    %c0_i32_0 = arith.constant 0 : i32
    %c0_i32_1 = arith.constant 0 : i32
    return %c0_i32, %c0_i32_0 : i32, i32
  }
  func.func @transform_2(%arg0: i32, %arg1: i32) -> (i32, i32) {
    %c0_i32 = arith.constant 0 : i32
    %c0_i32_0 = arith.constant 0 : i32
    %c0_i32_1 = arith.constant 0 : i32
    return %c0_i32, %c0_i32_0 : i32, i32
  }
  func.func @transform_3(%arg0: i32, %arg1: i32) -> (i32, i32) {
    %c0_i32 = arith.constant 0 : i32
    %c0_i32_0 = arith.constant 0 : i32
    %c0_i32_1 = arith.constant 0 : i32
    return %c0_i32, %c0_i32_0 : i32, i32
  }
  func.func @transform_4(%arg0: i32, %arg1: i32) -> (i32, i32) {
    %c0_i32 = arith.constant 0 : i32
    %c0_i32_0 = arith.constant 0 : i32
    %c0_i32_1 = arith.constant 0 : i32
    return %c0_i32, %c0_i32_0 : i32, i32
  }
  func.func @transform_5(%arg0: i32, %arg1: i32) -> (i32, i32, i32, i32) {
    %c0_i32 = arith.constant 0 : i32
    %c0_i32_0 = arith.constant 0 : i32
    %c0_i32_1 = arith.constant 0 : i32
    return %arg0, %c0_i32, %arg1, %c0_i32_0 : i32, i32, i32, i32
  }
  func.func @transform_6(%arg0: i32, %arg1: i32) -> (i32, i32, i32, i32) {
    %c0_i32 = arith.constant 0 : i32
    %c0_i32_0 = arith.constant 0 : i32
    %c0_i32_1 = arith.constant 0 : i32
    return %arg0, %c0_i32, %arg1, %c0_i32_0 : i32, i32, i32, i32
  }
  func.func @transform_7(%arg0: i32, %arg1: i32) -> (i32, i32, i32, i32) {
    %c0_i32 = arith.constant 0 : i32
    %c0_i32_0 = arith.constant 0 : i32
    %c0_i32_1 = arith.constant 0 : i32
    return %arg0, %c0_i32, %arg1, %c0_i32_0 : i32, i32, i32, i32
  }
}

</mosaic_0001>

<llo_original>
// kernel: tpu_custom_call.1
$region0: #{tpu_custom_call.1}
  #allocation0 [shape = 'u32[]', space=smem, size = 0x4, offset = 0x4, fixed_abs, tag = 'smem constant byte address 0x4 - core index']
  #allocation1 [shape = 'u32[72,128]{1,0:T(1,128)}', space=vmem, size = 0x9000, scoped, tag = 'internal scratch']
  #allocation15 [shape = 's32[]', space=sflag, size = 0x4, offset = 0, fixed_abs, tag = 'sflag constant byte address 0x0 - dummy sync flag']
  #allocation17 [shape = 's32[]', space=sflag, size = 0x4, offset = 0, fixed_abs, tag = 'sflag constant byte address 0x0 - dummy sync flag']
  #allocation19 [shape = 's32[]', space=sflag, size = 0x4, offset = 0, fixed_abs, tag = 'sflag constant byte address 0x0 - dummy sync flag']
  %s0 = inlined_call_operand.hbm [shape: f32[2,128,256], index: 0, kind: input, shape index: {}]
  %s1 = inlined_call_operand.hbm [shape: f32[1,256], index: 1, kind: input, shape index: {}]
  %s2 = inlined_call_operand.hbm [shape: f32[1,256], index: 2, kind: input, shape index: {}]
  %s3 = inlined_call_operand.hbm [shape: bf16[256,768], index: 3, kind: input, shape index: {}]
  %s4 = inlined_call_operand.hbm [shape: f32[1,768], index: 4, kind: input, shape index: {}]
  %s5 = inlined_call_operand.hbm [shape: bf16[2,2,128,128], index: 5, kind: output, shape index: {0}]
  %s6 = inlined_call_operand.hbm [shape: bf16[2,2,128,128], index: 6, kind: output, shape index: {1}]
  %s7 = inlined_call_operand.hbm [shape: bf16[2,2,128,128], index: 7, kind: output, shape index: {2}]
  %8 = xla_tuple %s5, %s6, %s7
  %s9 = sld [smem:[#allocation0]]
  $region89: #{tpu_custom_call.1} parent=0
    _
  %s11 = ssub.s32 1, %s9
  %s12 = scalar_select 0, %s11, %s9
  $region1: #{tpu_custom_call.1} parent=0
    #allocation2 [shape = 'u8[131072]{0}', space=vmem, size = 0x20000, scoped, tag = 'input window, operand 0']
    #allocation3 [shape = 's32[2]{0}', space=sflag, size = 0x8, scoped, tag = 'scoped memory for tpu_custom_call.1']
    #allocation4 [shape = 's32[2]{0}', space=sflag, size = 0x8, scoped, tag = 'scoped memory for tpu_custom_call.1']
    #allocation5 [shape = 'u8[1024]{0}', space=vmem, size = 0x400, scoped, tag = 'input window, operand 1, single buffered']
    #allocation6 [shape = 's32[1]{0}', space=sflag, size = 0x4, scoped, tag = 'scoped memory for tpu_custom_call.1']
    #allocation7 [shape = 'u8[1024]{0}', space=vmem, size = 0x400, scoped, tag = 'input window, operand 2, single buffered']
    #allocation8 [shape = 'u8[393216]{0}', space=vmem, size = 0x60000, scoped, tag = 'input window, operand 3, single buffered']
    #allocation9 [shape = 's32[1]{0}', space=sflag, size = 0x4, scoped, tag = 'scoped memory for tpu_custom_call.1']
    #allocation10 [shape = 'u8[3072]{0}', space=vmem, size = 0xc00, scoped, tag = 'input window, operand 4, single buffered']
    #allocation11 [shape = 'u8[65536]{0}', space=vmem, size = 0x10000, scoped, tag = 'output window, operand 0']
    #allocation12 [shape = 'u8[65536]{0}', space=vmem, size = 0x10000, scoped, tag = 'output window, operand 1']
    #allocation13 [shape = 's32[2]{0}', space=sflag, size = 0x8, scoped, tag = 'scoped memory for tpu_custom_call.1']
    #allocation14 [shape = 'u8[65536]{0}', space=vmem, size = 0x10000, scoped, tag = 'output window, operand 2']
    %13 = vsyncpa [#allocation3], 0
    %s14 = scalar_lea.sflag [#allocation3], 1
    %15 = vsyncpa %s14, 0
    %16 = vsyncpa [#allocation6], 0
    %17 = vsyncpa [#allocation9], 0
    %18 = vsyncpa [#allocation4], 0
    %s19 = scalar_lea.sflag [#allocation4], 1
    %20 = vsyncpa %s19, 0
    %21 = vsyncpa [#allocation13], 0
    %s22 = scalar_lea.sflag [#allocation13], 1
    %23 = vsyncpa %s22, 0
    loop: start=0, step=1, limit=6
    $region2: #{tpu_custom_call.1} parent=1 // loop_pre_header
      _
    $region3: #{tpu_custom_call.1} parent=1 // loop_header
      %s25 = sphi 0, %s29
      %p26 = scmp.ge.s32.totalorder %s25, 6
      %s32 = sphi 0, %s44
      %s33 = sphi 0, %s40
      %s34 = sphi 0, %s32
      %s35 = sphi 0, %s33
      %s36 = sphi 0, %s34
      %s37 = sphi 0, %s35
      %s49 = sphi 0, %s51
      %s52 = sphi 0, %s49
      %s53 = sphi 0, %s52
      %s69 = sphi 0, %s53
      %s73 = sphi 0, %s73
      %s75 = sphi 0, %s73
      %s76 = sphi 0, %s75
      %s90 = sphi 0, %s76
      %s94 = sphi 0, %s94
      %s96 = sphi 0, %s94
      %s97 = sphi 0, %s96
      %s111 = sphi 0, %s97
      %s115 = sphi 0, %s115
      %s117 = sphi 0, %s115
      %s118 = sphi 0, %s117
      %s132 = sphi 0, %s118
      %s136 = sphi 0, %s136
      %s138 = sphi 0, %s136
      %s139 = sphi 0, %s138
      %s153 = sphi 0, %s139
      %s161 = sphi 0, %s163
      %s164 = sphi 0, %s161
      %s165 = sphi 0, %s164
      %s181 = sphi 0, %s165
      %s189 = sphi 0, %s191
      %s192 = sphi 0, %s189
      %s193 = sphi 0, %s192
      %s209 = sphi 0, %s193
      %s217 = sphi 0, %s219
      %s220 = sphi 0, %s217
      %s221 = sphi 0, %s220
      %s237 = sphi 0, %s221
    $region4: #{tpu_custom_call.1} parent=1 // loop_header_branch
      %28 = sbr.rel (%p26) target = $region8
    $region5: #{tpu_custom_call.1} parent=1 // loop_body
      %s30 = ssub.s32 %s25, 1
      %s31 = ssub.s32 %s25, 2
      %s38 = sadd.s32 1, %s33
      %p39 = scmp.ge.s32.totalorder %s38, 2
      %s40 = scalar_select %p39, 0, %s38
      %s41 = sadd.s32 1, %s32
      %s42 = scalar_select %p39, %s41, %s32
      %p43 = scmp.ge.s32.totalorder %s42, 2
      %s44 = scalar_select %p43, 0, %s42
      %s45 = ssub.s32 %s32, %s44
      %s46 = ssub.s32 %s33, %s40
      %s47 = sor.u32 %s45, %s46
      %p48 = scmp.eq.s32.totalorder %s47, 0
      %s50 = sadd.s32 %s49, 1
      %s51 = scalar_select %p48, %s49, %s50
      %p54 = pneg %p48
      %p55 = scmp.eq.s32.totalorder %s25, 3
      %p56 = por %p54, %p55
      %p57 = scmp.ne.s32.totalorder %s49, %s52
      %p58 = scmp.eq.s32.totalorder %s25, 0
      %p59 = por %p57, %p58
      %p60 = scmp.ne.s32.totalorder %s49, %s52
      %p61 = scmp.eq.s32.totalorder %s30, 3
      %p62 = por %p60, %p61
      %p63 = scmp.ne.s32.totalorder %s52, %s53
      %p64 = scmp.eq.s32.totalorder %s30, 0
      %p65 = por %p63, %p64
      %p66 = scmp.ne.s32.totalorder %s52, %s53
      %p67 = scmp.eq.s32.totalorder %s31, 3
      %p68 = por %p66, %p67
      %p70 = scmp.ne.s32.totalorder %s53, %s69
      %p71 = scmp.eq.s32.totalorder %s31, 0
      %p72 = por %p70, %p71
      %s74 = sadd.s32 %s73, 1
      %p77 = scmp.eq.s32.totalorder %s25, 3
      %p78 = scmp.ne.s32.totalorder %s73, %s75
      %p79 = scmp.eq.s32.totalorder %s25, 0
      %p80 = por %p78, %p79
      %p81 = scmp.ne.s32.totalorder %s73, %s75
      %p82 = scmp.eq.s32.totalorder %s30, 3
      %p83 = por %p81, %p82
      %p84 = scmp.ne.s32.totalorder %s75, %s76
      %p85 = scmp.eq.s32.totalorder %s30, 0
      %p86 = por %p84, %p85
      %p87 = scmp.ne.s32.totalorder %s75, %s76
      %p88 = scmp.eq.s32.totalorder %s31, 3
      %p89 = por %p87, %p88
      %p91 = scmp.ne.s32.totalorder %s76, %s90
      %p92 = scmp.eq.s32.totalorder %s31, 0
      %p93 = por %p91, %p92
      %s95 = sadd.s32 %s94, 1
      %p98 = scmp.eq.s32.totalorder %s25, 3
      %p99 = scmp.ne.s32.totalorder %s94, %s96
      %p100 = scmp.eq.s32.totalorder %s25, 0
      %p101 = por %p99, %p100
      %p102 = scmp.ne.s32.totalorder %s94, %s96
      %p103 = scmp.eq.s32.totalorder %s30, 3
      %p104 = por %p102, %p103
      %p105 = scmp.ne.s32.totalorder %s96, %s97
      %p106 = scmp.eq.s32.totalorder %s30, 0
      %p107 = por %p105, %p106
      %p108 = scmp.ne.s32.totalorder %s96, %s97
      %p109 = scmp.eq.s32.totalorder %s31, 3
      %p110 = por %p108, %p109
      %p112 = scmp.ne.s32.totalorder %s97, %s111
      %p113 = scmp.eq.s32.totalorder %s31, 0
      %p114 = por %p112, %p113
      %s116 = sadd.s32 %s115, 1
      %p119 = scmp.eq.s32.totalorder %s25, 3
      %p120 = scmp.ne.s32.totalorder %s115, %s117
      %p121 = scmp.eq.s32.totalorder %s25, 0
      %p122 = por %p120, %p121
      %p123 = scmp.ne.s32.totalorder %s115, %s117
      %p124 = scmp.eq.s32.totalorder %s30, 3
      %p125 = por %p123, %p124
      %p126 = scmp.ne.s32.totalorder %s117, %s118
      %p127 = scmp.eq.s32.totalorder %s30, 0
      %p128 = por %p126, %p127
      %p129 = scmp.ne.s32.totalorder %s117, %s118
      %p130 = scmp.eq.s32.totalorder %s31, 3
      %p131 = por %p129, %p130
      %p133 = scmp.ne.s32.totalorder %s118, %s132
      %p134 = scmp.eq.s32.totalorder %s31, 0
      %p135 = por %p133, %p134
      %s137 = sadd.s32 %s136, 1
      %p140 = scmp.eq.s32.totalorder %s25, 3
      %p141 = scmp.ne.s32.totalorder %s136, %s138
      %p142 = scmp.eq.s32.totalorder %s25, 0
      %p143 = por %p141, %p142
      %p144 = scmp.ne.s32.totalorder %s136, %s138
      %p145 = scmp.eq.s32.totalorder %s30, 3
      %p146 = por %p144, %p145
      %p147 = scmp.ne.s32.totalorder %s138, %s139
      %p148 = scmp.eq.s32.totalorder %s30, 0
      %p149 = por %p147, %p148
      %p150 = scmp.ne.s32.totalorder %s138, %s139
      %p151 = scmp.eq.s32.totalorder %s31, 3
      %p152 = por %p150, %p151
      %p154 = scmp.ne.s32.totalorder %s139, %s153
      %p155 = scmp.eq.s32.totalorder %s31, 0
      %p156 = por %p154, %p155
      %s157 = ssub.s32 %s32, %s44
      %s158 = ssub.s32 %s33, %s40
      %s159 = sor.u32 %s157, %s158
      %p160 = scmp.eq.s32.totalorder %s159, 0
      %s162 = sadd.s32 %s161, 1
      %s163 = scalar_select %p160, %s161, %s162
      %p166 = pneg %p160
      %p167 = scmp.eq.s32.totalorder %s25, 3
      %p168 = por %p166, %p167
      %p169 = scmp.ne.s32.totalorder %s161, %s164
      %p170 = scmp.eq.s32.totalorder %s25, 0
      %p171 = por %p169, %p170
      %p172 = scmp.ne.s32.totalorder %s161, %s164
      %p173 = scmp.eq.s32.totalorder %s30, 3
      %p174 = por %p172, %p173
      %p175 = scmp.ne.s32.totalorder %s164, %s165
      %p176 = scmp.eq.s32.totalorder %s30, 0
      %p177 = por %p175, %p176
      %p178 = scmp.ne.s32.totalorder %s164, %s165
      %p179 = scmp.eq.s32.totalorder %s31, 3
      %p180 = por %p178, %p179
      %p182 = scmp.ne.s32.totalorder %s165, %s181
      %p183 = scmp.eq.s32.totalorder %s31, 0
      %p184 = por %p182, %p183
      %s185 = ssub.s32 %s32, %s44
      %s186 = ssub.s32 %s33, %s40
      %s187 = sor.u32 %s185, %s186
      %p188 = scmp.eq.s32.totalorder %s187, 0
      %s190 = sadd.s32 %s189, 1
      %s191 = scalar_select %p188, %s189, %s190
      %p194 = pneg %p188
      %p195 = scmp.eq.s32.totalorder %s25, 3
      %p196 = por %p194, %p195
      %p197 = scmp.ne.s32.totalorder %s189, %s192
      %p198 = scmp.eq.s32.totalorder %s25, 0
      %p199 = por %p197, %p198
      %p200 = scmp.ne.s32.totalorder %s189, %s192
      %p201 = scmp.eq.s32.totalorder %s30, 3
      %p202 = por %p200, %p201
      %p203 = scmp.ne.s32.totalorder %s192, %s193
      %p204 = scmp.eq.s32.totalorder %s30, 0
      %p205 = por %p203, %p204
      %p206 = scmp.ne.s32.totalorder %s192, %s193
      %p207 = scmp.eq.s32.totalorder %s31, 3
      %p208 = por %p206, %p207
      %p210 = scmp.ne.s32.totalorder %s193, %s209
      %p211 = scmp.eq.s32.totalorder %s31, 0
      %p212 = por %p210, %p211
      %s213 = ssub.s32 %s32, %s44
      %s214 = ssub.s32 %s33, %s40
      %s215 = sor.u32 %s213, %s214
      %p216 = scmp.eq.s32.totalorder %s215, 0
      %s218 = sadd.s32 %s217, 1
      %s219 = scalar_select %p216, %s217, %s218
      %p222 = pneg %p216
      %p223 = scmp.eq.s32.totalorder %s25, 3
      %p224 = por %p222, %p223
      %p225 = scmp.ne.s32.totalorder %s217, %s220
      %p226 = scmp.eq.s32.totalorder %s25, 0
      %p227 = por %p225, %p226
      %p228 = scmp.ne.s32.totalorder %s217, %s220
      %p229 = scmp.eq.s32.totalorder %s30, 3
      %p230 = por %p228, %p229
      %p231 = scmp.ne.s32.totalorder %s220, %s221
      %p232 = scmp.eq.s32.totalorder %s30, 0
      %p233 = por %p231, %p232
      %p234 = scmp.ne.s32.totalorder %s220, %s221
      %p235 = scmp.eq.s32.totalorder %s31, 3
      %p236 = por %p234, %p235
      %p238 = scmp.ne.s32.totalorder %s221, %s237
      %p239 = scmp.eq.s32.totalorder %s31, 0
      %p240 = por %p238, %p239
      %p241 = scmp.le.s32.totalorder 1, %s25
      %p242 = scmp.lt.s32.totalorder %s25, 5
      %p243 = pnand %p241, %p242
      %p244 = pneg %p243
      // Predicated region
      $region9: #{tpu_custom_call.1} parent=5 // pred_check
        _
      $region10: #{tpu_custom_call.1} parent=5 // pred_check_branch
        %246 = sbr.rel (%p243) target = $region12
      $region11: #{tpu_custom_call.1} parent=5 // pred_region
        %s247 = ssub.s32 %s25, 1
        // Predicated region
        $region13: #{tpu_custom_call.1} parent=11 // pred_check
          %p248 = pneg %p86
        $region14: #{tpu_custom_call.1} parent=11 // pred_check_branch
          %250 = sbr.rel (%p248) target = $region16
        $region15: #{tpu_custom_call.1} parent=11 // pred_region
          %252 = vsyncadd [#allocation6], 0
          %s254 = sshll.u32 %s1, 4
          %s255 = int_to_ptr.hbm [resolvable:$true] %s254
          %s256 = sshll.u32 [#allocation5], 4
          %s257 = int_to_ptr.vmem [resolvable:$true] %s256
          %259 = dma.hbm_to_vmem [thread:$0]  %s255, 32, %s257, [#allocation6]
        $region16: #{tpu_custom_call.1} parent=11 // pred_fallthru
          _
        // Predicated region
        $region17: #{tpu_custom_call.1} parent=11 // pred_check
          %p260 = pneg %p107
        $region18: #{tpu_custom_call.1} parent=11 // pred_check_branch
          %262 = sbr.rel (%p260) target = $region20
        $region19: #{tpu_custom_call.1} parent=11 // pred_region
          %264 = vsyncadd [#allocation6], 0
          %s266 = sshll.u32 %s2, 4
          %s267 = int_to_ptr.hbm [resolvable:$true] %s266
          %s268 = sshll.u32 [#allocation7], 4
          %s269 = int_to_ptr.vmem [resolvable:$true] %s268
          %271 = dma.hbm_to_vmem [thread:$0]  %s267, 32, %s269, [#allocation6]
        $region20: #{tpu_custom_call.1} parent=11 // pred_fallthru
          _
        // Predicated region
        $region21: #{tpu_custom_call.1} parent=11 // pred_check
          %p272 = pneg %p128
        $region22: #{tpu_custom_call.1} parent=11 // pred_check_branch
          %274 = sbr.rel (%p272) target = $region24
        $region23: #{tpu_custom_call.1} parent=11 // pred_region
          %276 = vsyncadd [#allocation9], 0
          %s277 = sshll.u32 %s3, 4
          %s278 = int_to_ptr.hbm [resolvable:$true] %s277
          %s279 = sshll.u32 [#allocation8], 4
          %s280 = int_to_ptr.vmem [resolvable:$true] %s279
          %285 = dma.hbm_to_vmem [thread:$0]  %s278, 12288, %s280, [#allocation9], 384, 384, 24
        $region24: #{tpu_custom_call.1} parent=11 // pred_fallthru
          _
        // Predicated region
        $region25: #{tpu_custom_call.1} parent=11 // pred_check
          %p286 = pneg %p149
        $region26: #{tpu_custom_call.1} parent=11 // pred_check_branch
          %288 = sbr.rel (%p286) target = $region28
        $region27: #{tpu_custom_call.1} parent=11 // pred_region
          %290 = vsyncadd [#allocation9], 0
          %s292 = sshll.u32 %s4, 4
          %s293 = int_to_ptr.hbm [resolvable:$true] %s292
          %s294 = sshll.u32 [#allocation10], 4
          %s295 = int_to_ptr.vmem [resolvable:$true] %s294
          %297 = dma.hbm_to_vmem [thread:$0]  %s293, 96, %s295, [#allocation9]
        $region28: #{tpu_custom_call.1} parent=11 // pred_fallthru
          _
      $region12: #{tpu_custom_call.1} parent=5 // pred_fallthru
        _
      %p298 = scmp.lt.s32.totalorder %s25, 4
      // Predicated region
      $region29: #{tpu_custom_call.1} parent=5 // pred_check
        %p299 = pneg %p298
      $region30: #{tpu_custom_call.1} parent=5 // pred_check_branch
        %301 = sbr.rel (%p299) target = $region32
      $region31: #{tpu_custom_call.1} parent=5 // pred_region
        // Predicated region
        $region33: #{tpu_custom_call.1} parent=31 // pred_check
          %p302 = pneg %p59
        $region34: #{tpu_custom_call.1} parent=31 // pred_check_branch
          %304 = sbr.rel (%p302) target = $region36
        $region35: #{tpu_custom_call.1} parent=31 // pred_region
          %s305 = sand.u32 %s49, 1
          %s306 = scalar_lea.sflag [#allocation3], %s305
          %s307 = sand.u32 %s49, 1
          %s308 = smul.addr %s307, 128
          %s309 = scalar_lea.vmem [#allocation2], %s308
          %s310 = smul.u32 8, %s33
          %312 = vsyncadd %s306, 0
          %s313 = smul.addr %s310, 2
          %s314 = smul.addr %s32, 32
          %s315 = sadd.s32 %s313, %s314
          %s316 = smul.addr %s315, 8
          %s317 = scalar_lea.hbm %s0, %s316
          %s318 = sshll.u32 %s317, 4
          %s319 = int_to_ptr.hbm [resolvable:$true] %s318
          %s320 = sshll.u32 %s309, 4
          %s321 = int_to_ptr.vmem [resolvable:$true] %s320
          %326 = dma.hbm_to_vmem [thread:$0]  %s319, 2048, %s321, %s306, 256, 256, 16
        $region36: #{tpu_custom_call.1} parent=31 // pred_fallthru
          _
      $region32: #{tpu_custom_call.1} parent=5 // pred_fallthru
        _
      %p327 = scmp.le.s32.totalorder 1, %s25
      %p328 = scmp.lt.s32.totalorder %s25, 5
      %p329 = pnand %p327, %p328
      %p330 = pneg %p329
      // Predicated region
      $region37: #{tpu_custom_call.1} parent=5 // pred_check
        _
      $region38: #{tpu_custom_call.1} parent=5 // pred_check_branch
        %332 = sbr.rel (%p329) target = $region40
      $region39: #{tpu_custom_call.1} parent=5 // pred_region
        %s333 = ssub.s32 %s25, 1
        %s334 = sand.u32 %s52, 1
        %s335 = scalar_lea.sflag [#allocation3], %s334
        %s336 = sand.u32 %s52, 1
        %s337 = smul.addr %s336, 128
        %s338 = scalar_lea.vmem [#allocation2], %s337
        // Predicated region
        $region41: #{tpu_custom_call.1} parent=39 // pred_check
          %p339 = pneg %p65
        $region42: #{tpu_custom_call.1} parent=39 // pred_check_branch
          %341 = sbr.rel (%p339) target = $region44
        $region43: #{tpu_custom_call.1} parent=39 // pred_region
          %343 = dma.done %s335, 2048
        $region44: #{tpu_custom_call.1} parent=39 // pred_fallthru
          _
        // Predicated region
        $region45: #{tpu_custom_call.1} parent=39 // pred_check
          %p344 = pneg %p86
        $region46: #{tpu_custom_call.1} parent=39 // pred_check_branch
          %346 = sbr.rel (%p344) target = $region48
        $region47: #{tpu_custom_call.1} parent=39 // pred_region
          %348 = dma.done [#allocation6], 32
        $region48: #{tpu_custom_call.1} parent=39 // pred_fallthru
          _
        // Predicated region
        $region49: #{tpu_custom_call.1} parent=39 // pred_check
          %p349 = pneg %p107
        $region50: #{tpu_custom_call.1} parent=39 // pred_check_branch
          %351 = sbr.rel (%p349) target = $region52
        $region51: #{tpu_custom_call.1} parent=39 // pred_region
          %353 = dma.done [#allocation6], 32
        $region52: #{tpu_custom_call.1} parent=39 // pred_fallthru
          _
        // Predicated region
        $region53: #{tpu_custom_call.1} parent=39 // pred_check
          %p354 = pneg %p128
        $region54: #{tpu_custom_call.1} parent=39 // pred_check_branch
          %356 = sbr.rel (%p354) target = $region56
        $region55: #{tpu_custom_call.1} parent=39 // pred_region
          %358 = dma.done [#allocation9], 12288
        $region56: #{tpu_custom_call.1} parent=39 // pred_fallthru
          _
        // Predicated region
        $region57: #{tpu_custom_call.1} parent=39 // pred_check
          %p359 = pneg %p149
        $region58: #{tpu_custom_call.1} parent=39 // pred_check_branch
          %361 = sbr.rel (%p359) target = $region60
        $region59: #{tpu_custom_call.1} parent=39 // pred_region
          %363 = dma.done [#allocation9], 96
        $region60: #{tpu_custom_call.1} parent=39 // pred_fallthru
          _
        %s364 = sand.u32 %s52, 1
        %s365 = scalar_lea.sflag [#allocation3], %s364
        %s366 = sand.u32 %s52, 1
        %s367 = smul.addr %s366, 128
        %s368 = scalar_lea.vmem [#allocation2], %s367
        %p369 = pneg %p65
        %p370 = pneg %p62
        %p371 = pneg %p86
        %p372 = pneg %p83
        %p373 = pneg %p107
        %p374 = pneg %p104
        %p375 = pneg %p128
        %p376 = pneg %p125
        %p377 = pneg %p149
        %p378 = pneg %p146
        %p379 = pneg %p177
        %p380 = pneg %p174
        %s381 = sand.u32 %s164, 1
        %s382 = scalar_lea.sflag [#allocation4], %s381
        %s383 = sand.u32 %s164, 1
        %s384 = smul.addr %s383, 64
        %s385 = scalar_lea.vmem [#allocation11], %s384
        %p386 = pneg %p205
        %p387 = pneg %p202
        %s388 = sand.u32 %s30, 1
        %s389 = scalar_lea.sflag [#allocation13], %s388
        %s390 = sand.u32 %s192, 1
        %s391 = smul.addr %s390, 64
        %s392 = scalar_lea.vmem [#allocation12], %s391
        %p393 = pneg %p233
        %p394 = pneg %p230
        %s395 = sand.u32 %s30, 1
        %s396 = scalar_lea.sflag [#allocation13], %s395
        %s397 = sand.u32 %s220, 1
        %s398 = smul.addr %s397, 64
        %s399 = scalar_lea.vmem [#allocation14], %s398
        %s400 = smul.u32 8, %s35
        %s401 = smul.u32 8, %s35
        %s402 = smul.u32 8, %s35
        %s403 = smul.u32 8, %s35
        %v404 = vld [vmem:[%s338] sm:$0xff]
        %v405 = vld [vmem:[%s338 + $0x8] sm:$0xff]
        %v406 = vld [vmem:[%s338 + $0x10] sm:$0xff]
        %v407 = vld [vmem:[%s338 + $0x18] sm:$0xff]
        %v408 = vld [vmem:[%s338 + $0x20] sm:$0xff]
        %v409 = vld [vmem:[%s338 + $0x28] sm:$0xff]
        %v410 = vld [vmem:[%s338 + $0x30] sm:$0xff]
        %v411 = vld [vmem:[%s338 + $0x38] sm:$0xff]
        %v412 = vld [vmem:[%s338 + $0x40] sm:$0xff]
        %v413 = vld [vmem:[%s338 + $0x48] sm:$0xff]
        %v414 = vld [vmem:[%s338 + $0x50] sm:$0xff]
        %v415 = vld [vmem:[%s338 + $0x58] sm:$0xff]
        %v416 = vld [vmem:[%s338 + $0x60] sm:$0xff]
        %v417 = vld [vmem:[%s338 + $0x68] sm:$0xff]
        %v418 = vld [vmem:[%s338 + $0x70] sm:$0xff]
        %v419 = vld [vmem:[%s338 + $0x78] sm:$0xff]
        %v420 = vld [vmem:[#allocation5] sm:$0x3]
        %v421 = vld [vmem:[#allocation7] sm:$0x3]
        %v422 = vadd.f32 %v404, %v405
        %423 = vadd.xlane.f32.xlu0 %v422
        %v424 = vpop.xlane.xlu0 %423
        %v425 = vadd.f32 %v406, %v407
        %426 = vadd.xlane.f32.xlu0 %v425
        %v427 = vpop.xlane.xlu0 %426
        %v428 = vadd.f32 %v408, %v409
        %429 = vadd.xlane.f32.xlu0 %v428
        %v430 = vpop.xlane.xlu0 %429
        %v431 = vadd.f32 %v410, %v411
        %432 = vadd.xlane.f32.xlu0 %v431
        %v433 = vpop.xlane.xlu0 %432
        %v434 = vadd.f32 %v412, %v413
        %435 = vadd.xlane.f32.xlu0 %v434
        %v436 = vpop.xlane.xlu0 %435
        %v437 = vadd.f32 %v414, %v415
        %438 = vadd.xlane.f32.xlu0 %v437
        %v439 = vpop.xlane.xlu0 %438
        %v440 = vadd.f32 %v416, %v417
        %441 = vadd.xlane.f32.xlu0 %v440
        %v442 = vpop.xlane.xlu0 %441
        %v443 = vadd.f32 %v418, %v419
        %444 = vadd.xlane.f32.xlu0 %v443
        %v445 = vpop.xlane.xlu0 %444
        %v446 = vrcp.pop 256.0
        %v447 = vmul.f32 256.0, %v446
        %v448 = vsub.f32 1.0, %v447
        %v449 = vmul.f32 %v446, %v448
        %v450 = vadd.f32 %v446, %v449
        %vm451 = vweird.f32 %v446
        %v452 = vsel %vm451, %v446, %v450
        %v453 = vmul.f32 %v424, %v452
        %v454 = vmul.f32 %v427, %v452
        %v455 = vmul.f32 %v430, %v452
        %v456 = vmul.f32 %v433, %v452
        %v457 = vmul.f32 %v436, %v452
        %v458 = vmul.f32 %v439, %v452
        %v459 = vmul.f32 %v442, %v452
        %v460 = vmul.f32 %v445, %v452
        %v461 = vsub.f32 %v404, %v453
        %v462 = vsub.f32 %v405, %v453
        %v463 = vsub.f32 %v406, %v454
        %v464 = vsub.f32 %v407, %v454
        %v465 = vsub.f32 %v408, %v455
        %v466 = vsub.f32 %v409, %v455
        %v467 = vsub.f32 %v410, %v456
        %v468 = vsub.f32 %v411, %v456
        %v469 = vsub.f32 %v412, %v457
        %v470 = vsub.f32 %v413, %v457
        %v471 = vsub.f32 %v414, %v458
        %v472 = vsub.f32 %v415, %v458
        %v473 = vsub.f32 %v416, %v459
        %v474 = vsub.f32 %v417, %v459
        %v475 = vsub.f32 %v418, %v460
        %v476 = vsub.f32 %v419, %v460
        %v477 = vmul.f32 %v461, %v461
        %v478 = vmul.f32 %v462, %v462
        %v479 = vmul.f32 %v463, %v463
        %v480 = vmul.f32 %v464, %v464
        %v481 = vmul.f32 %v465, %v465
        %v482 = vmul.f32 %v466, %v466
        %v483 = vmul.f32 %v467, %v467
        %v484 = vmul.f32 %v468, %v468
        %v485 = vmul.f32 %v469, %v469
        %v486 = vmul.f32 %v470, %v470
        %v487 = vmul.f32 %v471, %v471
        %v488 = vmul.f32 %v472, %v472
        %v489 = vmul.f32 %v473, %v473
        %v490 = vmul.f32 %v474, %v474
        %v491 = vmul.f32 %v475, %v475
        %v492 = vmul.f32 %v476, %v476
        %v493 = vadd.f32 %v477, %v478
        %494 = vadd.xlane.f32.xlu0 %v493
        %v495 = vpop.xlane.xlu0 %494
        %v496 = vadd.f32 %v479, %v480
        %497 = vadd.xlane.f32.xlu0 %v496
        %v498 = vpop.xlane.xlu0 %497
        %v499 = vadd.f32 %v481, %v482
        %500 = vadd.xlane.f32.xlu0 %v499
        %v501 = vpop.xlane.xlu0 %500
        %v502 = vadd.f32 %v483, %v484
        %503 = vadd.xlane.f32.xlu0 %v502
        %v504 = vpop.xlane.xlu0 %503
        %v505 = vadd.f32 %v485, %v486
        %506 = vadd.xlane.f32.xlu0 %v505
        %v507 = vpop.xlane.xlu0 %506
        %v508 = vadd.f32 %v487, %v488
        %509 = vadd.xlane.f32.xlu0 %v508
        %v510 = vpop.xlane.xlu0 %509
        %v511 = vadd.f32 %v489, %v490
        %512 = vadd.xlane.f32.xlu0 %v511
        %v513 = vpop.xlane.xlu0 %512
        %v514 = vadd.f32 %v491, %v492
        %515 = vadd.xlane.f32.xlu0 %v514
        %v516 = vpop.xlane.xlu0 %515
        %v517 = vmul.f32 %v495, %v452
        %v518 = vmul.f32 %v498, %v452
        %v519 = vmul.f32 %v501, %v452
        %v520 = vmul.f32 %v504, %v452
        %v521 = vmul.f32 %v507, %v452
        %v522 = vmul.f32 %v510, %v452
        %v523 = vmul.f32 %v513, %v452
        %v524 = vmul.f32 %v516, %v452
        %v525 = vadd.f32 %v517, 1e-05
        %v526 = vadd.f32 %v518, 1e-05
        %v527 = vadd.f32 %v519, 1e-05
        %v528 = vadd.f32 %v520, 1e-05
        %v529 = vadd.f32 %v521, 1e-05
        %v530 = vadd.f32 %v522, 1e-05
        %v531 = vadd.f32 %v523, 1e-05
        %v532 = vadd.f32 %v524, 1e-05
        %v533 = vrsqrt.pop %v525
        %v534 = vmul.f32 %v533, %v525
        %v535 = vmul.f32 %v534, %v533
        %v536 = vmul.f32 0.5, %v535
        %v537 = vsub.f32 1.5, %v536
        %v538 = vmul.f32 %v533, %v537
        %vm539 = vweird.f32 %v525
        %vm540 = vweird.f32 %v533
        %vm541 = vmor %vm539, %vm540
        %v542 = vsel %vm541, %v533, %v538
        %v543 = vrsqrt.pop %v526
        %v544 = vmul.f32 %v543, %v526
        %v545 = vmul.f32 %v544, %v543
        %v546 = vmul.f32 0.5, %v545
        %v547 = vsub.f32 1.5, %v546
        %v548 = vmul.f32 %v543, %v547
        %vm549 = vweird.f32 %v526
        %vm550 = vweird.f32 %v543
        %vm551 = vmor %vm549, %vm550
        %v552 = vsel %vm551, %v543, %v548
        %v553 = vrsqrt.pop %v527
        %v554 = vmul.f32 %v553, %v527
        %v555 = vmul.f32 %v554, %v553
        %v556 = vmul.f32 0.5, %v555
        %v557 = vsub.f32 1.5, %v556
        %v558 = vmul.f32 %v553, %v557
        %vm559 = vweird.f32 %v527
        %vm560 = vweird.f32 %v553
        %vm561 = vmor %vm559, %vm560
        %v562 = vsel %vm561, %v553, %v558
        %v563 = vrsqrt.pop %v528
        %v564 = vmul.f32 %v563, %v528
        %v565 = vmul.f32 %v564, %v563
        %v566 = vmul.f32 0.5, %v565
        %v567 = vsub.f32 1.5, %v566
        %v568 = vmul.f32 %v563, %v567
        %vm569 = vweird.f32 %v528
        %vm570 = vweird.f32 %v563
        %vm571 = vmor %vm569, %vm570
        %v572 = vsel %vm571, %v563, %v568
        %v573 = vrsqrt.pop %v529
        %v574 = vmul.f32 %v573, %v529
        %v575 = vmul.f32 %v574, %v573
        %v576 = vmul.f32 0.5, %v575
        %v577 = vsub.f32 1.5, %v576
        %v578 = vmul.f32 %v573, %v577
        %vm579 = vweird.f32 %v529
        %vm580 = vweird.f32 %v573
        %vm581 = vmor %vm579, %vm580
        %v582 = vsel %vm581, %v573, %v578
        %v583 = vrsqrt.pop %v530
        %v584 = vmul.f32 %v583, %v530
        %v585 = vmul.f32 %v584, %v583
        %v586 = vmul.f32 0.5, %v585
        %v587 = vsub.f32 1.5, %v586
        %v588 = vmul.f32 %v583, %v587
        %vm589 = vweird.f32 %v530
        %vm590 = vweird.f32 %v583
        %vm591 = vmor %vm589, %vm590
        %v592 = vsel %vm591, %v583, %v588
        %v593 = vrsqrt.pop %v531
        %v594 = vmul.f32 %v593, %v531
        %v595 = vmul.f32 %v594, %v593
        %v596 = vmul.f32 0.5, %v595
        %v597 = vsub.f32 1.5, %v596
        %v598 = vmul.f32 %v593, %v597
        %vm599 = vweird.f32 %v531
        %vm600 = vweird.f32 %v593
        %vm601 = vmor %vm599, %vm600
        %v602 = vsel %vm601, %v593, %v598
        %v603 = vrsqrt.pop %v532
        %v604 = vmul.f32 %v603, %v532
        %v605 = vmul.f32 %v604, %v603
        %v606 = vmul.f32 0.5, %v605
        %v607 = vsub.f32 1.5, %v606
        %v608 = vmul.f32 %v603, %v607
        %vm609 = vweird.f32 %v532
        %vm610 = vweird.f32 %v603
        %vm611 = vmor %vm609, %vm610
        %v612 = vsel %vm611, %v603, %v608
        %v613 = vmul.f32 %v461, %v542
        %v614 = vmul.f32 %v462, %v542
        %v615 = vmul.f32 %v463, %v552
        %v616 = vmul.f32 %v464, %v552
        %v617 = vmul.f32 %v465, %v562
        %v618 = vmul.f32 %v466, %v562
        %v619 = vmul.f32 %v467, %v572
        %v620 = vmul.f32 %v468, %v572
        %v621 = vmul.f32 %v469, %v582
        %v622 = vmul.f32 %v470, %v582
        %v623 = vmul.f32 %v471, %v592
        %v624 = vmul.f32 %v472, %v592
        %v625 = vmul.f32 %v473, %v602
        %v626 = vmul.f32 %v474, %v602
        %v627 = vmul.f32 %v475, %v612
        %v628 = vmul.f32 %v476, %v612
        %v630 = vperm.slane %v420, 0
        %v631 = vperm.slane %v420, 1
        %v634 = vmul.f32 %v613, %v630
        %v635 = vmul.f32 %v614, %v631
        %v636 = vmul.f32 %v615, %v630
        %v637 = vmul.f32 %v616, %v631
        %v638 = vmul.f32 %v617, %v630
        %v639 = vmul.f32 %v618, %v631
        %v640 = vmul.f32 %v619, %v630
        %v641 = vmul.f32 %v620, %v631
        %v642 = vmul.f32 %v621, %v630
        %v643 = vmul.f32 %v622, %v631
        %v644 = vmul.f32 %v623, %v630
        %v645 = vmul.f32 %v624, %v631
        %v646 = vmul.f32 %v625, %v630
        %v647 = vmul.f32 %v626, %v631
        %v648 = vmul.f32 %v627, %v630
        %v649 = vmul.f32 %v628, %v631
        %v651 = vperm.slane %v421, 0
        %v652 = vperm.slane %v421, 1
        %v655 = vadd.f32 %v634, %v651
        %v656 = vadd.f32 %v635, %v652
        %v657 = vadd.f32 %v636, %v651
        %v658 = vadd.f32 %v637, %v652
        %v659 = vadd.f32 %v638, %v651
        %v660 = vadd.f32 %v639, %v652
        %v661 = vadd.f32 %v640, %v651
        %v662 = vadd.f32 %v641, %v652
        %v663 = vadd.f32 %v642, %v651
        %v664 = vadd.f32 %v643, %v652
        %v665 = vadd.f32 %v644, %v651
        %v666 = vadd.f32 %v645, %v652
        %v667 = vadd.f32 %v646, %v651
        %v668 = vadd.f32 %v647, %v652
        %v669 = vadd.f32 %v648, %v651
        %v670 = vadd.f32 %v649, %v652
        %v671 = vpack.c.bf16 %v657, %v655
        %v672 = vpack.c.bf16 %v658, %v656
        %v673 = vpack.c.bf16 %v661, %v659
        %v674 = vpack.c.bf16 %v662, %v660
        %v675 = vpack.c.bf16 %v665, %v663
        %v676 = vpack.c.bf16 %v666, %v664
        %v677 = vpack.c.bf16 %v669, %v667
        %v678 = vpack.c.bf16 %v670, %v668
        %v679 = vld [vmem:[#allocation8] sm:$0xff]
        %v680 = vld [vmem:[#allocation8 + $0x8] sm:$0xff]
        %v681 = vld [vmem:[#allocation8 + $0x10] sm:$0xff]
        %v682 = vld [vmem:[#allocation8 + $0x18] sm:$0xff]
        %v683 = vld [vmem:[#allocation8 + $0x20] sm:$0xff]
        %v684 = vld [vmem:[#allocation8 + $0x28] sm:$0xff]
        %v685 = vld [vmem:[#allocation8 + $0x30] sm:$0xff]
        %v686 = vld [vmem:[#allocation8 + $0x38] sm:$0xff]
        %v687 = vld [vmem:[#allocation8 + $0x40] sm:$0xff]
        %v688 = vld [vmem:[#allocation8 + $0x48] sm:$0xff]
        %v689 = vld [vmem:[#allocation8 + $0x50] sm:$0xff]
        %v690 = vld [vmem:[#allocation8 + $0x58] sm:$0xff]
        %v691 = vld [vmem:[#allocation8 + $0x60] sm:$0xff]
        %v692 = vld [vmem:[#allocation8 + $0x68] sm:$0xff]
        %v693 = vld [vmem:[#allocation8 + $0x70] sm:$0xff]
        %v694 = vld [vmem:[#allocation8 + $0x78] sm:$0xff]
        %v695 = vld [vmem:[#allocation8 + $0x80] sm:$0xff]
        %v696 = vld [vmem:[#allocation8 + $0x88] sm:$0xff]
        %v697 = vld [vmem:[#allocation8 + $0x90] sm:$0xff]
        %v698 = vld [vmem:[#allocation8 + $0x98] sm:$0xff]
        %v699 = vld [vmem:[#allocation8 + $0xa0] sm:$0xff]
        %v700 = vld [vmem:[#allocation8 + $0xa8] sm:$0xff]
        %v701 = vld [vmem:[#allocation8 + $0xb0] sm:$0xff]
        %v702 = vld [vmem:[#allocation8 + $0xb8] sm:$0xff]
        %v703 = vld [vmem:[#allocation8 + $0xc0] sm:$0xff]
        %v704 = vld [vmem:[#allocation8 + $0xc8] sm:$0xff]
        %v705 = vld [vmem:[#allocation8 + $0xd0] sm:$0xff]
        %v706 = vld [vmem:[#allocation8 + $0xd8] sm:$0xff]
        %v707 = vld [vmem:[#allocation8 + $0xe0] sm:$0xff]
        %v708 = vld [vmem:[#allocation8 + $0xe8] sm:$0xff]
        %v709 = vld [vmem:[#allocation8 + $0xf0] sm:$0xff]
        %v710 = vld [vmem:[#allocation8 + $0xf8] sm:$0xff]
        %v711 = vld [vmem:[#allocation8 + $0x100] sm:$0xff]
        %v712 = vld [vmem:[#allocation8 + $0x108] sm:$0xff]
        %v713 = vld [vmem:[#allocation8 + $0x110] sm:$0xff]
        %v714 = vld [vmem:[#allocation8 + $0x118] sm:$0xff]
        %v715 = vld [vmem:[#allocation8 + $0x120] sm:$0xff]
        %v716 = vld [vmem:[#allocation8 + $0x128] sm:$0xff]
        %v717 = vld [vmem:[#allocation8 + $0x130] sm:$0xff]
        %v718 = vld [vmem:[#allocation8 + $0x138] sm:$0xff]
        %v719 = vld [vmem:[#allocation8 + $0x140] sm:$0xff]
        %v720 = vld [vmem:[#allocation8 + $0x148] sm:$0xff]
        %v721 = vld [vmem:[#allocation8 + $0x150] sm:$0xff]
        %v722 = vld [vmem:[#allocation8 + $0x158] sm:$0xff]
        %v723 = vld [vmem:[#allocation8 + $0x160] sm:$0xff]
        %v724 = vld [vmem:[#allocation8 + $0x168] sm:$0xff]
        %v725 = vld [vmem:[#allocation8 + $0x170] sm:$0xff]
        %v726 = vld [vmem:[#allocation8 + $0x178] sm:$0xff]
        %v727 = vld [vmem:[#allocation8 + $0x180] sm:$0xff]
        %v728 = vld [vmem:[#allocation8 + $0x188] sm:$0xff]
        %v729 = vld [vmem:[#allocation8 + $0x190] sm:$0xff]
        %v730 = vld [vmem:[#allocation8 + $0x198] sm:$0xff]
        %v731 = vld [vmem:[#allocation8 + $0x1a0] sm:$0xff]
        %v732 = vld [vmem:[#allocation8 + $0x1a8] sm:$0xff]
        %v733 = vld [vmem:[#allocation8 + $0x1b0] sm:$0xff]
        %v734 = vld [vmem:[#allocation8 + $0x1b8] sm:$0xff]
        %v735 = vld [vmem:[#allocation8 + $0x1c0] sm:$0xff]
        %v736 = vld [vmem:[#allocation8 + $0x1c8] sm:$0xff]
        %v737 = vld [vmem:[#allocation8 + $0x1d0] sm:$0xff]
        %v738 = vld [vmem:[#allocation8 + $0x1d8] sm:$0xff]
        %v739 = vld [vmem:[#allocation8 + $0x1e0] sm:$0xff]
        %v740 = vld [vmem:[#allocation8 + $0x1e8] sm:$0xff]
        %v741 = vld [vmem:[#allocation8 + $0x1f0] sm:$0xff]
        %v742 = vld [vmem:[#allocation8 + $0x1f8] sm:$0xff]
        %v743 = vld [vmem:[#allocation8 + $0x200] sm:$0xff]
        %v744 = vld [vmem:[#allocation8 + $0x208] sm:$0xff]
        %v745 = vld [vmem:[#allocation8 + $0x210] sm:$0xff]
        %v746 = vld [vmem:[#allocation8 + $0x218] sm:$0xff]
        %v747 = vld [vmem:[#allocation8 + $0x220] sm:$0xff]
        %v748 = vld [vmem:[#allocation8 + $0x228] sm:$0xff]
        %v749 = vld [vmem:[#allocation8 + $0x230] sm:$0xff]
        %v750 = vld [vmem:[#allocation8 + $0x238] sm:$0xff]
        %v751 = vld [vmem:[#allocation8 + $0x240] sm:$0xff]
        %v752 = vld [vmem:[#allocation8 + $0x248] sm:$0xff]
        %v753 = vld [vmem:[#allocation8 + $0x250] sm:$0xff]
        %v754 = vld [vmem:[#allocation8 + $0x258] sm:$0xff]
        %v755 = vld [vmem:[#allocation8 + $0x260] sm:$0xff]
        %v756 = vld [vmem:[#allocation8 + $0x268] sm:$0xff]
        %v757 = vld [vmem:[#allocation8 + $0x270] sm:$0xff]
        %v758 = vld [vmem:[#allocation8 + $0x278] sm:$0xff]
        %v759 = vld [vmem:[#allocation8 + $0x280] sm:$0xff]
        %v760 = vld [vmem:[#allocation8 + $0x288] sm:$0xff]
        %v761 = vld [vmem:[#allocation8 + $0x290] sm:$0xff]
        %v762 = vld [vmem:[#allocation8 + $0x298] sm:$0xff]
        %v763 = vld [vmem:[#allocation8 + $0x2a0] sm:$0xff]
        %v764 = vld [vmem:[#allocation8 + $0x2a8] sm:$0xff]
        %v765 = vld [vmem:[#allocation8 + $0x2b0] sm:$0xff]
        %v766 = vld [vmem:[#allocation8 + $0x2b8] sm:$0xff]
        %v767 = vld [vmem:[#allocation8 + $0x2c0] sm:$0xff]
        %v768 = vld [vmem:[#allocation8 + $0x2c8] sm:$0xff]
        %v769 = vld [vmem:[#allocation8 + $0x2d0] sm:$0xff]
        %v770 = vld [vmem:[#allocation8 + $0x2d8] sm:$0xff]
        %v771 = vld [vmem:[#allocation8 + $0x2e0] sm:$0xff]
        %v772 = vld [vmem:[#allocation8 + $0x2e8] sm:$0xff]
        %v773 = vld [vmem:[#allocation8 + $0x2f0] sm:$0xff]
        %v774 = vld [vmem:[#allocation8 + $0x2f8] sm:$0xff]
        %v775 = vld [vmem:[#allocation10] sm:$0x3f]
        %v777 = vperm.slane %v775, 0
        %v778 = vperm.slane %v775, 1
        %v779 = vperm.slane %v775, 2
        %v780 = vperm.slane %v775, 3
        %v781 = vperm.slane %v775, 4
        %v782 = vperm.slane %v775, 5
        %v885 = vunpack.c.l.b16 %v679
        %v886 = vunpack.c.h.b16 %v679
        %v887 = vunpack.c.l.b16 %v680
        %v888 = vunpack.c.h.b16 %v680
        %v889 = vunpack.c.l.b16 %v681
        %v890 = vunpack.c.h.b16 %v681
        %v891 = vunpack.c.l.b16 %v682
        %v892 = vunpack.c.h.b16 %v682
        %v893 = vunpack.c.l.b16 %v683
        %v894 = vunpack.c.h.b16 %v683
        %v895 = vunpack.c.l.b16 %v684
        %v896 = vunpack.c.h.b16 %v684
        %v897 = vunpack.c.l.b16 %v685
        %v898 = vunpack.c.h.b16 %v685
        %v899 = vunpack.c.l.b16 %v686
        %v900 = vunpack.c.h.b16 %v686
        %v901 = vunpack.c.l.b16 %v687
        %v902 = vunpack.c.h.b16 %v687
        %v903 = vunpack.c.l.b16 %v688
        %v904 = vunpack.c.h.b16 %v688
        %v905 = vunpack.c.l.b16 %v689
        %v906 = vunpack.c.h.b16 %v689
        %v907 = vunpack.c.l.b16 %v690
        %v908 = vunpack.c.h.b16 %v690
        %v909 = vunpack.c.l.b16 %v691
        %v910 = vunpack.c.h.b16 %v691
        %v911 = vunpack.c.l.b16 %v692
        %v912 = vunpack.c.h.b16 %v692
        %v913 = vunpack.c.l.b16 %v693
        %v914 = vunpack.c.h.b16 %v693
        %v915 = vunpack.c.l.b16 %v694
        %v916 = vunpack.c.h.b16 %v694
        %v917 = vunpack.c.l.b16 %v695
        %v918 = vunpack.c.h.b16 %v695
        %v919 = vunpack.c.l.b16 %v696
        %v920 = vunpack.c.h.b16 %v696
        %v921 = vunpack.c.l.b16 %v697
        %v922 = vunpack.c.h.b16 %v697
        %v923 = vunpack.c.l.b16 %v698
        %v924 = vunpack.c.h.b16 %v698
        %v925 = vunpack.c.l.b16 %v699
        %v926 = vunpack.c.h.b16 %v699
        %v927 = vunpack.c.l.b16 %v700
        %v928 = vunpack.c.h.b16 %v700
        %v929 = vunpack.c.l.b16 %v701
        %v930 = vunpack.c.h.b16 %v701
        %v931 = vunpack.c.l.b16 %v702
        %v932 = vunpack.c.h.b16 %v702
        %v933 = vunpack.c.l.b16 %v703
        %v934 = vunpack.c.h.b16 %v703
        %v935 = vunpack.c.l.b16 %v704
        %v936 = vunpack.c.h.b16 %v704
        %v937 = vunpack.c.l.b16 %v705
        %v938 = vunpack.c.h.b16 %v705
        %v939 = vunpack.c.l.b16 %v706
        %v940 = vunpack.c.h.b16 %v706
        %v941 = vunpack.c.l.b16 %v707
        %v942 = vunpack.c.h.b16 %v707
        %v943 = vunpack.c.l.b16 %v708
        %v944 = vunpack.c.h.b16 %v708
        %v945 = vunpack.c.l.b16 %v709
        %v946 = vunpack.c.h.b16 %v709
        %v947 = vunpack.c.l.b16 %v710
        %v948 = vunpack.c.h.b16 %v710
        %v949 = vunpack.c.l.b16 %v711
        %v950 = vunpack.c.h.b16 %v711
        %v951 = vunpack.c.l.b16 %v712
        %v952 = vunpack.c.h.b16 %v712
        %v953 = vunpack.c.l.b16 %v713
        %v954 = vunpack.c.h.b16 %v713
        %v955 = vunpack.c.l.b16 %v714
        %v956 = vunpack.c.h.b16 %v714
        %v957 = vunpack.c.l.b16 %v715
        %v958 = vunpack.c.h.b16 %v715
        %v959 = vunpack.c.l.b16 %v716
        %v960 = vunpack.c.h.b16 %v716
        %v961 = vunpack.c.l.b16 %v717
        %v962 = vunpack.c.h.b16 %v717
        %v963 = vunpack.c.l.b16 %v718
        %v964 = vunpack.c.h.b16 %v718
        %v965 = vunpack.c.l.b16 %v719
        %v966 = vunpack.c.h.b16 %v719
        %v967 = vunpack.c.l.b16 %v720
        %v968 = vunpack.c.h.b16 %v720
        %v969 = vunpack.c.l.b16 %v721
        %v970 = vunpack.c.h.b16 %v721
        %v971 = vunpack.c.l.b16 %v722
        %v972 = vunpack.c.h.b16 %v722
        %v973 = vunpack.c.l.b16 %v723
        %v974 = vunpack.c.h.b16 %v723
        %v975 = vunpack.c.l.b16 %v724
        %v976 = vunpack.c.h.b16 %v724
        %v977 = vunpack.c.l.b16 %v725
        %v978 = vunpack.c.h.b16 %v725
        %v979 = vunpack.c.l.b16 %v726
        %v980 = vunpack.c.h.b16 %v726
        %v981 = vunpack.c.l.b16 %v727
        %v982 = vunpack.c.h.b16 %v727
        %v983 = vunpack.c.l.b16 %v728
        %v984 = vunpack.c.h.b16 %v728
        %v985 = vunpack.c.l.b16 %v729
        %v986 = vunpack.c.h.b16 %v729
        %v987 = vunpack.c.l.b16 %v730
        %v988 = vunpack.c.h.b16 %v730
        %v989 = vunpack.c.l.b16 %v731
        %v990 = vunpack.c.h.b16 %v731
        %v991 = vunpack.c.l.b16 %v732
        %v992 = vunpack.c.h.b16 %v732
        %v993 = vunpack.c.l.b16 %v733
        %v994 = vunpack.c.h.b16 %v733
        %v995 = vunpack.c.l.b16 %v734
        %v996 = vunpack.c.h.b16 %v734
        %v997 = vunpack.c.l.b16 %v735
        %v998 = vunpack.c.h.b16 %v735
        %v999 = vunpack.c.l.b16 %v736
        %v1000 = vunpack.c.h.b16 %v736
        %v1001 = vunpack.c.l.b16 %v737
        %v1002 = vunpack.c.h.b16 %v737
        %v1003 = vunpack.c.l.b16 %v738
        %v1004 = vunpack.c.h.b16 %v738
        %v1005 = vunpack.c.l.b16 %v739
        %v1006 = vunpack.c.h.b16 %v739
        %v1007 = vunpack.c.l.b16 %v740
        %v1008 = vunpack.c.h.b16 %v740
        %v1009 = vunpack.c.l.b16 %v741
        %v1010 = vunpack.c.h.b16 %v741
        %v1011 = vunpack.c.l.b16 %v742
        %v1012 = vunpack.c.h.b16 %v742
        %v1013 = vunpack.c.l.b16 %v743
        %v1014 = vunpack.c.h.b16 %v743
        %v1015 = vunpack.c.l.b16 %v744
        %v1016 = vunpack.c.h.b16 %v744
        %v1017 = vunpack.c.l.b16 %v745
        %v1018 = vunpack.c.h.b16 %v745
        %v1019 = vunpack.c.l.b16 %v746
        %v1020 = vunpack.c.h.b16 %v746
        %v1021 = vunpack.c.l.b16 %v747
        %v1022 = vunpack.c.h.b16 %v747
        %v1023 = vunpack.c.l.b16 %v748
        %v1024 = vunpack.c.h.b16 %v748
        %v1025 = vunpack.c.l.b16 %v749
        %v1026 = vunpack.c.h.b16 %v749
        %v1027 = vunpack.c.l.b16 %v750
        %v1028 = vunpack.c.h.b16 %v750
        %v1029 = vunpack.c.l.b16 %v751
        %v1030 = vunpack.c.h.b16 %v751
        %v1031 = vunpack.c.l.b16 %v752
        %v1032 = vunpack.c.h.b16 %v752
        %v1033 = vunpack.c.l.b16 %v753
        %v1034 = vunpack.c.h.b16 %v753
        %v1035 = vunpack.c.l.b16 %v754
        %v1036 = vunpack.c.h.b16 %v754
        %v1037 = vunpack.c.l.b16 %v755
        %v1038 = vunpack.c.h.b16 %v755
        %v1039 = vunpack.c.l.b16 %v756
        %v1040 = vunpack.c.h.b16 %v756
        %v1041 = vunpack.c.l.b16 %v757
        %v1042 = vunpack.c.h.b16 %v757
        %v1043 = vunpack.c.l.b16 %v758
        %v1044 = vunpack.c.h.b16 %v758
        %v1045 = vunpack.c.l.b16 %v759
        %v1046 = vunpack.c.h.b16 %v759
        %v1047 = vunpack.c.l.b16 %v760
        %v1048 = vunpack.c.h.b16 %v760
        %v1049 = vunpack.c.l.b16 %v761
        %v1050 = vunpack.c.h.b16 %v761
        %v1051 = vunpack.c.l.b16 %v762
        %v1052 = vunpack.c.h.b16 %v762
        %v1053 = vunpack.c.l.b16 %v763
        %v1054 = vunpack.c.h.b16 %v763
        %v1055 = vunpack.c.l.b16 %v764
        %v1056 = vunpack.c.h.b16 %v764
        %v1057 = vunpack.c.l.b16 %v765
        %v1058 = vunpack.c.h.b16 %v765
        %v1059 = vunpack.c.l.b16 %v766
        %v1060 = vunpack.c.h.b16 %v766
        %v1061 = vunpack.c.l.b16 %v767
        %v1062 = vunpack.c.h.b16 %v767
        %v1063 = vunpack.c.l.b16 %v768
        %v1064 = vunpack.c.h.b16 %v768
        %v1065 = vunpack.c.l.b16 %v769
        %v1066 = vunpack.c.h.b16 %v769
        %v1067 = vunpack.c.l.b16 %v770
        %v1068 = vunpack.c.h.b16 %v770
        %v1069 = vunpack.c.l.b16 %v771
        %v1070 = vunpack.c.h.b16 %v771
        %v1071 = vunpack.c.l.b16 %v772
        %v1072 = vunpack.c.h.b16 %v772
        %v1073 = vunpack.c.l.b16 %v773
        %v1074 = vunpack.c.h.b16 %v773
        %v1075 = vunpack.c.l.b16 %v774
        %v1076 = vunpack.c.h.b16 %v774
        %v1077 = vpack.c.b16 %v891, %v885
        %v1078 = vpack.c.b16 %v892, %v886
        %v1079 = vpack.c.b16 %v893, %v887
        %v1080 = vpack.c.b16 %v894, %v888
        %v1081 = vpack.c.b16 %v895, %v889
        %v1082 = vpack.c.b16 %v896, %v890
        %v1083 = vpack.c.b16 %v903, %v897
        %v1084 = vpack.c.b16 %v904, %v898
        %v1085 = vpack.c.b16 %v905, %v899
        %v1086 = vpack.c.b16 %v906, %v900
        %v1087 = vpack.c.b16 %v907, %v901
        %v1088 = vpack.c.b16 %v908, %v902
        %v1089 = vpack.c.b16 %v915, %v909
        %v1090 = vpack.c.b16 %v916, %v910
        %v1091 = vpack.c.b16 %v917, %v911
        %v1092 = vpack.c.b16 %v918, %v912
        %v1093 = vpack.c.b16 %v919, %v913
        %v1094 = vpack.c.b16 %v920, %v914
        %v1095 = vpack.c.b16 %v927, %v921
        %v1096 = vpack.c.b16 %v928, %v922
        %v1097 = vpack.c.b16 %v929, %v923
        %v1098 = vpack.c.b16 %v930, %v924
        %v1099 = vpack.c.b16 %v931, %v925
        %v1100 = vpack.c.b16 %v932, %v926
        %v1101 = vpack.c.b16 %v939, %v933
        %v1102 = vpack.c.b16 %v940, %v934
        %v1103 = vpack.c.b16 %v941, %v935
        %v1104 = vpack.c.b16 %v942, %v936
        %v1105 = vpack.c.b16 %v943, %v937
        %v1106 = vpack.c.b16 %v944, %v938
        %v1107 = vpack.c.b16 %v951, %v945
        %v1108 = vpack.c.b16 %v952, %v946
        %v1109 = vpack.c.b16 %v953, %v947
        %v1110 = vpack.c.b16 %v954, %v948
        %v1111 = vpack.c.b16 %v955, %v949
        %v1112 = vpack.c.b16 %v956, %v950
        %v1113 = vpack.c.b16 %v963, %v957
        %v1114 = vpack.c.b16 %v964, %v958
        %v1115 = vpack.c.b16 %v965, %v959
        %v1116 = vpack.c.b16 %v966, %v960
        %v1117 = vpack.c.b16 %v967, %v961
        %v1118 = vpack.c.b16 %v968, %v962
        %v1119 = vpack.c.b16 %v975, %v969
        %v1120 = vpack.c.b16 %v976, %v970
        %v1121 = vpack.c.b16 %v977, %v971
        %v1122 = vpack.c.b16 %v978, %v972
        %v1123 = vpack.c.b16 %v979, %v973
        %v1124 = vpack.c.b16 %v980, %v974
        %v1125 = vpack.c.b16 %v987, %v981
        %v1126 = vpack.c.b16 %v988, %v982
        %v1127 = vpack.c.b16 %v989, %v983
        %v1128 = vpack.c.b16 %v990, %v984
        %v1129 = vpack.c.b16 %v991, %v985
        %v1130 = vpack.c.b16 %v992, %v986
        %v1131 = vpack.c.b16 %v999, %v993
        %v1132 = vpack.c.b16 %v1000, %v994
        %v1133 = vpack.c.b16 %v1001, %v995
        %v1134 = vpack.c.b16 %v1002, %v996
        %v1135 = vpack.c.b16 %v1003, %v997
        %v1136 = vpack.c.b16 %v1004, %v998
        %v1137 = vpack.c.b16 %v1011, %v1005
        %v1138 = vpack.c.b16 %v1012, %v1006
        %v1139 = vpack.c.b16 %v1013, %v1007
        %v1140 = vpack.c.b16 %v1014, %v1008
        %v1141 = vpack.c.b16 %v1015, %v1009
        %v1142 = vpack.c.b16 %v1016, %v1010
        %v1143 = vpack.c.b16 %v1023, %v1017
        %v1144 = vpack.c.b16 %v1024, %v1018
        %v1145 = vpack.c.b16 %v1025, %v1019
        %v1146 = vpack.c.b16 %v1026, %v1020
        %v1147 = vpack.c.b16 %v1027, %v1021
        %v1148 = vpack.c.b16 %v1028, %v1022
        %v1149 = vpack.c.b16 %v1035, %v1029
        %v1150 = vpack.c.b16 %v1036, %v1030
        %v1151 = vpack.c.b16 %v1037, %v1031
        %v1152 = vpack.c.b16 %v1038, %v1032
        %v1153 = vpack.c.b16 %v1039, %v1033
        %v1154 = vpack.c.b16 %v1040, %v1034
        %v1155 = vpack.c.b16 %v1047, %v1041
        %v1156 = vpack.c.b16 %v1048, %v1042
        %v1157 = vpack.c.b16 %v1049, %v1043
        %v1158 = vpack.c.b16 %v1050, %v1044
        %v1159 = vpack.c.b16 %v1051, %v1045
        %v1160 = vpack.c.b16 %v1052, %v1046
        %v1161 = vpack.c.b16 %v1059, %v1053
        %v1162 = vpack.c.b16 %v1060, %v1054
        %v1163 = vpack.c.b16 %v1061, %v1055
        %v1164 = vpack.c.b16 %v1062, %v1056
        %v1165 = vpack.c.b16 %v1063, %v1057
        %v1166 = vpack.c.b16 %v1064, %v1058
        %v1167 = vpack.c.b16 %v1071, %v1065
        %v1168 = vpack.c.b16 %v1072, %v1066
        %v1169 = vpack.c.b16 %v1073, %v1067
        %v1170 = vpack.c.b16 %v1074, %v1068
        %v1171 = vpack.c.b16 %v1075, %v1069
        %v1172 = vpack.c.b16 %v1076, %v1070
        %1269 = vmatpush.bf16.msra.mxu0 %v1119
        %1270 = vmatpush.bf16.msra.mxu0 %v1113
        %1271 = vmatpush.bf16.msra.mxu0 %v1107
        %1272 = vmatpush.bf16.msra.mxu0 %v1101
        %1273 = vmatpush.bf16.msra.mxu0 %v1095
        %1274 = vmatpush.bf16.msra.mxu0 %v1089
        %1275 = vmatpush.bf16.msra.mxu0 %v1083
        %1276 = vmatpush.bf16.msra.mxu0 %v1077
        %1277 = vmatmul.bf16.gmra.mxu0 %v671
        %v1278 = vpop.f32.mrf.mxu0
        %v1279 = vadd.f32 %v777, %v1278
        %v1280 = vpop.f32.mrf.mxu0
        %v1281 = vadd.f32 %v777, %v1280
        %1282 = vmatmul.bf16.gmra.mxu0 %v673
        %v1283 = vpop.f32.mrf.mxu0
        %v1284 = vadd.f32 %v777, %v1283
        %v1285 = vpop.f32.mrf.mxu0
        %v1286 = vadd.f32 %v777, %v1285
        %1287 = vmatmul.bf16.gmra.mxu0 %v675
        %v1288 = vpop.f32.mrf.mxu0
        %v1289 = vadd.f32 %v777, %v1288
        %v1290 = vpop.f32.mrf.mxu0
        %v1291 = vadd.f32 %v777, %v1290
        %1292 = vmatmul.bf16.gmra.mxu0 %v677
        %v1293 = vpop.f32.mrf.mxu0
        %v1294 = vadd.f32 %v777, %v1293
        %v1295 = vpop.f32.mrf.mxu0
        %v1296 = vadd.f32 %v777, %v1295
        %1297 = vdwg.mxu0
        %1298 = vmatpush.bf16.msra.mxu0 %v1167
        %1299 = vmatpush.bf16.msra.mxu0 %v1161
        %1300 = vmatpush.bf16.msra.mxu0 %v1155
        %1301 = vmatpush.bf16.msra.mxu0 %v1149
        %1302 = vmatpush.bf16.msra.mxu0 %v1143
        %1303 = vmatpush.bf16.msra.mxu0 %v1137
        %1304 = vmatpush.bf16.msra.mxu0 %v1131
        %1305 = vmatpush.bf16.msra.mxu0 %v1125
        %1306 = vmatmul.bf16.gmra.mxu0 %v672
        %v1307 = vpop.f32.mrf.mxu0
        %v1308 = vadd.f32 %v1279, %v1307
        %v1309 = vpop.f32.mrf.mxu0
        %v1310 = vadd.f32 %v1281, %v1309
        %1311 = vmatmul.bf16.gmra.mxu0 %v674
        %v1312 = vpop.f32.mrf.mxu0
        %v1313 = vadd.f32 %v1284, %v1312
        %v1314 = vpop.f32.mrf.mxu0
        %v1315 = vadd.f32 %v1286, %v1314
        %1316 = vmatmul.bf16.gmra.mxu0 %v676
        %v1317 = vpop.f32.mrf.mxu0
        %v1318 = vadd.f32 %v1289, %v1317
        %v1319 = vpop.f32.mrf.mxu0
        %v1320 = vadd.f32 %v1291, %v1319
        %1321 = vmatmul.bf16.gmra.mxu0 %v678
        %v1322 = vpop.f32.mrf.mxu0
        %v1323 = vadd.f32 %v1294, %v1322
        %v1324 = vpop.f32.mrf.mxu0
        %v1325 = vadd.f32 %v1296, %v1324
        %1326 = vdwg.mxu0
        %1327 = vmatpush.bf16.msra.mxu0 %v1120
        %1328 = vmatpush.bf16.msra.mxu0 %v1114
        %1329 = vmatpush.bf16.msra.mxu0 %v1108
        %1330 = vmatpush.bf16.msra.mxu0 %v1102
        %1331 = vmatpush.bf16.msra.mxu0 %v1096
        %1332 = vmatpush.bf16.msra.mxu0 %v1090
        %1333 = vmatpush.bf16.msra.mxu0 %v1084
        %1334 = vmatpush.bf16.msra.mxu0 %v1078
        %1335 = vmatmul.bf16.gmra.mxu0 %v671
        %v1336 = vpop.f32.mrf.mxu0
        %v1337 = vadd.f32 %v778, %v1336
        %v1338 = vpop.f32.mrf.mxu0
        %v1339 = vadd.f32 %v778, %v1338
        %1340 = vmatmul.bf16.gmra.mxu0 %v673
        %v1341 = vpop.f32.mrf.mxu0
        %v1342 = vadd.f32 %v778, %v1341
        %v1343 = vpop.f32.mrf.mxu0
        %v1344 = vadd.f32 %v778, %v1343
        %1345 = vmatmul.bf16.gmra.mxu0 %v675
        %v1346 = vpop.f32.mrf.mxu0
        %v1347 = vadd.f32 %v778, %v1346
        %v1348 = vpop.f32.mrf.mxu0
        %v1349 = vadd.f32 %v778, %v1348
        %1350 = vmatmul.bf16.gmra.mxu0 %v677
        %v1351 = vpop.f32.mrf.mxu0
        %v1352 = vadd.f32 %v778, %v1351
        %v1353 = vpop.f32.mrf.mxu0
        %v1354 = vadd.f32 %v778, %v1353
        %1355 = vdwg.mxu0
        %1356 = vmatpush.bf16.msra.mxu0 %v1168
        %1357 = vmatpush.bf16.msra.mxu0 %v1162
        %1358 = vmatpush.bf16.msra.mxu0 %v1156
        %1359 = vmatpush.bf16.msra.mxu0 %v1150
        %1360 = vmatpush.bf16.msra.mxu0 %v1144
        %1361 = vmatpush.bf16.msra.mxu0 %v1138
        %1362 = vmatpush.bf16.msra.mxu0 %v1132
        %1363 = vmatpush.bf16.msra.mxu0 %v1126
        %1364 = vmatmul.bf16.gmra.mxu0 %v672
        %v1365 = vpop.f32.mrf.mxu0
        %v1366 = vadd.f32 %v1337, %v1365
        %v1367 = vpop.f32.mrf.mxu0
        %v1368 = vadd.f32 %v1339, %v1367
        %1369 = vmatmul.bf16.gmra.mxu0 %v674
        %v1370 = vpop.f32.mrf.mxu0
        %v1371 = vadd.f32 %v1342, %v1370
        %v1372 = vpop.f32.mrf.mxu0
        %v1373 = vadd.f32 %v1344, %v1372
        %1374 = vmatmul.bf16.gmra.mxu0 %v676
        %v1375 = vpop.f32.mrf.mxu0
        %v1376 = vadd.f32 %v1347, %v1375
        %v1377 = vpop.f32.mrf.mxu0
        %v1378 = vadd.f32 %v1349, %v1377
        %1379 = vmatmul.bf16.gmra.mxu0 %v678
        %v1380 = vpop.f32.mrf.mxu0
        %v1381 = vadd.f32 %v1352, %v1380
        %v1382 = vpop.f32.mrf.mxu0
        %v1383 = vadd.f32 %v1354, %v1382
        %1384 = vdwg.mxu0
        %1385 = vmatpush.bf16.msra.mxu0 %v1121
        %1386 = vmatpush.bf16.msra.mxu0 %v1115
        %1387 = vmatpush.bf16.msra.mxu0 %v1109
        %1388 = vmatpush.bf16.msra.mxu0 %v1103
        %1389 = vmatpush.bf16.msra.mxu0 %v1097
        %1390 = vmatpush.bf16.msra.mxu0 %v1091
        %1391 = vmatpush.bf16.msra.mxu0 %v1085
        %1392 = vmatpush.bf16.msra.mxu0 %v1079
        %1393 = vmatmul.bf16.gmra.mxu0 %v671
        %v1394 = vpop.f32.mrf.mxu0
        %v1395 = vadd.f32 %v779, %v1394
        %v1396 = vpop.f32.mrf.mxu0
        %v1397 = vadd.f32 %v779, %v1396
        %1398 = vmatmul.bf16.gmra.mxu0 %v673
        %v1399 = vpop.f32.mrf.mxu0
        %v1400 = vadd.f32 %v779, %v1399
        %v1401 = vpop.f32.mrf.mxu0
        %v1402 = vadd.f32 %v779, %v1401
        %1403 = vmatmul.bf16.gmra.mxu0 %v675
        %v1404 = vpop.f32.mrf.mxu0
        %v1405 = vadd.f32 %v779, %v1404
        %v1406 = vpop.f32.mrf.mxu0
        %v1407 = vadd.f32 %v779, %v1406
        %1408 = vmatmul.bf16.gmra.mxu0 %v677
        %v1409 = vpop.f32.mrf.mxu0
        %v1410 = vadd.f32 %v779, %v1409
        %v1411 = vpop.f32.mrf.mxu0
        %v1412 = vadd.f32 %v779, %v1411
        %1413 = vdwg.mxu0
        %1414 = vmatpush.bf16.msra.mxu0 %v1169
        %1415 = vmatpush.bf16.msra.mxu0 %v1163
        %1416 = vmatpush.bf16.msra.mxu0 %v1157
        %1417 = vmatpush.bf16.msra.mxu0 %v1151
        %1418 = vmatpush.bf16.msra.mxu0 %v1145
        %1419 = vmatpush.bf16.msra.mxu0 %v1139
        %1420 = vmatpush.bf16.msra.mxu0 %v1133
        %1421 = vmatpush.bf16.msra.mxu0 %v1127
        %1422 = vmatmul.bf16.gmra.mxu0 %v672
        %v1423 = vpop.f32.mrf.mxu0
        %v1424 = vadd.f32 %v1395, %v1423
        %v1425 = vpop.f32.mrf.mxu0
        %v1426 = vadd.f32 %v1397, %v1425
        %1427 = vmatmul.bf16.gmra.mxu0 %v674
        %v1428 = vpop.f32.mrf.mxu0
        %v1429 = vadd.f32 %v1400, %v1428
        %v1430 = vpop.f32.mrf.mxu0
        %v1431 = vadd.f32 %v1402, %v1430
        %1432 = vmatmul.bf16.gmra.mxu0 %v676
        %v1433 = vpop.f32.mrf.mxu0
        %v1434 = vadd.f32 %v1405, %v1433
        %v1435 = vpop.f32.mrf.mxu0
        %v1436 = vadd.f32 %v1407, %v1435
        %1437 = vmatmul.bf16.gmra.mxu0 %v678
        %v1438 = vpop.f32.mrf.mxu0
        %v1439 = vadd.f32 %v1410, %v1438
        %v1440 = vpop.f32.mrf.mxu0
        %v1441 = vadd.f32 %v1412, %v1440
        %1442 = vdwg.mxu0
        %1443 = vmatpush.bf16.msra.mxu0 %v1122
        %1444 = vmatpush.bf16.msra.mxu0 %v1116
        %1445 = vmatpush.bf16.msra.mxu0 %v1110
        %1446 = vmatpush.bf16.msra.mxu0 %v1104
        %1447 = vmatpush.bf16.msra.mxu0 %v1098
        %1448 = vmatpush.bf16.msra.mxu0 %v1092
        %1449 = vmatpush.bf16.msra.mxu0 %v1086
        %1450 = vmatpush.bf16.msra.mxu0 %v1080
        %1451 = vmatmul.bf16.gmra.mxu0 %v671
        %v1452 = vpop.f32.mrf.mxu0
        %v1453 = vadd.f32 %v780, %v1452
        %v1454 = vpop.f32.mrf.mxu0
        %v1455 = vadd.f32 %v780, %v1454
        %1456 = vmatmul.bf16.gmra.mxu0 %v673
        %v1457 = vpop.f32.mrf.mxu0
        %v1458 = vadd.f32 %v780, %v1457
        %v1459 = vpop.f32.mrf.mxu0
        %v1460 = vadd.f32 %v780, %v1459
        %1461 = vmatmul.bf16.gmra.mxu0 %v675
        %v1462 = vpop.f32.mrf.mxu0
        %v1463 = vadd.f32 %v780, %v1462
        %v1464 = vpop.f32.mrf.mxu0
        %v1465 = vadd.f32 %v780, %v1464
        %1466 = vmatmul.bf16.gmra.mxu0 %v677
        %v1467 = vpop.f32.mrf.mxu0
        %v1468 = vadd.f32 %v780, %v1467
        %v1469 = vpop.f32.mrf.mxu0
        %v1470 = vadd.f32 %v780, %v1469
        %1471 = vdwg.mxu0
        %1472 = vmatpush.bf16.msra.mxu0 %v1170
        %1473 = vmatpush.bf16.msra.mxu0 %v1164
        %1474 = vmatpush.bf16.msra.mxu0 %v1158
        %1475 = vmatpush.bf16.msra.mxu0 %v1152
        %1476 = vmatpush.bf16.msra.mxu0 %v1146
        %1477 = vmatpush.bf16.msra.mxu0 %v1140
        %1478 = vmatpush.bf16.msra.mxu0 %v1134
        %1479 = vmatpush.bf16.msra.mxu0 %v1128
        %1480 = vmatmul.bf16.gmra.mxu0 %v672
        %v1481 = vpop.f32.mrf.mxu0
        %v1482 = vadd.f32 %v1453, %v1481
        %v1483 = vpop.f32.mrf.mxu0
        %v1484 = vadd.f32 %v1455, %v1483
        %1485 = vmatmul.bf16.gmra.mxu0 %v674
        %v1486 = vpop.f32.mrf.mxu0
        %v1487 = vadd.f32 %v1458, %v1486
        %v1488 = vpop.f32.mrf.mxu0
        %v1489 = vadd.f32 %v1460, %v1488
        %1490 = vmatmul.bf16.gmra.mxu0 %v676
        %v1491 = vpop.f32.mrf.mxu0
        %v1492 = vadd.f32 %v1463, %v1491
        %v1493 = vpop.f32.mrf.mxu0
        %v1494 = vadd.f32 %v1465, %v1493
        %1495 = vmatmul.bf16.gmra.mxu0 %v678
        %v1496 = vpop.f32.mrf.mxu0
        %v1497 = vadd.f32 %v1468, %v1496
        %v1498 = vpop.f32.mrf.mxu0
        %v1499 = vadd.f32 %v1470, %v1498
        %1500 = vdwg.mxu0
        %1501 = vmatpush.bf16.msra.mxu0 %v1123
        %1502 = vmatpush.bf16.msra.mxu0 %v1117
        %1503 = vmatpush.bf16.msra.mxu0 %v1111
        %1504 = vmatpush.bf16.msra.mxu0 %v1105
        %1505 = vmatpush.bf16.msra.mxu0 %v1099
        %1506 = vmatpush.bf16.msra.mxu0 %v1093
        %1507 = vmatpush.bf16.msra.mxu0 %v1087
        %1508 = vmatpush.bf16.msra.mxu0 %v1081
        %1509 = vmatmul.bf16.gmra.mxu0 %v671
        %v1510 = vpop.f32.mrf.mxu0
        %v1511 = vadd.f32 %v781, %v1510
        %v1512 = vpop.f32.mrf.mxu0
        %v1513 = vadd.f32 %v781, %v1512
        %1514 = vmatmul.bf16.gmra.mxu0 %v673
        %v1515 = vpop.f32.mrf.mxu0
        %v1516 = vadd.f32 %v781, %v1515
        %v1517 = vpop.f32.mrf.mxu0
        %v1518 = vadd.f32 %v781, %v1517
        %1519 = vmatmul.bf16.gmra.mxu0 %v675
        %v1520 = vpop.f32.mrf.mxu0
        %v1521 = vadd.f32 %v781, %v1520
        %v1522 = vpop.f32.mrf.mxu0
        %v1523 = vadd.f32 %v781, %v1522
        %1524 = vmatmul.bf16.gmra.mxu0 %v677
        %v1525 = vpop.f32.mrf.mxu0
        %v1526 = vadd.f32 %v781, %v1525
        %v1527 = vpop.f32.mrf.mxu0
        %v1528 = vadd.f32 %v781, %v1527
        %1529 = vdwg.mxu0
        %1530 = vmatpush.bf16.msra.mxu0 %v1171
        %1531 = vmatpush.bf16.msra.mxu0 %v1165
        %1532 = vmatpush.bf16.msra.mxu0 %v1159
        %1533 = vmatpush.bf16.msra.mxu0 %v1153
        %1534 = vmatpush.bf16.msra.mxu0 %v1147
        %1535 = vmatpush.bf16.msra.mxu0 %v1141
        %1536 = vmatpush.bf16.msra.mxu0 %v1135
        %1537 = vmatpush.bf16.msra.mxu0 %v1129
        %1538 = vmatmul.bf16.gmra.mxu0 %v672
        %v1539 = vpop.f32.mrf.mxu0
        %v1540 = vadd.f32 %v1511, %v1539
        %v1541 = vpop.f32.mrf.mxu0
        %v1542 = vadd.f32 %v1513, %v1541
        %1543 = vmatmul.bf16.gmra.mxu0 %v674
        %v1544 = vpop.f32.mrf.mxu0
        %v1545 = vadd.f32 %v1516, %v1544
        %v1546 = vpop.f32.mrf.mxu0
        %v1547 = vadd.f32 %v1518, %v1546
        %1548 = vmatmul.bf16.gmra.mxu0 %v676
        %v1549 = vpop.f32.mrf.mxu0
        %v1550 = vadd.f32 %v1521, %v1549
        %v1551 = vpop.f32.mrf.mxu0
        %v1552 = vadd.f32 %v1523, %v1551
        %1553 = vmatmul.bf16.gmra.mxu0 %v678
        %v1554 = vpop.f32.mrf.mxu0
        %v1555 = vadd.f32 %v1526, %v1554
        %v1556 = vpop.f32.mrf.mxu0
        %v1557 = vadd.f32 %v1528, %v1556
        %1558 = vdwg.mxu0
        %1559 = vmatpush.bf16.msra.mxu0 %v1124
        %1560 = vmatpush.bf16.msra.mxu0 %v1118
        %1561 = vmatpush.bf16.msra.mxu0 %v1112
        %1562 = vmatpush.bf16.msra.mxu0 %v1106
        %1563 = vmatpush.bf16.msra.mxu0 %v1100
        %1564 = vmatpush.bf16.msra.mxu0 %v1094
        %1565 = vmatpush.bf16.msra.mxu0 %v1088
        %1566 = vmatpush.bf16.msra.mxu0 %v1082
        %1567 = vmatmul.bf16.gmra.mxu0 %v671
        %v1568 = vpop.f32.mrf.mxu0
        %v1569 = vadd.f32 %v782, %v1568
        %v1570 = vpop.f32.mrf.mxu0
        %v1571 = vadd.f32 %v782, %v1570
        %1572 = vmatmul.bf16.gmra.mxu0 %v673
        %v1573 = vpop.f32.mrf.mxu0
        %v1574 = vadd.f32 %v782, %v1573
        %v1575 = vpop.f32.mrf.mxu0
        %v1576 = vadd.f32 %v782, %v1575
        %1577 = vmatmul.bf16.gmra.mxu0 %v675
        %v1578 = vpop.f32.mrf.mxu0
        %v1579 = vadd.f32 %v782, %v1578
        %v1580 = vpop.f32.mrf.mxu0
        %v1581 = vadd.f32 %v782, %v1580
        %1582 = vmatmul.bf16.gmra.mxu0 %v677
        %v1583 = vpop.f32.mrf.mxu0
        %v1584 = vadd.f32 %v782, %v1583
        %v1585 = vpop.f32.mrf.mxu0
        %v1586 = vadd.f32 %v782, %v1585
        %1587 = vdwg.mxu0
        %1588 = vmatpush.bf16.msra.mxu0 %v1172
        %1589 = vmatpush.bf16.msra.mxu0 %v1166
        %1590 = vmatpush.bf16.msra.mxu0 %v1160
        %1591 = vmatpush.bf16.msra.mxu0 %v1154
        %1592 = vmatpush.bf16.msra.mxu0 %v1148
        %1593 = vmatpush.bf16.msra.mxu0 %v1142
        %1594 = vmatpush.bf16.msra.mxu0 %v1136
        %1595 = vmatpush.bf16.msra.mxu0 %v1130
        %1596 = vmatmul.bf16.gmra.mxu0 %v672
        %v1597 = vpop.f32.mrf.mxu0
        %v1598 = vadd.f32 %v1569, %v1597
        %v1599 = vpop.f32.mrf.mxu0
        %v1600 = vadd.f32 %v1571, %v1599
        %1601 = vmatmul.bf16.gmra.mxu0 %v674
        %v1602 = vpop.f32.mrf.mxu0
        %v1603 = vadd.f32 %v1574, %v1602
        %v1604 = vpop.f32.mrf.mxu0
        %v1605 = vadd.f32 %v1576, %v1604
        %1606 = vmatmul.bf16.gmra.mxu0 %v676
        %v1607 = vpop.f32.mrf.mxu0
        %v1608 = vadd.f32 %v1579, %v1607
        %v1609 = vpop.f32.mrf.mxu0
        %v1610 = vadd.f32 %v1581, %v1609
        %1611 = vmatmul.bf16.gmra.mxu0 %v678
        %v1612 = vpop.f32.mrf.mxu0
        %v1613 = vadd.f32 %v1584, %v1612
        %v1614 = vpop.f32.mrf.mxu0
        %v1615 = vadd.f32 %v1586, %v1614
        %1616 = vdwg.mxu0
        %v1617 = vrot.slane %v1308, 4
        %vm1618 = vcmask 1047556
        %v1619 = vsel %vm1618, 0.0, %v1617
        %v1621 = vunpack.c.l.s4 1983009808
        %v1622 = vunpack.c.0.s8 %v1621
        %v1623 = vperm.slane %v1308, %v1622
        %v1625 = vunpack.c.l.s4 1983009808
        %v1626 = vunpack.c.0.s8 %v1625
        %v1627 = vperm.slane %v1619, %v1626
        %v1628 = vrot.slane %v1366, 4
        %v1629 = vsel %vm1618, 0.0, %v1628
        %v1631 = vunpack.c.l.s4 1983009808
        %v1632 = vunpack.c.0.s8 %v1631
        %v1633 = vperm.slane %v1366, %v1632
        %v1635 = vunpack.c.l.s4 1983009808
        %v1636 = vunpack.c.0.s8 %v1635
        %v1637 = vperm.slane %v1629, %v1636
        %v1638 = vrot.slane %v1633, 4
        %v1639 = vsel %vm1618, %v1638, %v1623
        %v1640 = vrot.slane %v1623, 4
        %v1641 = vsel %vm1618, %v1633, %v1640
        %v1643 = vunpack.c.l.s4 1934713408
        %v1644 = vunpack.c.0.s8 %v1643
        %v1645 = vperm.slane %v1639, %v1644
        %v1647 = vunpack.c.l.s4 1934713408
        %v1648 = vunpack.c.0.s8 %v1647
        %v1649 = vperm.slane %v1641, %v1648
        %v1650 = vrot.slane %v1637, 4
        %v1651 = vsel %vm1618, %v1650, %v1627
        %v1652 = vrot.slane %v1627, 4
        %v1653 = vsel %vm1618, %v1637, %v1652
        %v1655 = vunpack.c.l.s4 1934713408
        %v1656 = vunpack.c.0.s8 %v1655
        %v1657 = vperm.slane %v1651, %v1656
        %v1659 = vunpack.c.l.s4 1934713408
        %v1660 = vunpack.c.0.s8 %v1659
        %v1661 = vperm.slane %v1653, %v1660
        %v1662 = vrot.slane %v1645, 4
        %v1663 = vsel %vm1618, 0.0, %v1662
        %v1664 = vrot.slane %v1649, 4
        %v1665 = vsel %vm1618, 0.0, %v1664
        %v1666 = vrot.slane %v1657, 4
        %v1667 = vsel %vm1618, 0.0, %v1666
        %v1668 = vrot.slane %v1661, 4
        %v1669 = vsel %vm1618, 0.0, %v1668
        %v1670 = vrot.slane %v1310, 4
        %v1671 = vsel %vm1618, 0.0, %v1670
        %v1673 = vunpack.c.l.s4 1983009808
        %v1674 = vunpack.c.0.s8 %v1673
        %v1675 = vperm.slane %v1310, %v1674
        %v1677 = vunpack.c.l.s4 1983009808
        %v1678 = vunpack.c.0.s8 %v1677
        %v1679 = vperm.slane %v1671, %v1678
        %v1680 = vrot.slane %v1368, 4
        %v1681 = vsel %vm1618, 0.0, %v1680
        %v1683 = vunpack.c.l.s4 1983009808
        %v1684 = vunpack.c.0.s8 %v1683
        %v1685 = vperm.slane %v1368, %v1684
        %v1687 = vunpack.c.l.s4 1983009808
        %v1688 = vunpack.c.0.s8 %v1687
        %v1689 = vperm.slane %v1681, %v1688
        %v1690 = vrot.slane %v1685, 4
        %v1691 = vsel %vm1618, %v1690, %v1675
        %v1692 = vrot.slane %v1675, 4
        %v1693 = vsel %vm1618, %v1685, %v1692
        %v1695 = vunpack.c.l.s4 1934713408
        %v1696 = vunpack.c.0.s8 %v1695
        %v1697 = vperm.slane %v1691, %v1696
        %v1699 = vunpack.c.l.s4 1934713408
        %v1700 = vunpack.c.0.s8 %v1699
        %v1701 = vperm.slane %v1693, %v1700
        %v1702 = vrot.slane %v1689, 4
        %v1703 = vsel %vm1618, %v1702, %v1679
        %v1704 = vrot.slane %v1679, 4
        %v1705 = vsel %vm1618, %v1689, %v1704
        %v1707 = vunpack.c.l.s4 1934713408
        %v1708 = vunpack.c.0.s8 %v1707
        %v1709 = vperm.slane %v1703, %v1708
        %v1711 = vunpack.c.l.s4 1934713408
        %v1712 = vunpack.c.0.s8 %v1711
        %v1713 = vperm.slane %v1705, %v1712
        %v1714 = vrot.slane %v1697, 4
        %v1715 = vsel %vm1618, 0.0, %v1714
        %v1716 = vrot.slane %v1701, 4
        %v1717 = vsel %vm1618, 0.0, %v1716
        %v1718 = vrot.slane %v1709, 4
        %v1719 = vsel %vm1618, 0.0, %v1718
        %v1720 = vrot.slane %v1713, 4
        %v1721 = vsel %vm1618, 0.0, %v1720
        %v1722 = vrot.slane %v1313, 4
        %v1723 = vsel %vm1618, 0.0, %v1722
        %v1725 = vunpack.c.l.s4 1983009808
        %v1726 = vunpack.c.0.s8 %v1725
        %v1727 = vperm.slane %v1313, %v1726
        %v1729 = vunpack.c.l.s4 1983009808
        %v1730 = vunpack.c.0.s8 %v1729
        %v1731 = vperm.slane %v1723, %v1730
        %v1732 = vrot.slane %v1371, 4
        %v1733 = vsel %vm1618, 0.0, %v1732
        %v1735 = vunpack.c.l.s4 1983009808
        %v1736 = vunpack.c.0.s8 %v1735
        %v1737 = vperm.slane %v1371, %v1736
        %v1739 = vunpack.c.l.s4 1983009808
        %v1740 = vunpack.c.0.s8 %v1739
        %v1741 = vperm.slane %v1733, %v1740
        %v1742 = vrot.slane %v1737, 4
        %v1743 = vsel %vm1618, %v1742, %v1727
        %v1744 = vrot.slane %v1727, 4
        %v1745 = vsel %vm1618, %v1737, %v1744
        %v1747 = vunpack.c.l.s4 1934713408
        %v1748 = vunpack.c.0.s8 %v1747
        %v1749 = vperm.slane %v1743, %v1748
        %v1751 = vunpack.c.l.s4 1934713408
        %v1752 = vunpack.c.0.s8 %v1751
        %v1753 = vperm.slane %v1745, %v1752
        %v1754 = vrot.slane %v1741, 4
        %v1755 = vsel %vm1618, %v1754, %v1731
        %v1756 = vrot.slane %v1731, 4
        %v1757 = vsel %vm1618, %v1741, %v1756
        %v1759 = vunpack.c.l.s4 1934713408
        %v1760 = vunpack.c.0.s8 %v1759
        %v1761 = vperm.slane %v1755, %v1760
        %v1763 = vunpack.c.l.s4 1934713408
        %v1764 = vunpack.c.0.s8 %v1763
        %v1765 = vperm.slane %v1757, %v1764
        %v1766 = vrot.slane %v1749, 4
        %v1767 = vsel %vm1618, 0.0, %v1766
        %v1768 = vrot.slane %v1753, 4
        %v1769 = vsel %vm1618, 0.0, %v1768
        %v1770 = vrot.slane %v1761, 4
        %v1771 = vsel %vm1618, 0.0, %v1770
        %v1772 = vrot.slane %v1765, 4
        %v1773 = vsel %vm1618, 0.0, %v1772
        %v1774 = vrot.slane %v1315, 4
        %v1775 = vsel %vm1618, 0.0, %v1774
        %v1777 = vunpack.c.l.s4 1983009808
        %v1778 = vunpack.c.0.s8 %v1777
        %v1779 = vperm.slane %v1315, %v1778
        %v1781 = vunpack.c.l.s4 1983009808
        %v1782 = vunpack.c.0.s8 %v1781
        %v1783 = vperm.slane %v1775, %v1782
        %v1784 = vrot.slane %v1373, 4
        %v1785 = vsel %vm1618, 0.0, %v1784
        %v1787 = vunpack.c.l.s4 1983009808
        %v1788 = vunpack.c.0.s8 %v1787
        %v1789 = vperm.slane %v1373, %v1788
        %v1791 = vunpack.c.l.s4 1983009808
        %v1792 = vunpack.c.0.s8 %v1791
        %v1793 = vperm.slane %v1785, %v1792
        %v1794 = vrot.slane %v1789, 4
        %v1795 = vsel %vm1618, %v1794, %v1779
        %v1796 = vrot.slane %v1779, 4
        %v1797 = vsel %vm1618, %v1789, %v1796
        %v1799 = vunpack.c.l.s4 1934713408
        %v1800 = vunpack.c.0.s8 %v1799
        %v1801 = vperm.slane %v1795, %v1800
        %v1803 = vunpack.c.l.s4 1934713408
        %v1804 = vunpack.c.0.s8 %v1803
        %v1805 = vperm.slane %v1797, %v1804
        %v1806 = vrot.slane %v1793, 4
        %v1807 = vsel %vm1618, %v1806, %v1783
        %v1808 = vrot.slane %v1783, 4
        %v1809 = vsel %vm1618, %v1793, %v1808
        %v1811 = vunpack.c.l.s4 1934713408
        %v1812 = vunpack.c.0.s8 %v1811
        %v1813 = vperm.slane %v1807, %v1812
        %v1815 = vunpack.c.l.s4 1934713408
        %v1816 = vunpack.c.0.s8 %v1815
        %v1817 = vperm.slane %v1809, %v1816
        %v1818 = vrot.slane %v1801, 4
        %v1819 = vsel %vm1618, 0.0, %v1818
        %v1820 = vrot.slane %v1805, 4
        %v1821 = vsel %vm1618, 0.0, %v1820
        %v1822 = vrot.slane %v1813, 4
        %v1823 = vsel %vm1618, 0.0, %v1822
        %v1824 = vrot.slane %v1817, 4
        %v1825 = vsel %vm1618, 0.0, %v1824
        %v1826 = vrot.slane %v1318, 4
        %v1827 = vsel %vm1618, 0.0, %v1826
        %v1829 = vunpack.c.l.s4 1983009808
        %v1830 = vunpack.c.0.s8 %v1829
        %v1831 = vperm.slane %v1318, %v1830
        %v1833 = vunpack.c.l.s4 1983009808
        %v1834 = vunpack.c.0.s8 %v1833
        %v1835 = vperm.slane %v1827, %v1834
        %v1836 = vrot.slane %v1376, 4
        %v1837 = vsel %vm1618, 0.0, %v1836
        %v1839 = vunpack.c.l.s4 1983009808
        %v1840 = vunpack.c.0.s8 %v1839
        %v1841 = vperm.slane %v1376, %v1840
        %v1843 = vunpack.c.l.s4 1983009808
        %v1844 = vunpack.c.0.s8 %v1843
        %v1845 = vperm.slane %v1837, %v1844
        %v1846 = vrot.slane %v1841, 4
        %v1847 = vsel %vm1618, %v1846, %v1831
        %v1848 = vrot.slane %v1831, 4
        %v1849 = vsel %vm1618, %v1841, %v1848
        %v1851 = vunpack.c.l.s4 1934713408
        %v1852 = vunpack.c.0.s8 %v1851
        %v1853 = vperm.slane %v1847, %v1852
        %v1855 = vunpack.c.l.s4 1934713408
        %v1856 = vunpack.c.0.s8 %v1855
        %v1857 = vperm.slane %v1849, %v1856
        %v1858 = vrot.slane %v1845, 4
        %v1859 = vsel %vm1618, %v1858, %v1835
        %v1860 = vrot.slane %v1835, 4
        %v1861 = vsel %vm1618, %v1845, %v1860
        %v1863 = vunpack.c.l.s4 1934713408
        %v1864 = vunpack.c.0.s8 %v1863
        %v1865 = vperm.slane %v1859, %v1864
        %v1867 = vunpack.c.l.s4 1934713408
        %v1868 = vunpack.c.0.s8 %v1867
        %v1869 = vperm.slane %v1861, %v1868
        %v1870 = vrot.slane %v1853, 4
        %v1871 = vsel %vm1618, 0.0, %v1870
        %v1872 = vrot.slane %v1857, 4
        %v1873 = vsel %vm1618, 0.0, %v1872
        %v1874 = vrot.slane %v1865, 4
        %v1875 = vsel %vm1618, 0.0, %v1874
        %v1876 = vrot.slane %v1869, 4
        %v1877 = vsel %vm1618, 0.0, %v1876
        %v1878 = vrot.slane %v1320, 4
        %v1879 = vsel %vm1618, 0.0, %v1878
        %v1881 = vunpack.c.l.s4 1983009808
        %v1882 = vunpack.c.0.s8 %v1881
        %v1883 = vperm.slane %v1320, %v1882
        %v1885 = vunpack.c.l.s4 1983009808
        %v1886 = vunpack.c.0.s8 %v1885
        %v1887 = vperm.slane %v1879, %v1886
        %v1888 = vrot.slane %v1378, 4
        %v1889 = vsel %vm1618, 0.0, %v1888
        %v1891 = vunpack.c.l.s4 1983009808
        %v1892 = vunpack.c.0.s8 %v1891
        %v1893 = vperm.slane %v1378, %v1892
        %v1895 = vunpack.c.l.s4 1983009808
        %v1896 = vunpack.c.0.s8 %v1895
        %v1897 = vperm.slane %v1889, %v1896
        %v1898 = vrot.slane %v1893, 4
        %v1899 = vsel %vm1618, %v1898, %v1883
        %v1900 = vrot.slane %v1883, 4
        %v1901 = vsel %vm1618, %v1893, %v1900
        %v1903 = vunpack.c.l.s4 1934713408
        %v1904 = vunpack.c.0.s8 %v1903
        %v1905 = vperm.slane %v1899, %v1904
        %v1907 = vunpack.c.l.s4 1934713408
        %v1908 = vunpack.c.0.s8 %v1907
        %v1909 = vperm.slane %v1901, %v1908
        %v1910 = vrot.slane %v1897, 4
        %v1911 = vsel %vm1618, %v1910, %v1887
        %v1912 = vrot.slane %v1887, 4
        %v1913 = vsel %vm1618, %v1897, %v1912
        %v1915 = vunpack.c.l.s4 1934713408
        %v1916 = vunpack.c.0.s8 %v1915
        %v1917 = vperm.slane %v1911, %v1916
        %v1919 = vunpack.c.l.s4 1934713408
        %v1920 = vunpack.c.0.s8 %v1919
        %v1921 = vperm.slane %v1913, %v1920
        %v1922 = vrot.slane %v1905, 4
        %v1923 = vsel %vm1618, 0.0, %v1922
        %v1924 = vrot.slane %v1909, 4
        %v1925 = vsel %vm1618, 0.0, %v1924
        %v1926 = vrot.slane %v1917, 4
        %v1927 = vsel %vm1618, 0.0, %v1926
        %v1928 = vrot.slane %v1921, 4
        %v1929 = vsel %vm1618, 0.0, %v1928
        %v1930 = vrot.slane %v1323, 4
        %v1931 = vsel %vm1618, 0.0, %v1930
        %v1933 = vunpack.c.l.s4 1983009808
        %v1934 = vunpack.c.0.s8 %v1933
        %v1935 = vperm.slane %v1323, %v1934
        %v1937 = vunpack.c.l.s4 1983009808
        %v1938 = vunpack.c.0.s8 %v1937
        %v1939 = vperm.slane %v1931, %v1938
        %v1940 = vrot.slane %v1381, 4
        %v1941 = vsel %vm1618, 0.0, %v1940
        %v1943 = vunpack.c.l.s4 1983009808
        %v1944 = vunpack.c.0.s8 %v1943
        %v1945 = vperm.slane %v1381, %v1944
        %v1947 = vunpack.c.l.s4 1983009808
        %v1948 = vunpack.c.0.s8 %v1947
        %v1949 = vperm.slane %v1941, %v1948
        %v1950 = vrot.slane %v1945, 4
        %v1951 = vsel %vm1618, %v1950, %v1935
        %v1952 = vrot.slane %v1935, 4
        %v1953 = vsel %vm1618, %v1945, %v1952
        %v1955 = vunpack.c.l.s4 1934713408
        %v1956 = vunpack.c.0.s8 %v1955
        %v1957 = vperm.slane %v1951, %v1956
        %v1959 = vunpack.c.l.s4 1934713408
        %v1960 = vunpack.c.0.s8 %v1959
        %v1961 = vperm.slane %v1953, %v1960
        %v1962 = vrot.slane %v1949, 4
        %v1963 = vsel %vm1618, %v1962, %v1939
        %v1964 = vrot.slane %v1939, 4
        %v1965 = vsel %vm1618, %v1949, %v1964
        %v1967 = vunpack.c.l.s4 1934713408
        %v1968 = vunpack.c.0.s8 %v1967
        %v1969 = vperm.slane %v1963, %v1968
        %v1971 = vunpack.c.l.s4 1934713408
        %v1972 = vunpack.c.0.s8 %v1971
        %v1973 = vperm.slane %v1965, %v1972
        %v1974 = vrot.slane %v1957, 4
        %v1975 = vsel %vm1618, 0.0, %v1974
        %v1976 = vrot.slane %v1961, 4
        %v1977 = vsel %vm1618, 0.0, %v1976
        %v1978 = vrot.slane %v1969, 4
        %v1979 = vsel %vm1618, 0.0, %v1978
        %v1980 = vrot.slane %v1973, 4
        %v1981 = vsel %vm1618, 0.0, %v1980
        %v1982 = vrot.slane %v1325, 4
        %v1983 = vsel %vm1618, 0.0, %v1982
        %v1985 = vunpack.c.l.s4 1983009808
        %v1986 = vunpack.c.0.s8 %v1985
        %v1987 = vperm.slane %v1325, %v1986
        %v1989 = vunpack.c.l.s4 1983009808
        %v1990 = vunpack.c.0.s8 %v1989
        %v1991 = vperm.slane %v1983, %v1990
        %v1992 = vrot.slane %v1383, 4
        %v1993 = vsel %vm1618, 0.0, %v1992
        %v1995 = vunpack.c.l.s4 1983009808
        %v1996 = vunpack.c.0.s8 %v1995
        %v1997 = vperm.slane %v1383, %v1996
        %v1999 = vunpack.c.l.s4 1983009808
        %v2000 = vunpack.c.0.s8 %v1999
        %v2001 = vperm.slane %v1993, %v2000
        %v2002 = vrot.slane %v1997, 4
        %v2003 = vsel %vm1618, %v2002, %v1987
        %v2004 = vrot.slane %v1987, 4
        %v2005 = vsel %vm1618, %v1997, %v2004
        %v2007 = vunpack.c.l.s4 1934713408
        %v2008 = vunpack.c.0.s8 %v2007
        %v2009 = vperm.slane %v2003, %v2008
        %v2011 = vunpack.c.l.s4 1934713408
        %v2012 = vunpack.c.0.s8 %v2011
        %v2013 = vperm.slane %v2005, %v2012
        %v2014 = vrot.slane %v2001, 4
        %v2015 = vsel %vm1618, %v2014, %v1991
        %v2016 = vrot.slane %v1991, 4
        %v2017 = vsel %vm1618, %v2001, %v2016
        %v2019 = vunpack.c.l.s4 1934713408
        %v2020 = vunpack.c.0.s8 %v2019
        %v2021 = vperm.slane %v2015, %v2020
        %v2023 = vunpack.c.l.s4 1934713408
        %v2024 = vunpack.c.0.s8 %v2023
        %v2025 = vperm.slane %v2017, %v2024
        %v2026 = vrot.slane %v2009, 4
        %v2027 = vsel %vm1618, 0.0, %v2026
        %v2028 = vrot.slane %v2013, 4
        %v2029 = vsel %vm1618, 0.0, %v2028
        %v2030 = vrot.slane %v2021, 4
        %v2031 = vsel %vm1618, 0.0, %v2030
        %v2032 = vrot.slane %v2025, 4
        %v2033 = vsel %vm1618, 0.0, %v2032
        %v2034 = vsel %vm1618, %v1664, %v1645
        %v2036 = vunpack.c.l.s4 1983009808
        %v2037 = vunpack.c.0.s8 %v2036
        %v2038 = vperm.slane %v2034, %v2037
        %v2039 = vrot.slane %v1665, 4
        %v2040 = vsel %vm1618, %v2039, %v1663
        %v2042 = vunpack.c.l.s4 1983009808
        %v2043 = vunpack.c.0.s8 %v2042
        %v2044 = vperm.slane %v2040, %v2043
        %v2045 = vsel %vm1618, %v1668, %v1657
        %v2047 = vunpack.c.l.s4 1983009808
        %v2048 = vunpack.c.0.s8 %v2047
        %v2049 = vperm.slane %v2045, %v2048
        %v2050 = vrot.slane %v1669, 4
        %v2051 = vsel %vm1618, %v2050, %v1667
        %v2053 = vunpack.c.l.s4 1983009808
        %v2054 = vunpack.c.0.s8 %v2053
        %v2055 = vperm.slane %v2051, %v2054
        %v2056 = vrot.slane %v2044, 4
        %v2057 = vsel %vm1618, %v2056, %v2038
        %v2059 = vunpack.c.l.s4 1934713408
        %v2060 = vunpack.c.0.s8 %v2059
        %v2061 = vperm.slane %v2057, %v2060
        %v2062 = vrot.slane %v2055, 4
        %v2063 = vsel %vm1618, %v2062, %v2049
        %v2065 = vunpack.c.l.s4 1934713408
        %v2066 = vunpack.c.0.s8 %v2065
        %v2067 = vperm.slane %v2063, %v2066
        %v2068 = vrot.slane %v2067, 4
        %v2069 = vsel %vm1618, %v2068, %v2061
        %v2070 = vrot.slane %v2061, 4
        %v2071 = vsel %vm1618, %v2067, %v2070
        %v2072 = vsel %vm1618, %v1716, %v1697
        %v2074 = vunpack.c.l.s4 1983009808
        %v2075 = vunpack.c.0.s8 %v2074
        %v2076 = vperm.slane %v2072, %v2075
        %v2077 = vrot.slane %v1717, 4
        %v2078 = vsel %vm1618, %v2077, %v1715
        %v2080 = vunpack.c.l.s4 1983009808
        %v2081 = vunpack.c.0.s8 %v2080
        %v2082 = vperm.slane %v2078, %v2081
        %v2083 = vsel %vm1618, %v1720, %v1709
        %v2085 = vunpack.c.l.s4 1983009808
        %v2086 = vunpack.c.0.s8 %v2085
        %v2087 = vperm.slane %v2083, %v2086
        %v2088 = vrot.slane %v1721, 4
        %v2089 = vsel %vm1618, %v2088, %v1719
        %v2091 = vunpack.c.l.s4 1983009808
        %v2092 = vunpack.c.0.s8 %v2091
        %v2093 = vperm.slane %v2089, %v2092
        %v2094 = vrot.slane %v2082, 4
        %v2095 = vsel %vm1618, %v2094, %v2076
        %v2097 = vunpack.c.l.s4 1934713408
        %v2098 = vunpack.c.0.s8 %v2097
        %v2099 = vperm.slane %v2095, %v2098
        %v2100 = vrot.slane %v2093, 4
        %v2101 = vsel %vm1618, %v2100, %v2087
        %v2103 = vunpack.c.l.s4 1934713408
        %v2104 = vunpack.c.0.s8 %v2103
        %v2105 = vperm.slane %v2101, %v2104
        %v2106 = vrot.slane %v2105, 4
        %v2107 = vsel %vm1618, %v2106, %v2099
        %v2108 = vrot.slane %v2099, 4
        %v2109 = vsel %vm1618, %v2105, %v2108
        %v2110 = vsel %vm1618, %v1768, %v1749
        %v2112 = vunpack.c.l.s4 1983009808
        %v2113 = vunpack.c.0.s8 %v2112
        %v2114 = vperm.slane %v2110, %v2113
        %v2115 = vrot.slane %v1769, 4
        %v2116 = vsel %vm1618, %v2115, %v1767
        %v2118 = vunpack.c.l.s4 1983009808
        %v2119 = vunpack.c.0.s8 %v2118
        %v2120 = vperm.slane %v2116, %v2119
        %v2121 = vsel %vm1618, %v1772, %v1761
        %v2123 = vunpack.c.l.s4 1983009808
        %v2124 = vunpack.c.0.s8 %v2123
        %v2125 = vperm.slane %v2121, %v2124
        %v2126 = vrot.slane %v1773, 4
        %v2127 = vsel %vm1618, %v2126, %v1771
        %v2129 = vunpack.c.l.s4 1983009808
        %v2130 = vunpack.c.0.s8 %v2129
        %v2131 = vperm.slane %v2127, %v2130
        %v2132 = vrot.slane %v2120, 4
        %v2133 = vsel %vm1618, %v2132, %v2114
        %v2135 = vunpack.c.l.s4 1934713408
        %v2136 = vunpack.c.0.s8 %v2135
        %v2137 = vperm.slane %v2133, %v2136
        %v2138 = vrot.slane %v2131, 4
        %v2139 = vsel %vm1618, %v2138, %v2125
        %v2141 = vunpack.c.l.s4 1934713408
        %v2142 = vunpack.c.0.s8 %v2141
        %v2143 = vperm.slane %v2139, %v2142
        %v2144 = vrot.slane %v2143, 4
        %v2145 = vsel %vm1618, %v2144, %v2137
        %v2146 = vrot.slane %v2137, 4
        %v2147 = vsel %vm1618, %v2143, %v2146
        %v2148 = vsel %vm1618, %v1820, %v1801
        %v2150 = vunpack.c.l.s4 1983009808
        %v2151 = vunpack.c.0.s8 %v2150
        %v2152 = vperm.slane %v2148, %v2151
        %v2153 = vrot.slane %v1821, 4
        %v2154 = vsel %vm1618, %v2153, %v1819
        %v2156 = vunpack.c.l.s4 1983009808
        %v2157 = vunpack.c.0.s8 %v2156
        %v2158 = vperm.slane %v2154, %v2157
        %v2159 = vsel %vm1618, %v1824, %v1813
        %v2161 = vunpack.c.l.s4 1983009808
        %v2162 = vunpack.c.0.s8 %v2161
        %v2163 = vperm.slane %v2159, %v2162
        %v2164 = vrot.slane %v1825, 4
        %v2165 = vsel %vm1618, %v2164, %v1823
        %v2167 = vunpack.c.l.s4 1983009808
        %v2168 = vunpack.c.0.s8 %v2167
        %v2169 = vperm.slane %v2165, %v2168
        %v2170 = vrot.slane %v2158, 4
        %v2171 = vsel %vm1618, %v2170, %v2152
        %v2173 = vunpack.c.l.s4 1934713408
        %v2174 = vunpack.c.0.s8 %v2173
        %v2175 = vperm.slane %v2171, %v2174
        %v2176 = vrot.slane %v2169, 4
        %v2177 = vsel %vm1618, %v2176, %v2163
        %v2179 = vunpack.c.l.s4 1934713408
        %v2180 = vunpack.c.0.s8 %v2179
        %v2181 = vperm.slane %v2177, %v2180
        %v2182 = vrot.slane %v2181, 4
        %v2183 = vsel %vm1618, %v2182, %v2175
        %v2184 = vrot.slane %v2175, 4
        %v2185 = vsel %vm1618, %v2181, %v2184
        %v2186 = vsel %vm1618, %v1872, %v1853
        %v2188 = vunpack.c.l.s4 1983009808
        %v2189 = vunpack.c.0.s8 %v2188
        %v2190 = vperm.slane %v2186, %v2189
        %v2191 = vrot.slane %v1873, 4
        %v2192 = vsel %vm1618, %v2191, %v1871
        %v2194 = vunpack.c.l.s4 1983009808
        %v2195 = vunpack.c.0.s8 %v2194
        %v2196 = vperm.slane %v2192, %v2195
        %v2197 = vsel %vm1618, %v1876, %v1865
        %v2199 = vunpack.c.l.s4 1983009808
        %v2200 = vunpack.c.0.s8 %v2199
        %v2201 = vperm.slane %v2197, %v2200
        %v2202 = vrot.slane %v1877, 4
        %v2203 = vsel %vm1618, %v2202, %v1875
        %v2205 = vunpack.c.l.s4 1983009808
        %v2206 = vunpack.c.0.s8 %v2205
        %v2207 = vperm.slane %v2203, %v2206
        %v2208 = vrot.slane %v2196, 4
        %v2209 = vsel %vm1618, %v2208, %v2190
        %v2211 = vunpack.c.l.s4 1934713408
        %v2212 = vunpack.c.0.s8 %v2211
        %v2213 = vperm.slane %v2209, %v2212
        %v2214 = vrot.slane %v2207, 4
        %v2215 = vsel %vm1618, %v2214, %v2201
        %v2217 = vunpack.c.l.s4 1934713408
        %v2218 = vunpack.c.0.s8 %v2217
        %v2219 = vperm.slane %v2215, %v2218
        %v2220 = vrot.slane %v2219, 4
        %v2221 = vsel %vm1618, %v2220, %v2213
        %v2222 = vrot.slane %v2213, 4
        %v2223 = vsel %vm1618, %v2219, %v2222
        %v2224 = vsel %vm1618, %v1924, %v1905
        %v2226 = vunpack.c.l.s4 1983009808
        %v2227 = vunpack.c.0.s8 %v2226
        %v2228 = vperm.slane %v2224, %v2227
        %v2229 = vrot.slane %v1925, 4
        %v2230 = vsel %vm1618, %v2229, %v1923
        %v2232 = vunpack.c.l.s4 1983009808
        %v2233 = vunpack.c.0.s8 %v2232
        %v2234 = vperm.slane %v2230, %v2233
        %v2235 = vsel %vm1618, %v1928, %v1917
        %v2237 = vunpack.c.l.s4 1983009808
        %v2238 = vunpack.c.0.s8 %v2237
        %v2239 = vperm.slane %v2235, %v2238
        %v2240 = vrot.slane %v1929, 4
        %v2241 = vsel %vm1618, %v2240, %v1927
        %v2243 = vunpack.c.l.s4 1983009808
        %v2244 = vunpack.c.0.s8 %v2243
        %v2245 = vperm.slane %v2241, %v2244
        %v2246 = vrot.slane %v2234, 4
        %v2247 = vsel %vm1618, %v2246, %v2228
        %v2249 = vunpack.c.l.s4 1934713408
        %v2250 = vunpack.c.0.s8 %v2249
        %v2251 = vperm.slane %v2247, %v2250
        %v2252 = vrot.slane %v2245, 4
        %v2253 = vsel %vm1618, %v2252, %v2239
        %v2255 = vunpack.c.l.s4 1934713408
        %v2256 = vunpack.c.0.s8 %v2255
        %v2257 = vperm.slane %v2253, %v2256
        %v2258 = vrot.slane %v2257, 4
        %v2259 = vsel %vm1618, %v2258, %v2251
        %v2260 = vrot.slane %v2251, 4
        %v2261 = vsel %vm1618, %v2257, %v2260
        %v2262 = vsel %vm1618, %v1976, %v1957
        %v2264 = vunpack.c.l.s4 1983009808
        %v2265 = vunpack.c.0.s8 %v2264
        %v2266 = vperm.slane %v2262, %v2265
        %v2267 = vrot.slane %v1977, 4
        %v2268 = vsel %vm1618, %v2267, %v1975
        %v2270 = vunpack.c.l.s4 1983009808
        %v2271 = vunpack.c.0.s8 %v2270
        %v2272 = vperm.slane %v2268, %v2271
        %v2273 = vsel %vm1618, %v1980, %v1969
        %v2275 = vunpack.c.l.s4 1983009808
        %v2276 = vunpack.c.0.s8 %v2275
        %v2277 = vperm.slane %v2273, %v2276
        %v2278 = vrot.slane %v1981, 4
        %v2279 = vsel %vm1618, %v2278, %v1979
        %v2281 = vunpack.c.l.s4 1983009808
        %v2282 = vunpack.c.0.s8 %v2281
        %v2283 = vperm.slane %v2279, %v2282
        %v2284 = vrot.slane %v2272, 4
        %v2285 = vsel %vm1618, %v2284, %v2266
        %v2287 = vunpack.c.l.s4 1934713408
        %v2288 = vunpack.c.0.s8 %v2287
        %v2289 = vperm.slane %v2285, %v2288
        %v2290 = vrot.slane %v2283, 4
        %v2291 = vsel %vm1618, %v2290, %v2277
        %v2293 = vunpack.c.l.s4 1934713408
        %v2294 = vunpack.c.0.s8 %v2293
        %v2295 = vperm.slane %v2291, %v2294
        %v2296 = vrot.slane %v2295, 4
        %v2297 = vsel %vm1618, %v2296, %v2289
        %v2298 = vrot.slane %v2289, 4
        %v2299 = vsel %vm1618, %v2295, %v2298
        %v2300 = vsel %vm1618, %v2028, %v2009
        %v2302 = vunpack.c.l.s4 1983009808
        %v2303 = vunpack.c.0.s8 %v2302
        %v2304 = vperm.slane %v2300, %v2303
        %v2305 = vrot.slane %v2029, 4
        %v2306 = vsel %vm1618, %v2305, %v2027
        %v2308 = vunpack.c.l.s4 1983009808
        %v2309 = vunpack.c.0.s8 %v2308
        %v2310 = vperm.slane %v2306, %v2309
        %v2311 = vsel %vm1618, %v2032, %v2021
        %v2313 = vunpack.c.l.s4 1983009808
        %v2314 = vunpack.c.0.s8 %v2313
        %v2315 = vperm.slane %v2311, %v2314
        %v2316 = vrot.slane %v2033, 4
        %v2317 = vsel %vm1618, %v2316, %v2031
        %v2319 = vunpack.c.l.s4 1983009808
        %v2320 = vunpack.c.0.s8 %v2319
        %v2321 = vperm.slane %v2317, %v2320
        %v2322 = vrot.slane %v2310, 4
        %v2323 = vsel %vm1618, %v2322, %v2304
        %v2325 = vunpack.c.l.s4 1934713408
        %v2326 = vunpack.c.0.s8 %v2325
        %v2327 = vperm.slane %v2323, %v2326
        %v2328 = vrot.slane %v2321, 4
        %v2329 = vsel %vm1618, %v2328, %v2315
        %v2331 = vunpack.c.l.s4 1934713408
        %v2332 = vunpack.c.0.s8 %v2331
        %v2333 = vperm.slane %v2329, %v2332
        %v2334 = vrot.slane %v2333, 4
        %v2335 = vsel %vm1618, %v2334, %v2327
        %v2336 = vrot.slane %v2327, 4
        %v2337 = vsel %vm1618, %v2333, %v2336
        %v2338 = vpack.c.bf16 %v2069, %v2069
        %v2339 = vpack.c.bf16 %v2107, %v2107
        %v2340 = vpack.c.bf16 %v2145, %v2145
        %v2341 = vpack.c.bf16 %v2183, %v2183
        %v2342 = vpack.c.bf16 %v2221, %v2221
        %v2343 = vpack.c.bf16 %v2259, %v2259
        %v2344 = vpack.c.bf16 %v2297, %v2297
        %v2345 = vpack.c.bf16 %v2335, %v2335
        %v2346 = vpack.c.bf16 %v2071, %v2071
        %v2347 = vpack.c.bf16 %v2109, %v2109
        %v2348 = vpack.c.bf16 %v2147, %v2147
        %v2349 = vpack.c.bf16 %v2185, %v2185
        %v2350 = vpack.c.bf16 %v2223, %v2223
        %v2351 = vpack.c.bf16 %v2261, %v2261
        %v2352 = vpack.c.bf16 %v2299, %v2299
        %v2353 = vpack.c.bf16 %v2337, %v2337
        %2354 = vst [vmem:[%s385] sm:$0xf] %v2338
        %2355 = vst [vmem:[%s385 + $0x4] sm:$0xf] %v2339
        %2356 = vst [vmem:[%s385 + $0x8] sm:$0xf] %v2340
        %2357 = vst [vmem:[%s385 + $0xc] sm:$0xf] %v2341
        %2358 = vst [vmem:[%s385 + $0x10] sm:$0xf] %v2342
        %2359 = vst [vmem:[%s385 + $0x14] sm:$0xf] %v2343
        %2360 = vst [vmem:[%s385 + $0x18] sm:$0xf] %v2344
        %2361 = vst [vmem:[%s385 + $0x1c] sm:$0xf] %v2345
        %2362 = vst [vmem:[%s385 + $0x20] sm:$0xf] %v2346
        %2363 = vst [vmem:[%s385 + $0x24] sm:$0xf] %v2347
        %2364 = vst [vmem:[%s385 + $0x28] sm:$0xf] %v2348
        %2365 = vst [vmem:[%s385 + $0x2c] sm:$0xf] %v2349
        %2366 = vst [vmem:[%s385 + $0x30] sm:$0xf] %v2350
        %2367 = vst [vmem:[%s385 + $0x34] sm:$0xf] %v2351
        %2368 = vst [vmem:[%s385 + $0x38] sm:$0xf] %v2352
        %2369 = vst [vmem:[%s385 + $0x3c] sm:$0xf] %v2353
        %v2370 = vrot.slane %v1424, 4
        %v2371 = vsel %vm1618, 0.0, %v2370
        %v2373 = vunpack.c.l.s4 1983009808
        %v2374 = vunpack.c.0.s8 %v2373
        %v2375 = vperm.slane %v1424, %v2374
        %v2377 = vunpack.c.l.s4 1983009808
        %v2378 = vunpack.c.0.s8 %v2377
        %v2379 = vperm.slane %v2371, %v2378
        %v2380 = vrot.slane %v1482, 4
        %v2381 = vsel %vm1618, 0.0, %v2380
        %v2383 = vunpack.c.l.s4 1983009808
        %v2384 = vunpack.c.0.s8 %v2383
        %v2385 = vperm.slane %v1482, %v2384
        %v2387 = vunpack.c.l.s4 1983009808
        %v2388 = vunpack.c.0.s8 %v2387
        %v2389 = vperm.slane %v2381, %v2388
        %v2390 = vrot.slane %v2385, 4
        %v2391 = vsel %vm1618, %v2390, %v2375
        %v2392 = vrot.slane %v2375, 4
        %v2393 = vsel %vm1618, %v2385, %v2392
        %v2395 = vunpack.c.l.s4 1934713408
        %v2396 = vunpack.c.0.s8 %v2395
        %v2397 = vperm.slane %v2391, %v2396
        %v2399 = vunpack.c.l.s4 1934713408
        %v2400 = vunpack.c.0.s8 %v2399
        %v2401 = vperm.slane %v2393, %v2400
        %v2402 = vrot.slane %v2389, 4
        %v2403 = vsel %vm1618, %v2402, %v2379
        %v2404 = vrot.slane %v2379, 4
        %v2405 = vsel %vm1618, %v2389, %v2404
        %v2407 = vunpack.c.l.s4 1934713408
        %v2408 = vunpack.c.0.s8 %v2407
        %v2409 = vperm.slane %v2403, %v2408
        %v2411 = vunpack.c.l.s4 1934713408
        %v2412 = vunpack.c.0.s8 %v2411
        %v2413 = vperm.slane %v2405, %v2412
        %v2414 = vrot.slane %v2397, 4
        %v2415 = vsel %vm1618, 0.0, %v2414
        %v2416 = vrot.slane %v2401, 4
        %v2417 = vsel %vm1618, 0.0, %v2416
        %v2418 = vrot.slane %v2409, 4
        %v2419 = vsel %vm1618, 0.0, %v2418
        %v2420 = vrot.slane %v2413, 4
        %v2421 = vsel %vm1618, 0.0, %v2420
        %v2422 = vrot.slane %v1426, 4
        %v2423 = vsel %vm1618, 0.0, %v2422
        %v2425 = vunpack.c.l.s4 1983009808
        %v2426 = vunpack.c.0.s8 %v2425
        %v2427 = vperm.slane %v1426, %v2426
        %v2429 = vunpack.c.l.s4 1983009808
        %v2430 = vunpack.c.0.s8 %v2429
        %v2431 = vperm.slane %v2423, %v2430
        %v2432 = vrot.slane %v1484, 4
        %v2433 = vsel %vm1618, 0.0, %v2432
        %v2435 = vunpack.c.l.s4 1983009808
        %v2436 = vunpack.c.0.s8 %v2435
        %v2437 = vperm.slane %v1484, %v2436
        %v2439 = vunpack.c.l.s4 1983009808
        %v2440 = vunpack.c.0.s8 %v2439
        %v2441 = vperm.slane %v2433, %v2440
        %v2442 = vrot.slane %v2437, 4
        %v2443 = vsel %vm1618, %v2442, %v2427
        %v2444 = vrot.slane %v2427, 4
        %v2445 = vsel %vm1618, %v2437, %v2444
        %v2447 = vunpack.c.l.s4 1934713408
        %v2448 = vunpack.c.0.s8 %v2447
        %v2449 = vperm.slane %v2443, %v2448
        %v2451 = vunpack.c.l.s4 1934713408
        %v2452 = vunpack.c.0.s8 %v2451
        %v2453 = vperm.slane %v2445, %v2452
        %v2454 = vrot.slane %v2441, 4
        %v2455 = vsel %vm1618, %v2454, %v2431
        %v2456 = vrot.slane %v2431, 4
        %v2457 = vsel %vm1618, %v2441, %v2456
        %v2459 = vunpack.c.l.s4 1934713408
        %v2460 = vunpack.c.0.s8 %v2459
        %v2461 = vperm.slane %v2455, %v2460
        %v2463 = vunpack.c.l.s4 1934713408
        %v2464 = vunpack.c.0.s8 %v2463
        %v2465 = vperm.slane %v2457, %v2464
        %v2466 = vrot.slane %v2449, 4
        %v2467 = vsel %vm1618, 0.0, %v2466
        %v2468 = vrot.slane %v2453, 4
        %v2469 = vsel %vm1618, 0.0, %v2468
        %v2470 = vrot.slane %v2461, 4
        %v2471 = vsel %vm1618, 0.0, %v2470
        %v2472 = vrot.slane %v2465, 4
        %v2473 = vsel %vm1618, 0.0, %v2472
        %v2474 = vrot.slane %v1429, 4
        %v2475 = vsel %vm1618, 0.0, %v2474
        %v2477 = vunpack.c.l.s4 1983009808
        %v2478 = vunpack.c.0.s8 %v2477
        %v2479 = vperm.slane %v1429, %v2478
        %v2481 = vunpack.c.l.s4 1983009808
        %v2482 = vunpack.c.0.s8 %v2481
        %v2483 = vperm.slane %v2475, %v2482
        %v2484 = vrot.slane %v1487, 4
        %v2485 = vsel %vm1618, 0.0, %v2484
        %v2487 = vunpack.c.l.s4 1983009808
        %v2488 = vunpack.c.0.s8 %v2487
        %v2489 = vperm.slane %v1487, %v2488
        %v2491 = vunpack.c.l.s4 1983009808
        %v2492 = vunpack.c.0.s8 %v2491
        %v2493 = vperm.slane %v2485, %v2492
        %v2494 = vrot.slane %v2489, 4
        %v2495 = vsel %vm1618, %v2494, %v2479
        %v2496 = vrot.slane %v2479, 4
        %v2497 = vsel %vm1618, %v2489, %v2496
        %v2499 = vunpack.c.l.s4 1934713408
        %v2500 = vunpack.c.0.s8 %v2499
        %v2501 = vperm.slane %v2495, %v2500
        %v2503 = vunpack.c.l.s4 1934713408
        %v2504 = vunpack.c.0.s8 %v2503
        %v2505 = vperm.slane %v2497, %v2504
        %v2506 = vrot.slane %v2493, 4
        %v2507 = vsel %vm1618, %v2506, %v2483
        %v2508 = vrot.slane %v2483, 4
        %v2509 = vsel %vm1618, %v2493, %v2508
        %v2511 = vunpack.c.l.s4 1934713408
        %v2512 = vunpack.c.0.s8 %v2511
        %v2513 = vperm.slane %v2507, %v2512
        %v2515 = vunpack.c.l.s4 1934713408
        %v2516 = vunpack.c.0.s8 %v2515
        %v2517 = vperm.slane %v2509, %v2516
        %v2518 = vrot.slane %v2501, 4
        %v2519 = vsel %vm1618, 0.0, %v2518
        %v2520 = vrot.slane %v2505, 4
        %v2521 = vsel %vm1618, 0.0, %v2520
        %v2522 = vrot.slane %v2513, 4
        %v2523 = vsel %vm1618, 0.0, %v2522
        %v2524 = vrot.slane %v2517, 4
        %v2525 = vsel %vm1618, 0.0, %v2524
        %v2526 = vrot.slane %v1431, 4
        %v2527 = vsel %vm1618, 0.0, %v2526
        %v2529 = vunpack.c.l.s4 1983009808
        %v2530 = vunpack.c.0.s8 %v2529
        %v2531 = vperm.slane %v1431, %v2530
        %v2533 = vunpack.c.l.s4 1983009808
        %v2534 = vunpack.c.0.s8 %v2533
        %v2535 = vperm.slane %v2527, %v2534
        %v2536 = vrot.slane %v1489, 4
        %v2537 = vsel %vm1618, 0.0, %v2536
        %v2539 = vunpack.c.l.s4 1983009808
        %v2540 = vunpack.c.0.s8 %v2539
        %v2541 = vperm.slane %v1489, %v2540
        %v2543 = vunpack.c.l.s4 1983009808
        %v2544 = vunpack.c.0.s8 %v2543
        %v2545 = vperm.slane %v2537, %v2544
        %v2546 = vrot.slane %v2541, 4
        %v2547 = vsel %vm1618, %v2546, %v2531
        %v2548 = vrot.slane %v2531, 4
        %v2549 = vsel %vm1618, %v2541, %v2548
        %v2551 = vunpack.c.l.s4 1934713408
        %v2552 = vunpack.c.0.s8 %v2551
        %v2553 = vperm.slane %v2547, %v2552
        %v2555 = vunpack.c.l.s4 1934713408
        %v2556 = vunpack.c.0.s8 %v2555
        %v2557 = vperm.slane %v2549, %v2556
        %v2558 = vrot.slane %v2545, 4
        %v2559 = vsel %vm1618, %v2558, %v2535
        %v2560 = vrot.slane %v2535, 4
        %v2561 = vsel %vm1618, %v2545, %v2560
        %v2563 = vunpack.c.l.s4 1934713408
        %v2564 = vunpack.c.0.s8 %v2563
        %v2565 = vperm.slane %v2559, %v2564
        %v2567 = vunpack.c.l.s4 1934713408
        %v2568 = vunpack.c.0.s8 %v2567
        %v2569 = vperm.slane %v2561, %v2568
        %v2570 = vrot.slane %v2553, 4
        %v2571 = vsel %vm1618, 0.0, %v2570
        %v2572 = vrot.slane %v2557, 4
        %v2573 = vsel %vm1618, 0.0, %v2572
        %v2574 = vrot.slane %v2565, 4
        %v2575 = vsel %vm1618, 0.0, %v2574
        %v2576 = vrot.slane %v2569, 4
        %v2577 = vsel %vm1618, 0.0, %v2576
        %v2578 = vrot.slane %v1434, 4
        %v2579 = vsel %vm1618, 0.0, %v2578
        %v2581 = vunpack.c.l.s4 1983009808
        %v2582 = vunpack.c.0.s8 %v2581
        %v2583 = vperm.slane %v1434, %v2582
        %v2585 = vunpack.c.l.s4 1983009808
        %v2586 = vunpack.c.0.s8 %v2585
        %v2587 = vperm.slane %v2579, %v2586
        %v2588 = vrot.slane %v1492, 4
        %v2589 = vsel %vm1618, 0.0, %v2588
        %v2591 = vunpack.c.l.s4 1983009808
        %v2592 = vunpack.c.0.s8 %v2591
        %v2593 = vperm.slane %v1492, %v2592
        %v2595 = vunpack.c.l.s4 1983009808
        %v2596 = vunpack.c.0.s8 %v2595
        %v2597 = vperm.slane %v2589, %v2596
        %v2598 = vrot.slane %v2593, 4
        %v2599 = vsel %vm1618, %v2598, %v2583
        %v2600 = vrot.slane %v2583, 4
        %v2601 = vsel %vm1618, %v2593, %v2600
        %v2603 = vunpack.c.l.s4 1934713408
        %v2604 = vunpack.c.0.s8 %v2603
        %v2605 = vperm.slane %v2599, %v2604
        %v2607 = vunpack.c.l.s4 1934713408
        %v2608 = vunpack.c.0.s8 %v2607
        %v2609 = vperm.slane %v2601, %v2608
        %v2610 = vrot.slane %v2597, 4
        %v2611 = vsel %vm1618, %v2610, %v2587
        %v2612 = vrot.slane %v2587, 4
        %v2613 = vsel %vm1618, %v2597, %v2612
        %v2615 = vunpack.c.l.s4 1934713408
        %v2616 = vunpack.c.0.s8 %v2615
        %v2617 = vperm.slane %v2611, %v2616
        %v2619 = vunpack.c.l.s4 1934713408
        %v2620 = vunpack.c.0.s8 %v2619
        %v2621 = vperm.slane %v2613, %v2620
        %v2622 = vrot.slane %v2605, 4
        %v2623 = vsel %vm1618, 0.0, %v2622
        %v2624 = vrot.slane %v2609, 4
        %v2625 = vsel %vm1618, 0.0, %v2624
        %v2626 = vrot.slane %v2617, 4
        %v2627 = vsel %vm1618, 0.0, %v2626
        %v2628 = vrot.slane %v2621, 4
        %v2629 = vsel %vm1618, 0.0, %v2628
        %v2630 = vrot.slane %v1436, 4
        %v2631 = vsel %vm1618, 0.0, %v2630
        %v2633 = vunpack.c.l.s4 1983009808
        %v2634 = vunpack.c.0.s8 %v2633
        %v2635 = vperm.slane %v1436, %v2634
        %v2637 = vunpack.c.l.s4 1983009808
        %v2638 = vunpack.c.0.s8 %v2637
        %v2639 = vperm.slane %v2631, %v2638
        %v2640 = vrot.slane %v1494, 4
        %v2641 = vsel %vm1618, 0.0, %v2640
        %v2643 = vunpack.c.l.s4 1983009808
        %v2644 = vunpack.c.0.s8 %v2643
        %v2645 = vperm.slane %v1494, %v2644
        %v2647 = vunpack.c.l.s4 1983009808
        %v2648 = vunpack.c.0.s8 %v2647
        %v2649 = vperm.slane %v2641, %v2648
        %v2650 = vrot.slane %v2645, 4
        %v2651 = vsel %vm1618, %v2650, %v2635
        %v2652 = vrot.slane %v2635, 4
        %v2653 = vsel %vm1618, %v2645, %v2652
        %v2655 = vunpack.c.l.s4 1934713408
        %v2656 = vunpack.c.0.s8 %v2655
        %v2657 = vperm.slane %v2651, %v2656
        %v2659 = vunpack.c.l.s4 1934713408
        %v2660 = vunpack.c.0.s8 %v2659
        %v2661 = vperm.slane %v2653, %v2660
        %v2662 = vrot.slane %v2649, 4
        %v2663 = vsel %vm1618, %v2662, %v2639
        %v2664 = vrot.slane %v2639, 4
        %v2665 = vsel %vm1618, %v2649, %v2664
        %v2667 = vunpack.c.l.s4 1934713408
        %v2668 = vunpack.c.0.s8 %v2667
        %v2669 = vperm.slane %v2663, %v2668
        %v2671 = vunpack.c.l.s4 1934713408
        %v2672 = vunpack.c.0.s8 %v2671
        %v2673 = vperm.slane %v2665, %v2672
        %v2674 = vrot.slane %v2657, 4
        %v2675 = vsel %vm1618, 0.0, %v2674
        %v2676 = vrot.slane %v2661, 4
        %v2677 = vsel %vm1618, 0.0, %v2676
        %v2678 = vrot.slane %v2669, 4
        %v2679 = vsel %vm1618, 0.0, %v2678
        %v2680 = vrot.slane %v2673, 4
        %v2681 = vsel %vm1618, 0.0, %v2680
        %v2682 = vrot.slane %v1439, 4
        %v2683 = vsel %vm1618, 0.0, %v2682
        %v2685 = vunpack.c.l.s4 1983009808
        %v2686 = vunpack.c.0.s8 %v2685
        %v2687 = vperm.slane %v1439, %v2686
        %v2689 = vunpack.c.l.s4 1983009808
        %v2690 = vunpack.c.0.s8 %v2689
        %v2691 = vperm.slane %v2683, %v2690
        %v2692 = vrot.slane %v1497, 4
        %v2693 = vsel %vm1618, 0.0, %v2692
        %v2695 = vunpack.c.l.s4 1983009808
        %v2696 = vunpack.c.0.s8 %v2695
        %v2697 = vperm.slane %v1497, %v2696
        %v2699 = vunpack.c.l.s4 1983009808
        %v2700 = vunpack.c.0.s8 %v2699
        %v2701 = vperm.slane %v2693, %v2700
        %v2702 = vrot.slane %v2697, 4
        %v2703 = vsel %vm1618, %v2702, %v2687
        %v2704 = vrot.slane %v2687, 4
        %v2705 = vsel %vm1618, %v2697, %v2704
        %v2707 = vunpack.c.l.s4 1934713408
        %v2708 = vunpack.c.0.s8 %v2707
        %v2709 = vperm.slane %v2703, %v2708
        %v2711 = vunpack.c.l.s4 1934713408
        %v2712 = vunpack.c.0.s8 %v2711
        %v2713 = vperm.slane %v2705, %v2712
        %v2714 = vrot.slane %v2701, 4
        %v2715 = vsel %vm1618, %v2714, %v2691
        %v2716 = vrot.slane %v2691, 4
        %v2717 = vsel %vm1618, %v2701, %v2716
        %v2719 = vunpack.c.l.s4 1934713408
        %v2720 = vunpack.c.0.s8 %v2719
        %v2721 = vperm.slane %v2715, %v2720
        %v2723 = vunpack.c.l.s4 1934713408
        %v2724 = vunpack.c.0.s8 %v2723
        %v2725 = vperm.slane %v2717, %v2724
        %v2726 = vrot.slane %v2709, 4
        %v2727 = vsel %vm1618, 0.0, %v2726
        %v2728 = vrot.slane %v2713, 4
        %v2729 = vsel %vm1618, 0.0, %v2728
        %v2730 = vrot.slane %v2721, 4
        %v2731 = vsel %vm1618, 0.0, %v2730
        %v2732 = vrot.slane %v2725, 4
        %v2733 = vsel %vm1618, 0.0, %v2732
        %v2734 = vrot.slane %v1441, 4
        %v2735 = vsel %vm1618, 0.0, %v2734
        %v2737 = vunpack.c.l.s4 1983009808
        %v2738 = vunpack.c.0.s8 %v2737
        %v2739 = vperm.slane %v1441, %v2738
        %v2741 = vunpack.c.l.s4 1983009808
        %v2742 = vunpack.c.0.s8 %v2741
        %v2743 = vperm.slane %v2735, %v2742
        %v2744 = vrot.slane %v1499, 4
        %v2745 = vsel %vm1618, 0.0, %v2744
        %v2747 = vunpack.c.l.s4 1983009808
        %v2748 = vunpack.c.0.s8 %v2747
        %v2749 = vperm.slane %v1499, %v2748
        %v2751 = vunpack.c.l.s4 1983009808
        %v2752 = vunpack.c.0.s8 %v2751
        %v2753 = vperm.slane %v2745, %v2752
        %v2754 = vrot.slane %v2749, 4
        %v2755 = vsel %vm1618, %v2754, %v2739
        %v2756 = vrot.slane %v2739, 4
        %v2757 = vsel %vm1618, %v2749, %v2756
        %v2759 = vunpack.c.l.s4 1934713408
        %v2760 = vunpack.c.0.s8 %v2759
        %v2761 = vperm.slane %v2755, %v2760
        %v2763 = vunpack.c.l.s4 1934713408
        %v2764 = vunpack.c.0.s8 %v2763
        %v2765 = vperm.slane %v2757, %v2764
        %v2766 = vrot.slane %v2753, 4
        %v2767 = vsel %vm1618, %v2766, %v2743
        %v2768 = vrot.slane %v2743, 4
        %v2769 = vsel %vm1618, %v2753, %v2768
        %v2771 = vunpack.c.l.s4 1934713408
        %v2772 = vunpack.c.0.s8 %v2771
        %v2773 = vperm.slane %v2767, %v2772
        %v2775 = vunpack.c.l.s4 1934713408
        %v2776 = vunpack.c.0.s8 %v2775
        %v2777 = vperm.slane %v2769, %v2776
        %v2778 = vrot.slane %v2761, 4
        %v2779 = vsel %vm1618, 0.0, %v2778
        %v2780 = vrot.slane %v2765, 4
        %v2781 = vsel %vm1618, 0.0, %v2780
        %v2782 = vrot.slane %v2773, 4
        %v2783 = vsel %vm1618, 0.0, %v2782
        %v2784 = vrot.slane %v2777, 4
        %v2785 = vsel %vm1618, 0.0, %v2784
        %v2786 = vsel %vm1618, %v2416, %v2397
        %v2788 = vunpack.c.l.s4 1983009808
        %v2789 = vunpack.c.0.s8 %v2788
        %v2790 = vperm.slane %v2786, %v2789
        %v2791 = vrot.slane %v2417, 4
        %v2792 = vsel %vm1618, %v2791, %v2415
        %v2794 = vunpack.c.l.s4 1983009808
        %v2795 = vunpack.c.0.s8 %v2794
        %v2796 = vperm.slane %v2792, %v2795
        %v2797 = vsel %vm1618, %v2420, %v2409
        %v2799 = vunpack.c.l.s4 1983009808
        %v2800 = vunpack.c.0.s8 %v2799
        %v2801 = vperm.slane %v2797, %v2800
        %v2802 = vrot.slane %v2421, 4
        %v2803 = vsel %vm1618, %v2802, %v2419
        %v2805 = vunpack.c.l.s4 1983009808
        %v2806 = vunpack.c.0.s8 %v2805
        %v2807 = vperm.slane %v2803, %v2806
        %v2808 = vrot.slane %v2796, 4
        %v2809 = vsel %vm1618, %v2808, %v2790
        %v2811 = vunpack.c.l.s4 1934713408
        %v2812 = vunpack.c.0.s8 %v2811
        %v2813 = vperm.slane %v2809, %v2812
        %v2814 = vrot.slane %v2807, 4
        %v2815 = vsel %vm1618, %v2814, %v2801
        %v2817 = vunpack.c.l.s4 1934713408
        %v2818 = vunpack.c.0.s8 %v2817
        %v2819 = vperm.slane %v2815, %v2818
        %v2820 = vrot.slane %v2819, 4
        %v2821 = vsel %vm1618, %v2820, %v2813
        %v2822 = vrot.slane %v2813, 4
        %v2823 = vsel %vm1618, %v2819, %v2822
        %v2824 = vsel %vm1618, %v2468, %v2449
        %v2826 = vunpack.c.l.s4 1983009808
        %v2827 = vunpack.c.0.s8 %v2826
        %v2828 = vperm.slane %v2824, %v2827
        %v2829 = vrot.slane %v2469, 4
        %v2830 = vsel %vm1618, %v2829, %v2467
        %v2832 = vunpack.c.l.s4 1983009808
        %v2833 = vunpack.c.0.s8 %v2832
        %v2834 = vperm.slane %v2830, %v2833
        %v2835 = vsel %vm1618, %v2472, %v2461
        %v2837 = vunpack.c.l.s4 1983009808
        %v2838 = vunpack.c.0.s8 %v2837
        %v2839 = vperm.slane %v2835, %v2838
        %v2840 = vrot.slane %v2473, 4
        %v2841 = vsel %vm1618, %v2840, %v2471
        %v2843 = vunpack.c.l.s4 1983009808
        %v2844 = vunpack.c.0.s8 %v2843
        %v2845 = vperm.slane %v2841, %v2844
        %v2846 = vrot.slane %v2834, 4
        %v2847 = vsel %vm1618, %v2846, %v2828
        %v2849 = vunpack.c.l.s4 1934713408
        %v2850 = vunpack.c.0.s8 %v2849
        %v2851 = vperm.slane %v2847, %v2850
        %v2852 = vrot.slane %v2845, 4
        %v2853 = vsel %vm1618, %v2852, %v2839
        %v2855 = vunpack.c.l.s4 1934713408
        %v2856 = vunpack.c.0.s8 %v2855
        %v2857 = vperm.slane %v2853, %v2856
        %v2858 = vrot.slane %v2857, 4
        %v2859 = vsel %vm1618, %v2858, %v2851
        %v2860 = vrot.slane %v2851, 4
        %v2861 = vsel %vm1618, %v2857, %v2860
        %v2862 = vsel %vm1618, %v2520, %v2501
        %v2864 = vunpack.c.l.s4 1983009808
        %v2865 = vunpack.c.0.s8 %v2864
        %v2866 = vperm.slane %v2862, %v2865
        %v2867 = vrot.slane %v2521, 4
        %v2868 = vsel %vm1618, %v2867, %v2519
        %v2870 = vunpack.c.l.s4 1983009808
        %v2871 = vunpack.c.0.s8 %v2870
        %v2872 = vperm.slane %v2868, %v2871
        %v2873 = vsel %vm1618, %v2524, %v2513
        %v2875 = vunpack.c.l.s4 1983009808
        %v2876 = vunpack.c.0.s8 %v2875
        %v2877 = vperm.slane %v2873, %v2876
        %v2878 = vrot.slane %v2525, 4
        %v2879 = vsel %vm1618, %v2878, %v2523
        %v2881 = vunpack.c.l.s4 1983009808
        %v2882 = vunpack.c.0.s8 %v2881
        %v2883 = vperm.slane %v2879, %v2882
        %v2884 = vrot.slane %v2872, 4
        %v2885 = vsel %vm1618, %v2884, %v2866
        %v2887 = vunpack.c.l.s4 1934713408
        %v2888 = vunpack.c.0.s8 %v2887
        %v2889 = vperm.slane %v2885, %v2888
        %v2890 = vrot.slane %v2883, 4
        %v2891 = vsel %vm1618, %v2890, %v2877
        %v2893 = vunpack.c.l.s4 1934713408
        %v2894 = vunpack.c.0.s8 %v2893
        %v2895 = vperm.slane %v2891, %v2894
        %v2896 = vrot.slane %v2895, 4
        %v2897 = vsel %vm1618, %v2896, %v2889
        %v2898 = vrot.slane %v2889, 4
        %v2899 = vsel %vm1618, %v2895, %v2898
        %v2900 = vsel %vm1618, %v2572, %v2553
        %v2902 = vunpack.c.l.s4 1983009808
        %v2903 = vunpack.c.0.s8 %v2902
        %v2904 = vperm.slane %v2900, %v2903
        %v2905 = vrot.slane %v2573, 4
        %v2906 = vsel %vm1618, %v2905, %v2571
        %v2908 = vunpack.c.l.s4 1983009808
        %v2909 = vunpack.c.0.s8 %v2908
        %v2910 = vperm.slane %v2906, %v2909
        %v2911 = vsel %vm1618, %v2576, %v2565
        %v2913 = vunpack.c.l.s4 1983009808
        %v2914 = vunpack.c.0.s8 %v2913
        %v2915 = vperm.slane %v2911, %v2914
        %v2916 = vrot.slane %v2577, 4
        %v2917 = vsel %vm1618, %v2916, %v2575
        %v2919 = vunpack.c.l.s4 1983009808
        %v2920 = vunpack.c.0.s8 %v2919
        %v2921 = vperm.slane %v2917, %v2920
        %v2922 = vrot.slane %v2910, 4
        %v2923 = vsel %vm1618, %v2922, %v2904
        %v2925 = vunpack.c.l.s4 1934713408
        %v2926 = vunpack.c.0.s8 %v2925
        %v2927 = vperm.slane %v2923, %v2926
        %v2928 = vrot.slane %v2921, 4
        %v2929 = vsel %vm1618, %v2928, %v2915
        %v2931 = vunpack.c.l.s4 1934713408
        %v2932 = vunpack.c.0.s8 %v2931
        %v2933 = vperm.slane %v2929, %v2932
        %v2934 = vrot.slane %v2933, 4
        %v2935 = vsel %vm1618, %v2934, %v2927
        %v2936 = vrot.slane %v2927, 4
        %v2937 = vsel %vm1618, %v2933, %v2936
        %v2938 = vsel %vm1618, %v2624, %v2605
        %v2940 = vunpack.c.l.s4 1983009808
        %v2941 = vunpack.c.0.s8 %v2940
        %v2942 = vperm.slane %v2938, %v2941
        %v2943 = vrot.slane %v2625, 4
        %v2944 = vsel %vm1618, %v2943, %v2623
        %v2946 = vunpack.c.l.s4 1983009808
        %v2947 = vunpack.c.0.s8 %v2946
        %v2948 = vperm.slane %v2944, %v2947
        %v2949 = vsel %vm1618, %v2628, %v2617
        %v2951 = vunpack.c.l.s4 1983009808
        %v2952 = vunpack.c.0.s8 %v2951
        %v2953 = vperm.slane %v2949, %v2952
        %v2954 = vrot.slane %v2629, 4
        %v2955 = vsel %vm1618, %v2954, %v2627
        %v2957 = vunpack.c.l.s4 1983009808
        %v2958 = vunpack.c.0.s8 %v2957
        %v2959 = vperm.slane %v2955, %v2958
        %v2960 = vrot.slane %v2948, 4
        %v2961 = vsel %vm1618, %v2960, %v2942
        %v2963 = vunpack.c.l.s4 1934713408
        %v2964 = vunpack.c.0.s8 %v2963
        %v2965 = vperm.slane %v2961, %v2964
        %v2966 = vrot.slane %v2959, 4
        %v2967 = vsel %vm1618, %v2966, %v2953
        %v2969 = vunpack.c.l.s4 1934713408
        %v2970 = vunpack.c.0.s8 %v2969
        %v2971 = vperm.slane %v2967, %v2970
        %v2972 = vrot.slane %v2971, 4
        %v2973 = vsel %vm1618, %v2972, %v2965
        %v2974 = vrot.slane %v2965, 4
        %v2975 = vsel %vm1618, %v2971, %v2974
        %v2976 = vsel %vm1618, %v2676, %v2657
        %v2978 = vunpack.c.l.s4 1983009808
        %v2979 = vunpack.c.0.s8 %v2978
        %v2980 = vperm.slane %v2976, %v2979
        %v2981 = vrot.slane %v2677, 4
        %v2982 = vsel %vm1618, %v2981, %v2675
        %v2984 = vunpack.c.l.s4 1983009808
        %v2985 = vunpack.c.0.s8 %v2984
        %v2986 = vperm.slane %v2982, %v2985
        %v2987 = vsel %vm1618, %v2680, %v2669
        %v2989 = vunpack.c.l.s4 1983009808
        %v2990 = vunpack.c.0.s8 %v2989
        %v2991 = vperm.slane %v2987, %v2990
        %v2992 = vrot.slane %v2681, 4
        %v2993 = vsel %vm1618, %v2992, %v2679
        %v2995 = vunpack.c.l.s4 1983009808
        %v2996 = vunpack.c.0.s8 %v2995
        %v2997 = vperm.slane %v2993, %v2996
        %v2998 = vrot.slane %v2986, 4
        %v2999 = vsel %vm1618, %v2998, %v2980
        %v3001 = vunpack.c.l.s4 1934713408
        %v3002 = vunpack.c.0.s8 %v3001
        %v3003 = vperm.slane %v2999, %v3002
        %v3004 = vrot.slane %v2997, 4
        %v3005 = vsel %vm1618, %v3004, %v2991
        %v3007 = vunpack.c.l.s4 1934713408
        %v3008 = vunpack.c.0.s8 %v3007
        %v3009 = vperm.slane %v3005, %v3008
        %v3010 = vrot.slane %v3009, 4
        %v3011 = vsel %vm1618, %v3010, %v3003
        %v3012 = vrot.slane %v3003, 4
        %v3013 = vsel %vm1618, %v3009, %v3012
        %v3014 = vsel %vm1618, %v2728, %v2709
        %v3016 = vunpack.c.l.s4 1983009808
        %v3017 = vunpack.c.0.s8 %v3016
        %v3018 = vperm.slane %v3014, %v3017
        %v3019 = vrot.slane %v2729, 4
        %v3020 = vsel %vm1618, %v3019, %v2727
        %v3022 = vunpack.c.l.s4 1983009808
        %v3023 = vunpack.c.0.s8 %v3022
        %v3024 = vperm.slane %v3020, %v3023
        %v3025 = vsel %vm1618, %v2732, %v2721
        %v3027 = vunpack.c.l.s4 1983009808
        %v3028 = vunpack.c.0.s8 %v3027
        %v3029 = vperm.slane %v3025, %v3028
        %v3030 = vrot.slane %v2733, 4
        %v3031 = vsel %vm1618, %v3030, %v2731
        %v3033 = vunpack.c.l.s4 1983009808
        %v3034 = vunpack.c.0.s8 %v3033
        %v3035 = vperm.slane %v3031, %v3034
        %v3036 = vrot.slane %v3024, 4
        %v3037 = vsel %vm1618, %v3036, %v3018
        %v3039 = vunpack.c.l.s4 1934713408
        %v3040 = vunpack.c.0.s8 %v3039
        %v3041 = vperm.slane %v3037, %v3040
        %v3042 = vrot.slane %v3035, 4
        %v3043 = vsel %vm1618, %v3042, %v3029
        %v3045 = vunpack.c.l.s4 1934713408
        %v3046 = vunpack.c.0.s8 %v3045
        %v3047 = vperm.slane %v3043, %v3046
        %v3048 = vrot.slane %v3047, 4
        %v3049 = vsel %vm1618, %v3048, %v3041
        %v3050 = vrot.slane %v3041, 4
        %v3051 = vsel %vm1618, %v3047, %v3050
        %v3052 = vsel %vm1618, %v2780, %v2761
        %v3054 = vunpack.c.l.s4 1983009808
        %v3055 = vunpack.c.0.s8 %v3054
        %v3056 = vperm.slane %v3052, %v3055
        %v3057 = vrot.slane %v2781, 4
        %v3058 = vsel %vm1618, %v3057, %v2779
        %v3060 = vunpack.c.l.s4 1983009808
        %v3061 = vunpack.c.0.s8 %v3060
        %v3062 = vperm.slane %v3058, %v3061
        %v3063 = vsel %vm1618, %v2784, %v2773
        %v3065 = vunpack.c.l.s4 1983009808
        %v3066 = vunpack.c.0.s8 %v3065
        %v3067 = vperm.slane %v3063, %v3066
        %v3068 = vrot.slane %v2785, 4
        %v3069 = vsel %vm1618, %v3068, %v2783
        %v3071 = vunpack.c.l.s4 1983009808
        %v3072 = vunpack.c.0.s8 %v3071
        %v3073 = vperm.slane %v3069, %v3072
        %v3074 = vrot.slane %v3062, 4
        %v3075 = vsel %vm1618, %v3074, %v3056
        %v3077 = vunpack.c.l.s4 1934713408
        %v3078 = vunpack.c.0.s8 %v3077
        %v3079 = vperm.slane %v3075, %v3078
        %v3080 = vrot.slane %v3073, 4
        %v3081 = vsel %vm1618, %v3080, %v3067
        %v3083 = vunpack.c.l.s4 1934713408
        %v3084 = vunpack.c.0.s8 %v3083
        %v3085 = vperm.slane %v3081, %v3084
        %v3086 = vrot.slane %v3085, 4
        %v3087 = vsel %vm1618, %v3086, %v3079
        %v3088 = vrot.slane %v3079, 4
        %v3089 = vsel %vm1618, %v3085, %v3088
        %v3090 = vpack.c.bf16 %v2821, %v2821
        %v3091 = vpack.c.bf16 %v2859, %v2859
        %v3092 = vpack.c.bf16 %v2897, %v2897
        %v3093 = vpack.c.bf16 %v2935, %v2935
        %v3094 = vpack.c.bf16 %v2973, %v2973
        %v3095 = vpack.c.bf16 %v3011, %v3011
        %v3096 = vpack.c.bf16 %v3049, %v3049
        %v3097 = vpack.c.bf16 %v3087, %v3087
        %v3098 = vpack.c.bf16 %v2823, %v2823
        %v3099 = vpack.c.bf16 %v2861, %v2861
        %v3100 = vpack.c.bf16 %v2899, %v2899
        %v3101 = vpack.c.bf16 %v2937, %v2937
        %v3102 = vpack.c.bf16 %v2975, %v2975
        %v3103 = vpack.c.bf16 %v3013, %v3013
        %v3104 = vpack.c.bf16 %v3051, %v3051
        %v3105 = vpack.c.bf16 %v3089, %v3089
        %3106 = vst [vmem:[%s392] sm:$0xf] %v3090
        %3107 = vst [vmem:[%s392 + $0x4] sm:$0xf] %v3091
        %3108 = vst [vmem:[%s392 + $0x8] sm:$0xf] %v3092
        %3109 = vst [vmem:[%s392 + $0xc] sm:$0xf] %v3093
        %3110 = vst [vmem:[%s392 + $0x10] sm:$0xf] %v3094
        %3111 = vst [vmem:[%s392 + $0x14] sm:$0xf] %v3095
        %3112 = vst [vmem:[%s392 + $0x18] sm:$0xf] %v3096
        %3113 = vst [vmem:[%s392 + $0x1c] sm:$0xf] %v3097
        %3114 = vst [vmem:[%s392 + $0x20] sm:$0xf] %v3098
        %3115 = vst [vmem:[%s392 + $0x24] sm:$0xf] %v3099
        %3116 = vst [vmem:[%s392 + $0x28] sm:$0xf] %v3100
        %3117 = vst [vmem:[%s392 + $0x2c] sm:$0xf] %v3101
        %3118 = vst [vmem:[%s392 + $0x30] sm:$0xf] %v3102
        %3119 = vst [vmem:[%s392 + $0x34] sm:$0xf] %v3103
        %3120 = vst [vmem:[%s392 + $0x38] sm:$0xf] %v3104
        %3121 = vst [vmem:[%s392 + $0x3c] sm:$0xf] %v3105
        %v3122 = vrot.slane %v1540, 4
        %v3123 = vsel %vm1618, 0.0, %v3122
        %v3125 = vunpack.c.l.s4 1983009808
        %v3126 = vunpack.c.0.s8 %v3125
        %v3127 = vperm.slane %v1540, %v3126
        %v3129 = vunpack.c.l.s4 1983009808
        %v3130 = vunpack.c.0.s8 %v3129
        %v3131 = vperm.slane %v3123, %v3130
        %v3132 = vrot.slane %v1598, 4
        %v3133 = vsel %vm1618, 0.0, %v3132
        %v3135 = vunpack.c.l.s4 1983009808
        %v3136 = vunpack.c.0.s8 %v3135
        %v3137 = vperm.slane %v1598, %v3136
        %v3139 = vunpack.c.l.s4 1983009808
        %v3140 = vunpack.c.0.s8 %v3139
        %v3141 = vperm.slane %v3133, %v3140
        %v3142 = vrot.slane %v3137, 4
        %v3143 = vsel %vm1618, %v3142, %v3127
        %v3144 = vrot.slane %v3127, 4
        %v3145 = vsel %vm1618, %v3137, %v3144
        %v3147 = vunpack.c.l.s4 1934713408
        %v3148 = vunpack.c.0.s8 %v3147
        %v3149 = vperm.slane %v3143, %v3148
        %v3151 = vunpack.c.l.s4 1934713408
        %v3152 = vunpack.c.0.s8 %v3151
        %v3153 = vperm.slane %v3145, %v3152
        %v3154 = vrot.slane %v3141, 4
        %v3155 = vsel %vm1618, %v3154, %v3131
        %v3156 = vrot.slane %v3131, 4
        %v3157 = vsel %vm1618, %v3141, %v3156
        %v3159 = vunpack.c.l.s4 1934713408
        %v3160 = vunpack.c.0.s8 %v3159
        %v3161 = vperm.slane %v3155, %v3160
        %v3163 = vunpack.c.l.s4 1934713408
        %v3164 = vunpack.c.0.s8 %v3163
        %v3165 = vperm.slane %v3157, %v3164
        %v3166 = vrot.slane %v3149, 4
        %v3167 = vsel %vm1618, 0.0, %v3166
        %v3168 = vrot.slane %v3153, 4
        %v3169 = vsel %vm1618, 0.0, %v3168
        %v3170 = vrot.slane %v3161, 4
        %v3171 = vsel %vm1618, 0.0, %v3170
        %v3172 = vrot.slane %v3165, 4
        %v3173 = vsel %vm1618, 0.0, %v3172
        %v3174 = vrot.slane %v1542, 4
        %v3175 = vsel %vm1618, 0.0, %v3174
        %v3177 = vunpack.c.l.s4 1983009808
        %v3178 = vunpack.c.0.s8 %v3177
        %v3179 = vperm.slane %v1542, %v3178
        %v3181 = vunpack.c.l.s4 1983009808
        %v3182 = vunpack.c.0.s8 %v3181
        %v3183 = vperm.slane %v3175, %v3182
        %v3184 = vrot.slane %v1600, 4
        %v3185 = vsel %vm1618, 0.0, %v3184
        %v3187 = vunpack.c.l.s4 1983009808
        %v3188 = vunpack.c.0.s8 %v3187
        %v3189 = vperm.slane %v1600, %v3188
        %v3191 = vunpack.c.l.s4 1983009808
        %v3192 = vunpack.c.0.s8 %v3191
        %v3193 = vperm.slane %v3185, %v3192
        %v3194 = vrot.slane %v3189, 4
        %v3195 = vsel %vm1618, %v3194, %v3179
        %v3196 = vrot.slane %v3179, 4
        %v3197 = vsel %vm1618, %v3189, %v3196
        %v3199 = vunpack.c.l.s4 1934713408
        %v3200 = vunpack.c.0.s8 %v3199
        %v3201 = vperm.slane %v3195, %v3200
        %v3203 = vunpack.c.l.s4 1934713408
        %v3204 = vunpack.c.0.s8 %v3203
        %v3205 = vperm.slane %v3197, %v3204
        %v3206 = vrot.slane %v3193, 4
        %v3207 = vsel %vm1618, %v3206, %v3183
        %v3208 = vrot.slane %v3183, 4
        %v3209 = vsel %vm1618, %v3193, %v3208
        %v3211 = vunpack.c.l.s4 1934713408
        %v3212 = vunpack.c.0.s8 %v3211
        %v3213 = vperm.slane %v3207, %v3212
        %v3215 = vunpack.c.l.s4 1934713408
        %v3216 = vunpack.c.0.s8 %v3215
        %v3217 = vperm.slane %v3209, %v3216
        %v3218 = vrot.slane %v3201, 4
        %v3219 = vsel %vm1618, 0.0, %v3218
        %v3220 = vrot.slane %v3205, 4
        %v3221 = vsel %vm1618, 0.0, %v3220
        %v3222 = vrot.slane %v3213, 4
        %v3223 = vsel %vm1618, 0.0, %v3222
        %v3224 = vrot.slane %v3217, 4
        %v3225 = vsel %vm1618, 0.0, %v3224
        %v3226 = vrot.slane %v1545, 4
        %v3227 = vsel %vm1618, 0.0, %v3226
        %v3229 = vunpack.c.l.s4 1983009808
        %v3230 = vunpack.c.0.s8 %v3229
        %v3231 = vperm.slane %v1545, %v3230
        %v3233 = vunpack.c.l.s4 1983009808
        %v3234 = vunpack.c.0.s8 %v3233
        %v3235 = vperm.slane %v3227, %v3234
        %v3236 = vrot.slane %v1603, 4
        %v3237 = vsel %vm1618, 0.0, %v3236
        %v3239 = vunpack.c.l.s4 1983009808
        %v3240 = vunpack.c.0.s8 %v3239
        %v3241 = vperm.slane %v1603, %v3240
        %v3243 = vunpack.c.l.s4 1983009808
        %v3244 = vunpack.c.0.s8 %v3243
        %v3245 = vperm.slane %v3237, %v3244
        %v3246 = vrot.slane %v3241, 4
        %v3247 = vsel %vm1618, %v3246, %v3231
        %v3248 = vrot.slane %v3231, 4
        %v3249 = vsel %vm1618, %v3241, %v3248
        %v3251 = vunpack.c.l.s4 1934713408
        %v3252 = vunpack.c.0.s8 %v3251
        %v3253 = vperm.slane %v3247, %v3252
        %v3255 = vunpack.c.l.s4 1934713408
        %v3256 = vunpack.c.0.s8 %v3255
        %v3257 = vperm.slane %v3249, %v3256
        %v3258 = vrot.slane %v3245, 4
        %v3259 = vsel %vm1618, %v3258, %v3235
        %v3260 = vrot.slane %v3235, 4
        %v3261 = vsel %vm1618, %v3245, %v3260
        %v3263 = vunpack.c.l.s4 1934713408
        %v3264 = vunpack.c.0.s8 %v3263
        %v3265 = vperm.slane %v3259, %v3264
        %v3267 = vunpack.c.l.s4 1934713408
        %v3268 = vunpack.c.0.s8 %v3267
        %v3269 = vperm.slane %v3261, %v3268
        %v3270 = vrot.slane %v3253, 4
        %v3271 = vsel %vm1618, 0.0, %v3270
        %v3272 = vrot.slane %v3257, 4
        %v3273 = vsel %vm1618, 0.0, %v3272
        %v3274 = vrot.slane %v3265, 4
        %v3275 = vsel %vm1618, 0.0, %v3274
        %v3276 = vrot.slane %v3269, 4
        %v3277 = vsel %vm1618, 0.0, %v3276
        %v3278 = vrot.slane %v1547, 4
        %v3279 = vsel %vm1618, 0.0, %v3278
        %v3281 = vunpack.c.l.s4 1983009808
        %v3282 = vunpack.c.0.s8 %v3281
        %v3283 = vperm.slane %v1547, %v3282
        %v3285 = vunpack.c.l.s4 1983009808
        %v3286 = vunpack.c.0.s8 %v3285
        %v3287 = vperm.slane %v3279, %v3286
        %v3288 = vrot.slane %v1605, 4
        %v3289 = vsel %vm1618, 0.0, %v3288
        %v3291 = vunpack.c.l.s4 1983009808
        %v3292 = vunpack.c.0.s8 %v3291
        %v3293 = vperm.slane %v1605, %v3292
        %v3295 = vunpack.c.l.s4 1983009808
        %v3296 = vunpack.c.0.s8 %v3295
        %v3297 = vperm.slane %v3289, %v3296
        %v3298 = vrot.slane %v3293, 4
        %v3299 = vsel %vm1618, %v3298, %v3283
        %v3300 = vrot.slane %v3283, 4
        %v3301 = vsel %vm1618, %v3293, %v3300
        %v3303 = vunpack.c.l.s4 1934713408
        %v3304 = vunpack.c.0.s8 %v3303
        %v3305 = vperm.slane %v3299, %v3304
        %v3307 = vunpack.c.l.s4 1934713408
        %v3308 = vunpack.c.0.s8 %v3307
        %v3309 = vperm.slane %v3301, %v3308
        %v3310 = vrot.slane %v3297, 4
        %v3311 = vsel %vm1618, %v3310, %v3287
        %v3312 = vrot.slane %v3287, 4
        %v3313 = vsel %vm1618, %v3297, %v3312
        %v3315 = vunpack.c.l.s4 1934713408
        %v3316 = vunpack.c.0.s8 %v3315
        %v3317 = vperm.slane %v3311, %v3316
        %v3319 = vunpack.c.l.s4 1934713408
        %v3320 = vunpack.c.0.s8 %v3319
        %v3321 = vperm.slane %v3313, %v3320
        %v3322 = vrot.slane %v3305, 4
        %v3323 = vsel %vm1618, 0.0, %v3322
        %v3324 = vrot.slane %v3309, 4
        %v3325 = vsel %vm1618, 0.0, %v3324
        %v3326 = vrot.slane %v3317, 4
        %v3327 = vsel %vm1618, 0.0, %v3326
        %v3328 = vrot.slane %v3321, 4
        %v3329 = vsel %vm1618, 0.0, %v3328
        %v3330 = vrot.slane %v1550, 4
        %v3331 = vsel %vm1618, 0.0, %v3330
        %v3333 = vunpack.c.l.s4 1983009808
        %v3334 = vunpack.c.0.s8 %v3333
        %v3335 = vperm.slane %v1550, %v3334
        %v3337 = vunpack.c.l.s4 1983009808
        %v3338 = vunpack.c.0.s8 %v3337
        %v3339 = vperm.slane %v3331, %v3338
        %v3340 = vrot.slane %v1608, 4
        %v3341 = vsel %vm1618, 0.0, %v3340
        %v3343 = vunpack.c.l.s4 1983009808
        %v3344 = vunpack.c.0.s8 %v3343
        %v3345 = vperm.slane %v1608, %v3344
        %v3347 = vunpack.c.l.s4 1983009808
        %v3348 = vunpack.c.0.s8 %v3347
        %v3349 = vperm.slane %v3341, %v3348
        %v3350 = vrot.slane %v3345, 4
        %v3351 = vsel %vm1618, %v3350, %v3335
        %v3352 = vrot.slane %v3335, 4
        %v3353 = vsel %vm1618, %v3345, %v3352
        %v3355 = vunpack.c.l.s4 1934713408
        %v3356 = vunpack.c.0.s8 %v3355
        %v3357 = vperm.slane %v3351, %v3356
        %v3359 = vunpack.c.l.s4 1934713408
        %v3360 = vunpack.c.0.s8 %v3359
        %v3361 = vperm.slane %v3353, %v3360
        %v3362 = vrot.slane %v3349, 4
        %v3363 = vsel %vm1618, %v3362, %v3339
        %v3364 = vrot.slane %v3339, 4
        %v3365 = vsel %vm1618, %v3349, %v3364
        %v3367 = vunpack.c.l.s4 1934713408
        %v3368 = vunpack.c.0.s8 %v3367
        %v3369 = vperm.slane %v3363, %v3368
        %v3371 = vunpack.c.l.s4 1934713408
        %v3372 = vunpack.c.0.s8 %v3371
        %v3373 = vperm.slane %v3365, %v3372
        %v3374 = vrot.slane %v3357, 4
        %v3375 = vsel %vm1618, 0.0, %v3374
        %v3376 = vrot.slane %v3361, 4
        %v3377 = vsel %vm1618, 0.0, %v3376
        %v3378 = vrot.slane %v3369, 4
        %v3379 = vsel %vm1618, 0.0, %v3378
        %v3380 = vrot.slane %v3373, 4
        %v3381 = vsel %vm1618, 0.0, %v3380
        %v3382 = vrot.slane %v1552, 4
        %v3383 = vsel %vm1618, 0.0, %v3382
        %v3385 = vunpack.c.l.s4 1983009808
        %v3386 = vunpack.c.0.s8 %v3385
        %v3387 = vperm.slane %v1552, %v3386
        %v3389 = vunpack.c.l.s4 1983009808
        %v3390 = vunpack.c.0.s8 %v3389
        %v3391 = vperm.slane %v3383, %v3390
        %v3392 = vrot.slane %v1610, 4
        %v3393 = vsel %vm1618, 0.0, %v3392
        %v3395 = vunpack.c.l.s4 1983009808
        %v3396 = vunpack.c.0.s8 %v3395
        %v3397 = vperm.slane %v1610, %v3396
        %v3399 = vunpack.c.l.s4 1983009808
        %v3400 = vunpack.c.0.s8 %v3399
        %v3401 = vperm.slane %v3393, %v3400
        %v3402 = vrot.slane %v3397, 4
        %v3403 = vsel %vm1618, %v3402, %v3387
        %v3404 = vrot.slane %v3387, 4
        %v3405 = vsel %vm1618, %v3397, %v3404
        %v3407 = vunpack.c.l.s4 1934713408
        %v3408 = vunpack.c.0.s8 %v3407
        %v3409 = vperm.slane %v3403, %v3408
        %v3411 = vunpack.c.l.s4 1934713408
        %v3412 = vunpack.c.0.s8 %v3411
        %v3413 = vperm.slane %v3405, %v3412
        %v3414 = vrot.slane %v3401, 4
        %v3415 = vsel %vm1618, %v3414, %v3391
        %v3416 = vrot.slane %v3391, 4
        %v3417 = vsel %vm1618, %v3401, %v3416
        %v3419 = vunpack.c.l.s4 1934713408
        %v3420 = vunpack.c.0.s8 %v3419
        %v3421 = vperm.slane %v3415, %v3420
        %v3423 = vunpack.c.l.s4 1934713408
        %v3424 = vunpack.c.0.s8 %v3423
        %v3425 = vperm.slane %v3417, %v3424
        %v3426 = vrot.slane %v3409, 4
        %v3427 = vsel %vm1618, 0.0, %v3426
        %v3428 = vrot.slane %v3413, 4
        %v3429 = vsel %vm1618, 0.0, %v3428
        %v3430 = vrot.slane %v3421, 4
        %v3431 = vsel %vm1618, 0.0, %v3430
        %v3432 = vrot.slane %v3425, 4
        %v3433 = vsel %vm1618, 0.0, %v3432
        %v3434 = vrot.slane %v1555, 4
        %v3435 = vsel %vm1618, 0.0, %v3434
        %v3437 = vunpack.c.l.s4 1983009808
        %v3438 = vunpack.c.0.s8 %v3437
        %v3439 = vperm.slane %v1555, %v3438
        %v3441 = vunpack.c.l.s4 1983009808
        %v3442 = vunpack.c.0.s8 %v3441
        %v3443 = vperm.slane %v3435, %v3442
        %v3444 = vrot.slane %v1613, 4
        %v3445 = vsel %vm1618, 0.0, %v3444
        %v3447 = vunpack.c.l.s4 1983009808
        %v3448 = vunpack.c.0.s8 %v3447
        %v3449 = vperm.slane %v1613, %v3448
        %v3451 = vunpack.c.l.s4 1983009808
        %v3452 = vunpack.c.0.s8 %v3451
        %v3453 = vperm.slane %v3445, %v3452
        %v3454 = vrot.slane %v3449, 4
        %v3455 = vsel %vm1618, %v3454, %v3439
        %v3456 = vrot.slane %v3439, 4
        %v3457 = vsel %vm1618, %v3449, %v3456
        %v3459 = vunpack.c.l.s4 1934713408
        %v3460 = vunpack.c.0.s8 %v3459
        %v3461 = vperm.slane %v3455, %v3460
        %v3463 = vunpack.c.l.s4 1934713408
        %v3464 = vunpack.c.0.s8 %v3463
        %v3465 = vperm.slane %v3457, %v3464
        %v3466 = vrot.slane %v3453, 4
        %v3467 = vsel %vm1618, %v3466, %v3443
        %v3468 = vrot.slane %v3443, 4
        %v3469 = vsel %vm1618, %v3453, %v3468
        %v3471 = vunpack.c.l.s4 1934713408
        %v3472 = vunpack.c.0.s8 %v3471
        %v3473 = vperm.slane %v3467, %v3472
        %v3475 = vunpack.c.l.s4 1934713408
        %v3476 = vunpack.c.0.s8 %v3475
        %v3477 = vperm.slane %v3469, %v3476
        %v3478 = vrot.slane %v3461, 4
        %v3479 = vsel %vm1618, 0.0, %v3478
        %v3480 = vrot.slane %v3465, 4
        %v3481 = vsel %vm1618, 0.0, %v3480
        %v3482 = vrot.slane %v3473, 4
        %v3483 = vsel %vm1618, 0.0, %v3482
        %v3484 = vrot.slane %v3477, 4
        %v3485 = vsel %vm1618, 0.0, %v3484
        %v3486 = vrot.slane %v1557, 4
        %v3487 = vsel %vm1618, 0.0, %v3486
        %v3489 = vunpack.c.l.s4 1983009808
        %v3490 = vunpack.c.0.s8 %v3489
        %v3491 = vperm.slane %v1557, %v3490
        %v3493 = vunpack.c.l.s4 1983009808
        %v3494 = vunpack.c.0.s8 %v3493
        %v3495 = vperm.slane %v3487, %v3494
        %v3496 = vrot.slane %v1615, 4
        %v3497 = vsel %vm1618, 0.0, %v3496
        %v3499 = vunpack.c.l.s4 1983009808
        %v3500 = vunpack.c.0.s8 %v3499
        %v3501 = vperm.slane %v1615, %v3500
        %v3503 = vunpack.c.l.s4 1983009808
        %v3504 = vunpack.c.0.s8 %v3503
        %v3505 = vperm.slane %v3497, %v3504
        %v3506 = vrot.slane %v3501, 4
        %v3507 = vsel %vm1618, %v3506, %v3491
        %v3508 = vrot.slane %v3491, 4
        %v3509 = vsel %vm1618, %v3501, %v3508
        %v3511 = vunpack.c.l.s4 1934713408
        %v3512 = vunpack.c.0.s8 %v3511
        %v3513 = vperm.slane %v3507, %v3512
        %v3515 = vunpack.c.l.s4 1934713408
        %v3516 = vunpack.c.0.s8 %v3515
        %v3517 = vperm.slane %v3509, %v3516
        %v3518 = vrot.slane %v3505, 4
        %v3519 = vsel %vm1618, %v3518, %v3495
        %v3520 = vrot.slane %v3495, 4
        %v3521 = vsel %vm1618, %v3505, %v3520
        %v3523 = vunpack.c.l.s4 1934713408
        %v3524 = vunpack.c.0.s8 %v3523
        %v3525 = vperm.slane %v3519, %v3524
        %v3527 = vunpack.c.l.s4 1934713408
        %v3528 = vunpack.c.0.s8 %v3527
        %v3529 = vperm.slane %v3521, %v3528
        %v3530 = vrot.slane %v3513, 4
        %v3531 = vsel %vm1618, 0.0, %v3530
        %v3532 = vrot.slane %v3517, 4
        %v3533 = vsel %vm1618, 0.0, %v3532
        %v3534 = vrot.slane %v3525, 4
        %v3535 = vsel %vm1618, 0.0, %v3534
        %v3536 = vrot.slane %v3529, 4
        %v3537 = vsel %vm1618, 0.0, %v3536
        %v3538 = vsel %vm1618, %v3168, %v3149
        %v3540 = vunpack.c.l.s4 1983009808
        %v3541 = vunpack.c.0.s8 %v3540
        %v3542 = vperm.slane %v3538, %v3541
        %v3543 = vrot.slane %v3169, 4
        %v3544 = vsel %vm1618, %v3543, %v3167
        %v3546 = vunpack.c.l.s4 1983009808
        %v3547 = vunpack.c.0.s8 %v3546
        %v3548 = vperm.slane %v3544, %v3547
        %v3549 = vsel %vm1618, %v3172, %v3161
        %v3551 = vunpack.c.l.s4 1983009808
        %v3552 = vunpack.c.0.s8 %v3551
        %v3553 = vperm.slane %v3549, %v3552
        %v3554 = vrot.slane %v3173, 4
        %v3555 = vsel %vm1618, %v3554, %v3171
        %v3557 = vunpack.c.l.s4 1983009808
        %v3558 = vunpack.c.0.s8 %v3557
        %v3559 = vperm.slane %v3555, %v3558
        %v3560 = vrot.slane %v3548, 4
        %v3561 = vsel %vm1618, %v3560, %v3542
        %v3563 = vunpack.c.l.s4 1934713408
        %v3564 = vunpack.c.0.s8 %v3563
        %v3565 = vperm.slane %v3561, %v3564
        %v3566 = vrot.slane %v3559, 4
        %v3567 = vsel %vm1618, %v3566, %v3553
        %v3569 = vunpack.c.l.s4 1934713408
        %v3570 = vunpack.c.0.s8 %v3569
        %v3571 = vperm.slane %v3567, %v3570
        %v3572 = vrot.slane %v3571, 4
        %v3573 = vsel %vm1618, %v3572, %v3565
        %v3574 = vrot.slane %v3565, 4
        %v3575 = vsel %vm1618, %v3571, %v3574
        %v3576 = vsel %vm1618, %v3220, %v3201
        %v3578 = vunpack.c.l.s4 1983009808
        %v3579 = vunpack.c.0.s8 %v3578
        %v3580 = vperm.slane %v3576, %v3579
        %v3581 = vrot.slane %v3221, 4
        %v3582 = vsel %vm1618, %v3581, %v3219
        %v3584 = vunpack.c.l.s4 1983009808
        %v3585 = vunpack.c.0.s8 %v3584
        %v3586 = vperm.slane %v3582, %v3585
        %v3587 = vsel %vm1618, %v3224, %v3213
        %v3589 = vunpack.c.l.s4 1983009808
        %v3590 = vunpack.c.0.s8 %v3589
        %v3591 = vperm.slane %v3587, %v3590
        %v3592 = vrot.slane %v3225, 4
        %v3593 = vsel %vm1618, %v3592, %v3223
        %v3595 = vunpack.c.l.s4 1983009808
        %v3596 = vunpack.c.0.s8 %v3595
        %v3597 = vperm.slane %v3593, %v3596
        %v3598 = vrot.slane %v3586, 4
        %v3599 = vsel %vm1618, %v3598, %v3580
        %v3601 = vunpack.c.l.s4 1934713408
        %v3602 = vunpack.c.0.s8 %v3601
        %v3603 = vperm.slane %v3599, %v3602
        %v3604 = vrot.slane %v3597, 4
        %v3605 = vsel %vm1618, %v3604, %v3591
        %v3607 = vunpack.c.l.s4 1934713408
        %v3608 = vunpack.c.0.s8 %v3607
        %v3609 = vperm.slane %v3605, %v3608
        %v3610 = vrot.slane %v3609, 4
        %v3611 = vsel %vm1618, %v3610, %v3603
        %v3612 = vrot.slane %v3603, 4
        %v3613 = vsel %vm1618, %v3609, %v3612
        %v3614 = vsel %vm1618, %v3272, %v3253
        %v3616 = vunpack.c.l.s4 1983009808
        %v3617 = vunpack.c.0.s8 %v3616
        %v3618 = vperm.slane %v3614, %v3617
        %v3619 = vrot.slane %v3273, 4
        %v3620 = vsel %vm1618, %v3619, %v3271
        %v3622 = vunpack.c.l.s4 1983009808
        %v3623 = vunpack.c.0.s8 %v3622
        %v3624 = vperm.slane %v3620, %v3623
        %v3625 = vsel %vm1618, %v3276, %v3265
        %v3627 = vunpack.c.l.s4 1983009808
        %v3628 = vunpack.c.0.s8 %v3627
        %v3629 = vperm.slane %v3625, %v3628
        %v3630 = vrot.slane %v3277, 4
        %v3631 = vsel %vm1618, %v3630, %v3275
        %v3633 = vunpack.c.l.s4 1983009808
        %v3634 = vunpack.c.0.s8 %v3633
        %v3635 = vperm.slane %v3631, %v3634
        %v3636 = vrot.slane %v3624, 4
        %v3637 = vsel %vm1618, %v3636, %v3618
        %v3639 = vunpack.c.l.s4 1934713408
        %v3640 = vunpack.c.0.s8 %v3639
        %v3641 = vperm.slane %v3637, %v3640
        %v3642 = vrot.slane %v3635, 4
        %v3643 = vsel %vm1618, %v3642, %v3629
        %v3645 = vunpack.c.l.s4 1934713408
        %v3646 = vunpack.c.0.s8 %v3645
        %v3647 = vperm.slane %v3643, %v3646
        %v3648 = vrot.slane %v3647, 4
        %v3649 = vsel %vm1618, %v3648, %v3641
        %v3650 = vrot.slane %v3641, 4
        %v3651 = vsel %vm1618, %v3647, %v3650
        %v3652 = vsel %vm1618, %v3324, %v3305
        %v3654 = vunpack.c.l.s4 1983009808
        %v3655 = vunpack.c.0.s8 %v3654
        %v3656 = vperm.slane %v3652, %v3655
        %v3657 = vrot.slane %v3325, 4
        %v3658 = vsel %vm1618, %v3657, %v3323
        %v3660 = vunpack.c.l.s4 1983009808
        %v3661 = vunpack.c.0.s8 %v3660
        %v3662 = vperm.slane %v3658, %v3661
        %v3663 = vsel %vm1618, %v3328, %v3317
        %v3665 = vunpack.c.l.s4 1983009808
        %v3666 = vunpack.c.0.s8 %v3665
        %v3667 = vperm.slane %v3663, %v3666
        %v3668 = vrot.slane %v3329, 4
        %v3669 = vsel %vm1618, %v3668, %v3327
        %v3671 = vunpack.c.l.s4 1983009808
        %v3672 = vunpack.c.0.s8 %v3671
        %v3673 = vperm.slane %v3669, %v3672
        %v3674 = vrot.slane %v3662, 4
        %v3675 = vsel %vm1618, %v3674, %v3656
        %v3677 = vunpack.c.l.s4 1934713408
        %v3678 = vunpack.c.0.s8 %v3677
        %v3679 = vperm.slane %v3675, %v3678
        %v3680 = vrot.slane %v3673, 4
        %v3681 = vsel %vm1618, %v3680, %v3667
        %v3683 = vunpack.c.l.s4 1934713408
        %v3684 = vunpack.c.0.s8 %v3683
        %v3685 = vperm.slane %v3681, %v3684
        %v3686 = vrot.slane %v3685, 4
        %v3687 = vsel %vm1618, %v3686, %v3679
        %v3688 = vrot.slane %v3679, 4
        %v3689 = vsel %vm1618, %v3685, %v3688
        %v3690 = vsel %vm1618, %v3376, %v3357
        %v3692 = vunpack.c.l.s4 1983009808
        %v3693 = vunpack.c.0.s8 %v3692
        %v3694 = vperm.slane %v3690, %v3693
        %v3695 = vrot.slane %v3377, 4
        %v3696 = vsel %vm1618, %v3695, %v3375
        %v3698 = vunpack.c.l.s4 1983009808
        %v3699 = vunpack.c.0.s8 %v3698
        %v3700 = vperm.slane %v3696, %v3699
        %v3701 = vsel %vm1618, %v3380, %v3369
        %v3703 = vunpack.c.l.s4 1983009808
        %v3704 = vunpack.c.0.s8 %v3703
        %v3705 = vperm.slane %v3701, %v3704
        %v3706 = vrot.slane %v3381, 4
        %v3707 = vsel %vm1618, %v3706, %v3379
        %v3709 = vunpack.c.l.s4 1983009808
        %v3710 = vunpack.c.0.s8 %v3709
        %v3711 = vperm.slane %v3707, %v3710
        %v3712 = vrot.slane %v3700, 4
        %v3713 = vsel %vm1618, %v3712, %v3694
        %v3715 = vunpack.c.l.s4 1934713408
        %v3716 = vunpack.c.0.s8 %v3715
        %v3717 = vperm.slane %v3713, %v3716
        %v3718 = vrot.slane %v3711, 4
        %v3719 = vsel %vm1618, %v3718, %v3705
        %v3721 = vunpack.c.l.s4 1934713408
        %v3722 = vunpack.c.0.s8 %v3721
        %v3723 = vperm.slane %v3719, %v3722
        %v3724 = vrot.slane %v3723, 4
        %v3725 = vsel %vm1618, %v3724, %v3717
        %v3726 = vrot.slane %v3717, 4
        %v3727 = vsel %vm1618, %v3723, %v3726
        %v3728 = vsel %vm1618, %v3428, %v3409
        %v3730 = vunpack.c.l.s4 1983009808
        %v3731 = vunpack.c.0.s8 %v3730
        %v3732 = vperm.slane %v3728, %v3731
        %v3733 = vrot.slane %v3429, 4
        %v3734 = vsel %vm1618, %v3733, %v3427
        %v3736 = vunpack.c.l.s4 1983009808
        %v3737 = vunpack.c.0.s8 %v3736
        %v3738 = vperm.slane %v3734, %v3737
        %v3739 = vsel %vm1618, %v3432, %v3421
        %v3741 = vunpack.c.l.s4 1983009808
        %v3742 = vunpack.c.0.s8 %v3741
        %v3743 = vperm.slane %v3739, %v3742
        %v3744 = vrot.slane %v3433, 4
        %v3745 = vsel %vm1618, %v3744, %v3431
        %v3747 = vunpack.c.l.s4 1983009808
        %v3748 = vunpack.c.0.s8 %v3747
        %v3749 = vperm.slane %v3745, %v3748
        %v3750 = vrot.slane %v3738, 4
        %v3751 = vsel %vm1618, %v3750, %v3732
        %v3753 = vunpack.c.l.s4 1934713408
        %v3754 = vunpack.c.0.s8 %v3753
        %v3755 = vperm.slane %v3751, %v3754
        %v3756 = vrot.slane %v3749, 4
        %v3757 = vsel %vm1618, %v3756, %v3743
        %v3759 = vunpack.c.l.s4 1934713408
        %v3760 = vunpack.c.0.s8 %v3759
        %v3761 = vperm.slane %v3757, %v3760
        %v3762 = vrot.slane %v3761, 4
        %v3763 = vsel %vm1618, %v3762, %v3755
        %v3764 = vrot.slane %v3755, 4
        %v3765 = vsel %vm1618, %v3761, %v3764
        %v3766 = vsel %vm1618, %v3480, %v3461
        %v3768 = vunpack.c.l.s4 1983009808
        %v3769 = vunpack.c.0.s8 %v3768
        %v3770 = vperm.slane %v3766, %v3769
        %v3771 = vrot.slane %v3481, 4
        %v3772 = vsel %vm1618, %v3771, %v3479
        %v3774 = vunpack.c.l.s4 1983009808
        %v3775 = vunpack.c.0.s8 %v3774
        %v3776 = vperm.slane %v3772, %v3775
        %v3777 = vsel %vm1618, %v3484, %v3473
        %v3779 = vunpack.c.l.s4 1983009808
        %v3780 = vunpack.c.0.s8 %v3779
        %v3781 = vperm.slane %v3777, %v3780
        %v3782 = vrot.slane %v3485, 4
        %v3783 = vsel %vm1618, %v3782, %v3483
        %v3785 = vunpack.c.l.s4 1983009808
        %v3786 = vunpack.c.0.s8 %v3785
        %v3787 = vperm.slane %v3783, %v3786
        %v3788 = vrot.slane %v3776, 4
        %v3789 = vsel %vm1618, %v3788, %v3770
        %v3791 = vunpack.c.l.s4 1934713408
        %v3792 = vunpack.c.0.s8 %v3791
        %v3793 = vperm.slane %v3789, %v3792
        %v3794 = vrot.slane %v3787, 4
        %v3795 = vsel %vm1618, %v3794, %v3781
        %v3797 = vunpack.c.l.s4 1934713408
        %v3798 = vunpack.c.0.s8 %v3797
        %v3799 = vperm.slane %v3795, %v3798
        %v3800 = vrot.slane %v3799, 4
        %v3801 = vsel %vm1618, %v3800, %v3793
        %v3802 = vrot.slane %v3793, 4
        %v3803 = vsel %vm1618, %v3799, %v3802
        %v3804 = vsel %vm1618, %v3532, %v3513
        %v3806 = vunpack.c.l.s4 1983009808
        %v3807 = vunpack.c.0.s8 %v3806
        %v3808 = vperm.slane %v3804, %v3807
        %v3809 = vrot.slane %v3533, 4
        %v3810 = vsel %vm1618, %v3809, %v3531
        %v3812 = vunpack.c.l.s4 1983009808
        %v3813 = vunpack.c.0.s8 %v3812
        %v3814 = vperm.slane %v3810, %v3813
        %v3815 = vsel %vm1618, %v3536, %v3525
        %v3817 = vunpack.c.l.s4 1983009808
        %v3818 = vunpack.c.0.s8 %v3817
        %v3819 = vperm.slane %v3815, %v3818
        %v3820 = vrot.slane %v3537, 4
        %v3821 = vsel %vm1618, %v3820, %v3535
        %v3823 = vunpack.c.l.s4 1983009808
        %v3824 = vunpack.c.0.s8 %v3823
        %v3825 = vperm.slane %v3821, %v3824
        %v3826 = vrot.slane %v3814, 4
        %v3827 = vsel %vm1618, %v3826, %v3808
        %v3829 = vunpack.c.l.s4 1934713408
        %v3830 = vunpack.c.0.s8 %v3829
        %v3831 = vperm.slane %v3827, %v3830
        %v3832 = vrot.slane %v3825, 4
        %v3833 = vsel %vm1618, %v3832, %v3819
        %v3835 = vunpack.c.l.s4 1934713408
        %v3836 = vunpack.c.0.s8 %v3835
        %v3837 = vperm.slane %v3833, %v3836
        %v3838 = vrot.slane %v3837, 4
        %v3839 = vsel %vm1618, %v3838, %v3831
        %v3840 = vrot.slane %v3831, 4
        %v3841 = vsel %vm1618, %v3837, %v3840
        %v3842 = vpack.c.bf16 %v3573, %v3573
        %v3843 = vpack.c.bf16 %v3611, %v3611
        %v3844 = vpack.c.bf16 %v3649, %v3649
        %v3845 = vpack.c.bf16 %v3687, %v3687
        %v3846 = vpack.c.bf16 %v3725, %v3725
        %v3847 = vpack.c.bf16 %v3763, %v3763
        %v3848 = vpack.c.bf16 %v3801, %v3801
        %v3849 = vpack.c.bf16 %v3839, %v3839
        %v3850 = vpack.c.bf16 %v3575, %v3575
        %v3851 = vpack.c.bf16 %v3613, %v3613
        %v3852 = vpack.c.bf16 %v3651, %v3651
        %v3853 = vpack.c.bf16 %v3689, %v3689
        %v3854 = vpack.c.bf16 %v3727, %v3727
        %v3855 = vpack.c.bf16 %v3765, %v3765
        %v3856 = vpack.c.bf16 %v3803, %v3803
        %v3857 = vpack.c.bf16 %v3841, %v3841
        %3858 = vst [vmem:[%s399] sm:$0xf] %v3842
        %3859 = vst [vmem:[%s399 + $0x4] sm:$0xf] %v3843
        %3860 = vst [vmem:[%s399 + $0x8] sm:$0xf] %v3844
        %3861 = vst [vmem:[%s399 + $0xc] sm:$0xf] %v3845
        %3862 = vst [vmem:[%s399 + $0x10] sm:$0xf] %v3846
        %3863 = vst [vmem:[%s399 + $0x14] sm:$0xf] %v3847
        %3864 = vst [vmem:[%s399 + $0x18] sm:$0xf] %v3848
        %3865 = vst [vmem:[%s399 + $0x1c] sm:$0xf] %v3849
        %3866 = vst [vmem:[%s399 + $0x20] sm:$0xf] %v3850
        %3867 = vst [vmem:[%s399 + $0x24] sm:$0xf] %v3851
        %3868 = vst [vmem:[%s399 + $0x28] sm:$0xf] %v3852
        %3869 = vst [vmem:[%s399 + $0x2c] sm:$0xf] %v3853
        %3870 = vst [vmem:[%s399 + $0x30] sm:$0xf] %v3854
        %3871 = vst [vmem:[%s399 + $0x34] sm:$0xf] %v3855
        %3872 = vst [vmem:[%s399 + $0x38] sm:$0xf] %v3856
        %3873 = vst [vmem:[%s399 + $0x3c] sm:$0xf] %v3857
        %s3874 = sand.u32 %s164, 1
        %s3875 = scalar_lea.sflag [#allocation4], %s3874
        %s3876 = sand.u32 %s164, 1
        %s3877 = smul.addr %s3876, 64
        %s3878 = scalar_lea.vmem [#allocation11], %s3877
        %s3879 = sand.u32 %s30, 1
        %s3880 = scalar_lea.sflag [#allocation13], %s3879
        %s3881 = sand.u32 %s192, 1
        %s3882 = smul.addr %s3881, 64
        %s3883 = scalar_lea.vmem [#allocation12], %s3882
        %s3884 = sand.u32 %s30, 1
        %s3885 = scalar_lea.sflag [#allocation13], %s3884
        %s3886 = sand.u32 %s220, 1
        %s3887 = smul.addr %s3886, 64
        %s3888 = scalar_lea.vmem [#allocation14], %s3887
        // Predicated region
        $region61: #{tpu_custom_call.1} parent=39 // pred_check
          %p3889 = pneg %p174
        $region62: #{tpu_custom_call.1} parent=39 // pred_check_branch
          %3891 = sbr.rel (%p3889) target = $region64
        $region63: #{tpu_custom_call.1} parent=39 // pred_region
          #allocation16 [shape = 'u32[6]{0}', space=smem, size = 0x18, scoped, tag = 'DMA stride descriptor']
          %s3892 = smul.u32 8, %s35
          %3894 = vsyncadd %s3875, 0
          %s3895 = smul.addr %s34, 32
          %s3896 = sadd.s32 %s3892, %s3895
          %s3897 = smul.addr %s3896, 4
          %s3898 = scalar_lea.hbm %s5, %s3897
          %s3900 = sshll.u32 1, 14
          %s3901 = sxor.u32 4294967295, %s3900
          %s3904 = sshll.u32 7, 18
          %s3905 = sxor.u32 4294967295, %s3904
          %s3906 = sand.u32 0, %s3905
          %s3908 = sor.u32 %s3906, 0
          %s3909 = sshll.u32 %s3878, 4
          %s3910 = int_to_ptr.vmem [resolvable:$true] %s3909
          %s3911 = sshll.u32 %s3898, 4
          %s3912 = int_to_ptr.hbm [resolvable:$true] %s3911
          %3918 = sst [smem:[#allocation16]] 512
          %s3919 = scalar_lea.smem [#allocation16], 1
          %3920 = sst [smem:[%s3919]] 1024
          %s3921 = scalar_lea.smem [#allocation16], 2
          %3922 = sst [smem:[%s3921]] 8
          %s3923 = scalar_lea.smem [#allocation16], 3
          %3924 = sst [smem:[%s3923]] 64
          %s3925 = scalar_lea.smem [#allocation16], 4
          %3926 = sst [smem:[%s3925]] 64
          %s3927 = scalar_lea.smem [#allocation16], 5
          %3928 = sst [smem:[%s3927]] 4
          %3930 = dma.general %s3910, 1024, %s3912, %s3875, [#allocation15], [#allocation16], %s3908, 0
        $region64: #{tpu_custom_call.1} parent=39 // pred_fallthru
          _
        // Predicated region
        $region65: #{tpu_custom_call.1} parent=39 // pred_check
          %p3931 = pneg %p202
        $region66: #{tpu_custom_call.1} parent=39 // pred_check_branch
          %3933 = sbr.rel (%p3931) target = $region68
        $region67: #{tpu_custom_call.1} parent=39 // pred_region
          #allocation18 [shape = 'u32[6]{0}', space=smem, size = 0x18, scoped, tag = 'DMA stride descriptor']
          %s3934 = smul.u32 8, %s35
          %3936 = vsyncadd %s3880, 0
          %s3937 = smul.addr %s34, 32
          %s3938 = sadd.s32 %s3934, %s3937
          %s3939 = smul.addr %s3938, 4
          %s3940 = scalar_lea.hbm %s6, %s3939
          %s3942 = sshll.u32 1, 14
          %s3943 = sxor.u32 4294967295, %s3942
          %s3946 = sshll.u32 7, 18
          %s3947 = sxor.u32 4294967295, %s3946
          %s3948 = sand.u32 0, %s3947
          %s3950 = sor.u32 %s3948, 0
          %s3951 = sshll.u32 %s3883, 4
          %s3952 = int_to_ptr.vmem [resolvable:$true] %s3951
          %s3953 = sshll.u32 %s3940, 4
          %s3954 = int_to_ptr.hbm [resolvable:$true] %s3953
          %3960 = sst [smem:[#allocation18]] 512
          %s3961 = scalar_lea.smem [#allocation18], 1
          %3962 = sst [smem:[%s3961]] 1024
          %s3963 = scalar_lea.smem [#allocation18], 2
          %3964 = sst [smem:[%s3963]] 8
          %s3965 = scalar_lea.smem [#allocation18], 3
          %3966 = sst [smem:[%s3965]] 64
          %s3967 = scalar_lea.smem [#allocation18], 4
          %3968 = sst [smem:[%s3967]] 64
          %s3969 = scalar_lea.smem [#allocation18], 5
          %3970 = sst [smem:[%s3969]] 4
          %3972 = dma.general %s3952, 1024, %s3954, %s3880, [#allocation17], [#allocation18], %s3950, 0
        $region68: #{tpu_custom_call.1} parent=39 // pred_fallthru
          _
        // Predicated region
        $region69: #{tpu_custom_call.1} parent=39 // pred_check
          %p3973 = pneg %p230
        $region70: #{tpu_custom_call.1} parent=39 // pred_check_branch
          %3975 = sbr.rel (%p3973) target = $region72
        $region71: #{tpu_custom_call.1} parent=39 // pred_region
          #allocation20 [shape = 'u32[6]{0}', space=smem, size = 0x18, scoped, tag = 'DMA stride descriptor']
          %s3976 = smul.u32 8, %s35
          %3978 = vsyncadd %s3885, 0
          %s3979 = smul.addr %s34, 32
          %s3980 = sadd.s32 %s3976, %s3979
          %s3981 = smul.addr %s3980, 4
          %s3982 = scalar_lea.hbm %s7, %s3981
          %s3984 = sshll.u32 1, 14
          %s3985 = sxor.u32 4294967295, %s3984
          %s3988 = sshll.u32 7, 18
          %s3989 = sxor.u32 4294967295, %s3988
          %s3990 = sand.u32 0, %s3989
          %s3992 = sor.u32 %s3990, 0
          %s3993 = sshll.u32 %s3888, 4
          %s3994 = int_to_ptr.vmem [resolvable:$true] %s3993
          %s3995 = sshll.u32 %s3982, 4
          %s3996 = int_to_ptr.hbm [resolvable:$true] %s3995
          %4002 = sst [smem:[#allocation20]] 512
          %s4003 = scalar_lea.smem [#allocation20], 1
          %4004 = sst [smem:[%s4003]] 1024
          %s4005 = scalar_lea.smem [#allocation20], 2
          %4006 = sst [smem:[%s4005]] 8
          %s4007 = scalar_lea.smem [#allocation20], 3
          %4008 = sst [smem:[%s4007]] 64
          %s4009 = scalar_lea.smem [#allocation20], 4
          %4010 = sst [smem:[%s4009]] 64
          %s4011 = scalar_lea.smem [#allocation20], 5
          %4012 = sst [smem:[%s4011]] 4
          %4014 = dma.general %s3994, 1024, %s3996, %s3885, [#allocation19], [#allocation20], %s3992, 0
        $region72: #{tpu_custom_call.1} parent=39 // pred_fallthru
          _
      $region40: #{tpu_custom_call.1} parent=5 // pred_fallthru
        _
      %p4015 = scmp.le.s32.totalorder 2, %s25
      // Predicated region
      $region73: #{tpu_custom_call.1} parent=5 // pred_check
        %p4016 = pneg %p4015
      $region74: #{tpu_custom_call.1} parent=5 // pred_check_branch
        %4018 = sbr.rel (%p4016) target = $region76
      $region75: #{tpu_custom_call.1} parent=5 // pred_region
        %s4019 = ssub.s32 %s25, 2
        // Predicated region
        $region77: #{tpu_custom_call.1} parent=75 // pred_check
          %p4020 = pneg %p180
        $region78: #{tpu_custom_call.1} parent=75 // pred_check_branch
          %4022 = sbr.rel (%p4020) target = $region80
        $region79: #{tpu_custom_call.1} parent=75 // pred_region
          %s4023 = sand.u32 %s165, 1
          %s4024 = scalar_lea.sflag [#allocation4], %s4023
          %s4025 = sand.u32 %s165, 1
          %s4026 = smul.addr %s4025, 64
          %s4027 = scalar_lea.vmem [#allocation11], %s4026
          %4029 = dma.done %s4024, 1024
        $region80: #{tpu_custom_call.1} parent=75 // pred_fallthru
          _
        // Predicated region
        $region81: #{tpu_custom_call.1} parent=75 // pred_check
          %p4030 = pneg %p208
        $region82: #{tpu_custom_call.1} parent=75 // pred_check_branch
          %4032 = sbr.rel (%p4030) target = $region84
        $region83: #{tpu_custom_call.1} parent=75 // pred_region
          %s4033 = sand.u32 %s31, 1
          %s4034 = scalar_lea.sflag [#allocation13], %s4033
          %s4035 = sand.u32 %s193, 1
          %s4036 = smul.addr %s4035, 64
          %s4037 = scalar_lea.vmem [#allocation12], %s4036
          %4039 = dma.done %s4034, 1024
        $region84: #{tpu_custom_call.1} parent=75 // pred_fallthru
          _
        // Predicated region
        $region85: #{tpu_custom_call.1} parent=75 // pred_check
          %p4040 = pneg %p236
        $region86: #{tpu_custom_call.1} parent=75 // pred_check_branch
          %4042 = sbr.rel (%p4040) target = $region88
        $region87: #{tpu_custom_call.1} parent=75 // pred_region
          %s4043 = sand.u32 %s31, 1
          %s4044 = scalar_lea.sflag [#allocation13], %s4043
          %s4045 = sand.u32 %s221, 1
          %s4046 = smul.addr %s4045, 64
          %s4047 = scalar_lea.vmem [#allocation14], %s4046
          %4049 = dma.done %s4044, 1024
        $region88: #{tpu_custom_call.1} parent=75 // pred_fallthru
          _
      $region76: #{tpu_custom_call.1} parent=5 // pred_fallthru
        _
    $region6: #{tpu_custom_call.1} parent=1 // loop_footer
      %s29 = sadd.s32 1, %s25
    $region7: #{tpu_custom_call.1} parent=1 // loop_footer_branch
      %24 = sbr.rel target = $region3
    $region8: #{tpu_custom_call.1} parent=1 // loop_exit
      _
    %4050 = vsyncpa [#allocation3], 1
    %s4051 = scalar_lea.sflag [#allocation3], 1
    %4052 = vsyncpa %s4051, 1
    %4053 = vsyncpa [#allocation6], 1
    %4054 = vsyncpa [#allocation9], 1
    %4055 = vsyncpa [#allocation4], 1
    %s4056 = scalar_lea.sflag [#allocation4], 1
    %4057 = vsyncpa %s4056, 1
    %4058 = vsyncpa [#allocation13], 1
    %s4059 = scalar_lea.sflag [#allocation13], 1
    %4060 = vsyncpa %s4059, 1

</llo_original>
